<compile_context>
chip_gen: v7x
topology: tpu7x:2x2x1
jax: 0.10.0
libtpu: 0.0.40
codegen_flags: <defaults>
</compile_context>

<pallas_src>
import functools
import math

import jax
import jax.numpy as jnp
from jax.experimental import pallas as pl
from jax.experimental.pallas import tpu as pltpu


def _layer_norm(x, gamma, beta, eps=1e-5):
    mu = jnp.mean(x, axis=-1, keepdims=True)
    var = jnp.mean((x - mu) ** 2, axis=-1, keepdims=True)
    return (x - mu) * jax.lax.rsqrt(var + eps) * gamma + beta


def _encoder_layer_kernel(
    x_ref,
    wqkv_ref, bqkv_ref,
    wo_ref, bo_ref,
    w1_ref, b1_ref, w2_ref, b2_ref,
    g1_ref, be1_ref, g2_ref, be2_ref,
    o_ref,
    attn_ref,                      # VMEM scratch: (block_b * S, D) bf16
    *, nhead, f_chunk,
):
    Bblk, S, D = x_ref.shape
    H = nhead
    Dh = D // H
    M = Bblk * S
    F = w1_ref.shape[1]
    scale = 1.0 / math.sqrt(Dh)

    # Residual copy in f32; bf16 view feeds the MXU.
    x = x_ref[...].astype(jnp.float32)                     # (Bblk, S, D)
    x2 = x.reshape(M, D)                                   # row-flattened (S % 8 == 0)
    xb = x2.astype(jnp.bfloat16)

    # ---- fused QKV in-projection: one tall (M, D) x (D, 3D) bf16 matmul ----
    qkv = jnp.dot(xb, wqkv_ref[...], preferred_element_type=jnp.float32) + bqkv_ref[0]
    q3 = qkv[:, :D].reshape(Bblk, S, D).astype(jnp.bfloat16)
    k3 = qkv[:, D:2 * D].reshape(Bblk, S, D).astype(jnp.bfloat16)
    v3 = qkv[:, 2 * D:].reshape(Bblk, S, D).astype(jnp.bfloat16)

    # ---- scaled dot-product attention, batched over the block's batch elements ----
    for h in range(H):
        sl = slice(h * Dh, (h + 1) * Dh)                   # lane-dense when Dh % 128 == 0
        qh = q3[:, :, sl]                                  # (Bblk, S, Dh)
        kh = k3[:, :, sl]
        vh = v3[:, :, sl]
        s = jax.lax.dot_general(                           # (Bblk, S, S)  f32
            qh, kh, (((2,), (2,)), ((0,), (0,))),
            preferred_element_type=jnp.float32) * scale
        s = s - jnp.max(s, axis=-1, keepdims=True)
        p = jnp.exp(s)
        p = p * pl.reciprocal(jnp.sum(p, axis=-1, keepdims=True), approx=True)
        ctx = jax.lax.dot_general(                         # (Bblk, S, Dh) f32
            p.astype(jnp.bfloat16), vh, (((2,), (1,)), ((0,), (0,))),
            preferred_element_type=jnp.float32)
        # Write this head's output straight into the scratch buffer (no concat).
        attn_ref[:, sl] = ctx.reshape(M, Dh).astype(jnp.bfloat16)

    # ---- output projection + residual + LayerNorm 1 (dropout == identity, eval) ----
    a = jnp.dot(attn_ref[...], wo_ref[...],
                preferred_element_type=jnp.float32) + bo_ref[0]
    y = _layer_norm(x2 + a, g1_ref[0], be1_ref[0])

    # ---- feed-forward streamed over F chunks + residual + LayerNorm 2 ----
    yb = y.astype(jnp.bfloat16)
    b1 = b1_ref[0]                                          # (F,) f32
    acc = jnp.zeros((M, D), jnp.float32)
    for c in range(F // f_chunk):
        f0 = c * f_chunk
        h1 = jnp.dot(yb, w1_ref[:, f0:f0 + f_chunk],
                     preferred_element_type=jnp.float32) + b1[f0:f0 + f_chunk]
        h1 = jnp.maximum(h1, 0.0)                           # ReLU (dropout == identity)
        acc = acc + jnp.dot(h1.astype(jnp.bfloat16), w2_ref[f0:f0 + f_chunk, :],
                            preferred_element_type=jnp.float32)
    y = _layer_norm(y + acc + b2_ref[0], g2_ref[0], be2_ref[0])

    o_ref[...] = y.reshape(Bblk, S, D).astype(o_ref.dtype)


_WEIGHT_NAMES = ["wqkv", "bqkv", "wo", "bo", "w1", "b1", "w2", "b2",
                 "g1", "be1", "g2", "be2"]


def _vmem_limit_bytes():
    """Generation-aware VMEM budget: physical per-core capacity minus ~15% headroom."""
    cap = 64 * 1024 * 1024                                  # conservative fallback (v7x per-TC)
    try:
        cap = int(getattr(pltpu.get_tpu_info(), "vmem_capacity_bytes", cap))
    except Exception:
        pass
    return max(32 * 1024 * 1024, int(cap * 0.85))


def _cores_per_chip():
    """2 for multi-TensorCore parts (v7x / megacore), 1 for v5e/v6e-class chips."""
    try:
        kind = jax.devices()[0].device_kind.lower()
    except Exception:
        return 1
    if any(t in kind for t in ("v5 lite", "v5e", "v5lite", "v6 lite", "v6e", "v6lite")):
        return 1
    return 2


def _pick_f_chunk(F):
    for c in (512, 384, 256, 128):
        if F % c == 0:
            return c
    return F


def _step_vmem_bytes(block_b, S, D, F, f_chunk):
    """Rough per-grid-step VMEM working-set estimate (bytes)."""
    M = block_b * S
    io = 2 * 2 * (block_b * S * D * 4)                      # x + out blocks, double-buffered
    weights = 2 * (3 * D * D + D * D + 2 * D * F)           # bf16 matmul weights (single-buffered)
    weights += 4 * (3 * D + 2 * D + F + 4 * D)              # f32 biases / norm params
    qkv = 3 * M * D * 4 + 3 * M * D * 2                     # qkv f32 + bf16 views
    attn = M * D * 2 + block_b * S * S * 4 * 2 + M * D * 4  # scratch + scores/probs + ctx
    ffn = M * f_chunk * 4 * 2 + M * D * 4                   # h1 chunk + f32 accumulator
    ln = 4 * M * D * 4                                      # residual / LayerNorm temporaries
    return io + weights + qkv + attn + ffn + ln


def _pick_block_b(B, S, D, F, f_chunk, vmem_budget, cores):
    """Largest divisor of B whose working set fits the budget; keep >= 2 grid steps
    only on multi-TensorCore parts (megacore sharding) — never force a split on v5e/v6e."""
    best = 1
    for d in range(1, B + 1):
        if B % d:
            continue
        if cores >= 2 and B >= 2 and B // d < 2:
            continue
        if _step_vmem_bytes(d, S, D, F, f_chunk) > int(vmem_budget * 0.75):
            continue
        best = d
    return best


def encoder_layer_bsd(x_bsd, params, *, nhead, block_b=None):
    """Core entry point. x_bsd: (B, S, D) float32."""
    B, S, D = x_bsd.shape
    F = params["w1"].shape[1]
    assert D % nhead == 0, "d_model must be divisible by nhead"
    assert S % 8 == 0, "pad the sequence length to a multiple of 8"
    # Best lane utilization when D, F are multiples of 128 and D // nhead >= 128.

    f_chunk = _pick_f_chunk(F)
    vmem_budget = _vmem_limit_bytes()
    cores = _cores_per_chip()
    if block_b is None:
        block_b = _pick_block_b(B, S, D, F, f_chunk, vmem_budget, cores)
    assert B % block_b == 0
    grid = (B // block_b,)
    M = block_b * S

    weights = [params[n] for n in _WEIGHT_NAMES]

    def resident_spec(arr):
        # Constant index_map across the grid -> single-buffer: no overlap benefit from
        # double-buffering, and it halves resident weight VMEM.
        nd = arr.ndim
        return pl.BlockSpec(arr.shape, lambda b, _nd=nd: (0,) * _nd,
                            pipeline_mode=pl.Buffered(1))

    flops = int(2 * B * S * D * (3 * D)        # fused QKV projection
                + 2 * B * S * D * D            # output projection
                + 4 * B * S * D * F            # FFN (two matmuls)
                + 4 * B * S * S * D)           # attention score + context matmuls
    transcendentals = int(B * nhead * S * S)   # softmax exp
    bytes_accessed = int(x_bsd.size * 4 * 2 + sum(int(w.size) * w.dtype.itemsize
                                                  for w in weights))

    out = pl.pallas_call(
        functools.partial(_encoder_layer_kernel, nhead=nhead, f_chunk=f_chunk),
        out_shape=jax.ShapeDtypeStruct((B, S, D), jnp.float32),
        grid_spec=pltpu.PrefetchScalarGridSpec(
            num_scalar_prefetch=0,
            grid=grid,
            in_specs=[pl.BlockSpec((block_b, S, D), lambda b: (b, 0, 0))]
                     + [resident_spec(w) for w in weights],
            out_specs=pl.BlockSpec((block_b, S, D), lambda b: (b, 0, 0)),
            scratch_shapes=[pltpu.VMEM((M, D), jnp.bfloat16)],
        ),
        compiler_params=pltpu.CompilerParams(
            dimension_semantics=("parallel",),
            vmem_limit_bytes=vmem_budget,
        ),
        cost_estimate=pl.CostEstimate(
            flops=flops,
            transcendentals=transcendentals,
            bytes_accessed=bytes_accessed,
        ),
    )(x_bsd, *weights)
    return out


def encoder_layer(src_sbd, params, *, nhead, block_b=None):
    """PyTorch nn.MultiheadAttention layout wrapper: src_sbd is (S, B, D) float32.

    The transposes live only at this interface boundary; callers that already keep
    activations batch-first should call encoder_layer_bsd directly.
    """
    x = jnp.transpose(src_sbd, (1, 0, 2))                  # (B, S, D)
    out = encoder_layer_bsd(x, params, nhead=nhead, block_b=block_b)
    return jnp.transpose(out, (1, 0, 2))                   # back to (S, B, D)


def init_params(key, d_model, nhead, dim_feedforward):
    ks = jax.random.split(key, 6)
    s = 0.05
    bf = jnp.bfloat16
    D, F = d_model, dim_feedforward
    # Matmul weights stored pre-transposed (x @ W) and in bf16 for the MXU.
    return {
        "wqkv": (jax.random.normal(ks[0], (D, 3 * D), jnp.float32) * s).astype(bf),
        "bqkv": jnp.zeros((1, 3 * D), jnp.float32),
        "wo": (jax.random.normal(ks[1], (D, D), jnp.float32) * s).astype(bf),
        "bo": jax.random.normal(ks[2], (1, D), jnp.float32) * s,
        "w1": (jax.random.normal(ks[3], (D, F), jnp.float32) * s).astype(bf),
        "b1": jax.random.normal(ks[4], (1, F), jnp.float32) * s,
        "w2": (jax.random.normal(ks[5], (F, D), jnp.float32) * s).astype(bf),
        "b2": jnp.zeros((1, D), jnp.float32),
        "g1": jnp.ones((1, D), jnp.float32),
        "be1": jnp.zeros((1, D), jnp.float32),
        "g2": jnp.ones((1, D), jnp.float32),
        "be2": jnp.zeros((1, D), jnp.float32),
    }


def _reference(src_sbd, p, nhead):
    """Pure-JAX f32 reference of the same forward pass (sanity check)."""
    S, B, D = src_sbd.shape
    Dh = D // nhead
    f32 = lambda a: a.astype(jnp.float32)
    x = jnp.transpose(src_sbd, (1, 0, 2))                  # (B, S, D)
    qkv = x @ f32(p["wqkv"]) + p["bqkv"][0]
    q, k, v = qkv[..., :D], qkv[..., D:2 * D], qkv[..., 2 * D:]

    def split(t):
        return t.reshape(B, S, nhead, Dh).transpose(0, 2, 1, 3)  # (B, H, S, Dh)

    qh, kh, vh = split(q), split(k), split(v)
    scores = jnp.einsum("bhqd,bhkd->bhqk", qh, kh) / math.sqrt(Dh)
    attn = jax.nn.softmax(scores, axis=-1)
    o = jnp.einsum("bhqk,bhkd->bhqd", attn, vh).transpose(0, 2, 1, 3).reshape(B, S, D)
    o = o @ f32(p["wo"]) + p["bo"][0]
    src = _layer_norm(x + o, p["g1"][0], p["be1"][0])
    ff = jnp.maximum(src @ f32(p["w1"]) + p["b1"][0], 0.0) @ f32(p["w2"]) + p["b2"][0]
    src = _layer_norm(src + ff, p["g2"][0], p["be2"][0])
    return jnp.transpose(src, (1, 0, 2))


if __name__ == "__main__":
    # Small but lane-aligned shapes: D, F multiples of 128; head_dim = 128; S multiple of 8.
    d_model, nhead, dim_feedforward = 256, 2, 512
    seq, batch = 16, 4

    key = jax.random.PRNGKey(0)
    k_x, k_p = jax.random.split(key)
    src = jax.random.normal(k_x, (seq, batch, d_model), jnp.float32)
    params = init_params(k_p, d_model, nhead, dim_feedforward)

    out = encoder_layer(src, params, nhead=nhead)          # block_b auto (generation-aware)
    out = jax.block_until_ready(out)

    ref = _reference(src, params, nhead)
    assert out.shape == (seq, batch, d_model)
    # bf16 matmul operands vs. f32 reference -> loose-but-meaningful tolerance.
    assert jnp.max(jnp.abs(out - ref)) < 5e-2

    print("KERNEL_OK")
</pallas_src>

<mosaic_0001>
module attributes {stable_mosaic.version = 11 : i64} {
  func.func @_encoder_layer_kernel(%arg0: i32, %arg1: memref<2x16x256xf32, #tpu.memory_space<vmem>>, %arg2: memref<256x768xbf16, #tpu.memory_space<vmem>>, %arg3: memref<1x768xf32, #tpu.memory_space<vmem>>, %arg4: memref<256x256xbf16, #tpu.memory_space<vmem>>, %arg5: memref<1x256xf32, #tpu.memory_space<vmem>>, %arg6: memref<256x512xbf16, #tpu.memory_space<vmem>>, %arg7: memref<1x512xf32, #tpu.memory_space<vmem>>, %arg8: memref<512x256xbf16, #tpu.memory_space<vmem>>, %arg9: memref<1x256xf32, #tpu.memory_space<vmem>>, %arg10: memref<1x256xf32, #tpu.memory_space<vmem>>, %arg11: memref<1x256xf32, #tpu.memory_space<vmem>>, %arg12: memref<1x256xf32, #tpu.memory_space<vmem>>, %arg13: memref<1x256xf32, #tpu.memory_space<vmem>>, %arg14: memref<2x16x256xf32, #tpu.memory_space<vmem>>, %arg15: memref<32x256xbf16, #tpu.memory_space<vmem>>) attributes {dimension_semantics = [#tpu.dimension_semantics<parallel>], iteration_bounds = array<i64: 2>, scalar_prefetch = 0 : i64, scratch_operands = 1 : i64, tpu.core_type = #tpu.core_type<tc>, window_params = [{transform_indices = @transform_0, window_bounds = array<i64: 2, 16, 256>}, {pipeline_mode = #tpu.pipeline_mode<synchronous>, transform_indices = @transform_1, window_bounds = array<i64: 256, 768>}, {pipeline_mode = #tpu.pipeline_mode<synchronous>, transform_indices = @transform_2, window_bounds = array<i64: 1, 768>}, {pipeline_mode = #tpu.pipeline_mode<synchronous>, transform_indices = @transform_3, window_bounds = array<i64: 256, 256>}, {pipeline_mode = #tpu.pipeline_mode<synchronous>, transform_indices = @transform_4, window_bounds = array<i64: 1, 256>}, {pipeline_mode = #tpu.pipeline_mode<synchronous>, transform_indices = @transform_5, window_bounds = array<i64: 256, 512>}, {pipeline_mode = #tpu.pipeline_mode<synchronous>, transform_indices = @transform_6, window_bounds = array<i64: 1, 512>}, {pipeline_mode = #tpu.pipeline_mode<synchronous>, transform_indices = @transform_7, window_bounds = array<i64: 512, 256>}, {pipeline_mode = #tpu.pipeline_mode<synchronous>, transform_indices = @transform_8, window_bounds = array<i64: 1, 256>}, {pipeline_mode = #tpu.pipeline_mode<synchronous>, transform_indices = @transform_9, window_bounds = array<i64: 1, 256>}, {pipeline_mode = #tpu.pipeline_mode<synchronous>, transform_indices = @transform_10, window_bounds = array<i64: 1, 256>}, {pipeline_mode = #tpu.pipeline_mode<synchronous>, transform_indices = @transform_11, window_bounds = array<i64: 1, 256>}, {pipeline_mode = #tpu.pipeline_mode<synchronous>, transform_indices = @transform_12, window_bounds = array<i64: 1, 256>}, {transform_indices = @transform_13, window_bounds = array<i64: 2, 16, 256>}]} {
    %c0 = arith.constant 0 : index
    %c0_0 = arith.constant 0 : index
    %c0_1 = arith.constant 0 : index
    %0 = vector.load %arg1[%c0, %c0_0, %c0_1] : memref<2x16x256xf32, #tpu.memory_space<vmem>>, vector<2x16x256xf32>
    %1 = vector.shape_cast %0 : vector<2x16x256xf32> to vector<32x256xf32>
    %2 = arith.truncf %1 : vector<32x256xf32> to vector<32x256xbf16>
    %c0_2 = arith.constant 0 : index
    %c0_3 = arith.constant 0 : index
    %3 = vector.load %arg2[%c0_2, %c0_3] : memref<256x768xbf16, #tpu.memory_space<vmem>>, vector<256x768xbf16>
    %cst = arith.constant dense<0.000000e+00> : vector<32x768xf32>
    %4 = tpu.matmul %2, %3, %cst {dimension_numbers = #tpu.dot_dimension_numbers<[1], [0], [0], [1], [0, 0, 1, 1], [], []>} : vector<32x256xbf16>, vector<256x768xbf16>, vector<32x768xf32> -> vector<32x768xf32>
    %c0_4 = arith.constant 0 : index
    %c0_5 = arith.constant 0 : index
    %5 = vector.load %arg3[%c0_4, %c0_5] : memref<1x768xf32, #tpu.memory_space<vmem>>, vector<1x768xf32>
    %6 = vector.shape_cast %5 : vector<1x768xf32> to vector<768xf32>
    %7 = vector.shape_cast %6 : vector<768xf32> to vector<1x768xf32>
    %8 = vector.broadcast %7 : vector<1x768xf32> to vector<32x768xf32>
    %9 = arith.addf %4, %8 : vector<32x768xf32>
    %10 = vector.extract_strided_slice %9 {offsets = [0, 0], sizes = [32, 256], strides = [1, 1]} : vector<32x768xf32> to vector<32x256xf32>
    %11 = vector.shape_cast %10 : vector<32x256xf32> to vector<2x16x256xf32>
    %12 = arith.truncf %11 : vector<2x16x256xf32> to vector<2x16x256xbf16>
    %13 = vector.extract_strided_slice %9 {offsets = [0, 256], sizes = [32, 256], strides = [1, 1]} : vector<32x768xf32> to vector<32x256xf32>
    %14 = vector.shape_cast %13 : vector<32x256xf32> to vector<2x16x256xf32>
    %15 = arith.truncf %14 : vector<2x16x256xf32> to vector<2x16x256xbf16>
    %16 = vector.extract_strided_slice %9 {offsets = [0, 512], sizes = [32, 256], strides = [1, 1]} : vector<32x768xf32> to vector<32x256xf32>
    %17 = vector.shape_cast %16 : vector<32x256xf32> to vector<2x16x256xf32>
    %18 = arith.truncf %17 : vector<2x16x256xf32> to vector<2x16x256xbf16>
    %19 = vector.extract_strided_slice %12 {offsets = [0, 0, 0], sizes = [2, 16, 128], strides = [1, 1, 1]} : vector<2x16x256xbf16> to vector<2x16x128xbf16>
    %20 = vector.extract_strided_slice %15 {offsets = [0, 0, 0], sizes = [2, 16, 128], strides = [1, 1, 1]} : vector<2x16x256xbf16> to vector<2x16x128xbf16>
    %21 = vector.extract_strided_slice %18 {offsets = [0, 0, 0], sizes = [2, 16, 128], strides = [1, 1, 1]} : vector<2x16x256xbf16> to vector<2x16x128xbf16>
    %cst_6 = arith.constant dense<0.000000e+00> : vector<2x16x16xf32>
    %22 = tpu.matmul %19, %20, %cst_6 {dimension_numbers = #tpu.dot_dimension_numbers<[2], [2], [1], [1], [0, 0, 0, 1, 1, 1], [0], [0]>} : vector<2x16x128xbf16>, vector<2x16x128xbf16>, vector<2x16x16xf32> -> vector<2x16x16xf32>
    %cst_7 = arith.constant 0.0883883461 : f32
    %23 = vector.broadcast %cst_7 : f32 to vector<2x16x16xf32>
    %24 = arith.mulf %22, %23 : vector<2x16x16xf32>
    %cst_8 = arith.constant dense<0xFF800000> : vector<2x16xf32>
    %25 = vector.multi_reduction <maximumf>, %24, %cst_8 [2] : vector<2x16x16xf32> to vector<2x16xf32>
    %26 = vector.shape_cast %25 : vector<2x16xf32> to vector<2x16x1xf32>
    %27 = vector.broadcast %26 : vector<2x16x1xf32> to vector<2x16x16xf32>
    %28 = arith.subf %24, %27 : vector<2x16x16xf32>
    %29 = math.exp %28 : vector<2x16x16xf32>
    %cst_9 = arith.constant dense<0.000000e+00> : vector<2x16xf32>
    %30 = vector.multi_reduction <add>, %29, %cst_9 [2] : vector<2x16x16xf32> to vector<2x16xf32>
    %31 = vector.shape_cast %30 : vector<2x16xf32> to vector<2x16x1xf32>
    %32 = tpu.reciprocal %31 {approx = true} : vector<2x16x1xf32> -> vector<2x16x1xf32>
    %33 = vector.broadcast %32 : vector<2x16x1xf32> to vector<2x16x16xf32>
    %34 = arith.mulf %29, %33 : vector<2x16x16xf32>
    %35 = arith.truncf %34 : vector<2x16x16xf32> to vector<2x16x16xbf16>
    %cst_10 = arith.constant dense<0.000000e+00> : vector<2x16x128xf32>
    %36 = tpu.matmul %35, %21, %cst_10 {dimension_numbers = #tpu.dot_dimension_numbers<[2], [1], [1], [2], [0, 0, 0, 1, 1, 2], [0], [0]>} : vector<2x16x16xbf16>, vector<2x16x128xbf16>, vector<2x16x128xf32> -> vector<2x16x128xf32>
    %37 = vector.shape_cast %36 : vector<2x16x128xf32> to vector<32x128xf32>
    %38 = arith.truncf %37 : vector<32x128xf32> to vector<32x128xbf16>
    %c0_11 = arith.constant 0 : index
    %c0_12 = arith.constant 0 : index
    %39 = vector.load %arg15[%c0_11, %c0_12] : memref<32x256xbf16, #tpu.memory_space<vmem>>, vector<32x128xbf16>
    tpu.vector_store %arg15[%c0_11, %c0_12], %38 {strides = array<i32>} : memref<32x256xbf16, #tpu.memory_space<vmem>>, vector<32x128xbf16>,
    %40 = vector.extract_strided_slice %12 {offsets = [0, 0, 128], sizes = [2, 16, 128], strides = [1, 1, 1]} : vector<2x16x256xbf16> to vector<2x16x128xbf16>
    %41 = vector.extract_strided_slice %15 {offsets = [0, 0, 128], sizes = [2, 16, 128], strides = [1, 1, 1]} : vector<2x16x256xbf16> to vector<2x16x128xbf16>
    %42 = vector.extract_strided_slice %18 {offsets = [0, 0, 128], sizes = [2, 16, 128], strides = [1, 1, 1]} : vector<2x16x256xbf16> to vector<2x16x128xbf16>
    %cst_13 = arith.constant dense<0.000000e+00> : vector<2x16x16xf32>
    %43 = tpu.matmul %40, %41, %cst_13 {dimension_numbers = #tpu.dot_dimension_numbers<[2], [2], [1], [1], [0, 0, 0, 1, 1, 1], [0], [0]>} : vector<2x16x128xbf16>, vector<2x16x128xbf16>, vector<2x16x16xf32> -> vector<2x16x16xf32>
    %cst_14 = arith.constant 0.0883883461 : f32
    %44 = vector.broadcast %cst_14 : f32 to vector<2x16x16xf32>
    %45 = arith.mulf %43, %44 : vector<2x16x16xf32>
    %cst_15 = arith.constant dense<0xFF800000> : vector<2x16xf32>
    %46 = vector.multi_reduction <maximumf>, %45, %cst_15 [2] : vector<2x16x16xf32> to vector<2x16xf32>
    %47 = vector.shape_cast %46 : vector<2x16xf32> to vector<2x16x1xf32>
    %48 = vector.broadcast %47 : vector<2x16x1xf32> to vector<2x16x16xf32>
    %49 = arith.subf %45, %48 : vector<2x16x16xf32>
    %50 = math.exp %49 : vector<2x16x16xf32>
    %cst_16 = arith.constant dense<0.000000e+00> : vector<2x16xf32>
    %51 = vector.multi_reduction <add>, %50, %cst_16 [2] : vector<2x16x16xf32> to vector<2x16xf32>
    %52 = vector.shape_cast %51 : vector<2x16xf32> to vector<2x16x1xf32>
    %53 = tpu.reciprocal %52 {approx = true} : vector<2x16x1xf32> -> vector<2x16x1xf32>
    %54 = vector.broadcast %53 : vector<2x16x1xf32> to vector<2x16x16xf32>
    %55 = arith.mulf %50, %54 : vector<2x16x16xf32>
    %56 = arith.truncf %55 : vector<2x16x16xf32> to vector<2x16x16xbf16>
    %cst_17 = arith.constant dense<0.000000e+00> : vector<2x16x128xf32>
    %57 = tpu.matmul %56, %42, %cst_17 {dimension_numbers = #tpu.dot_dimension_numbers<[2], [1], [1], [2], [0, 0, 0, 1, 1, 2], [0], [0]>} : vector<2x16x16xbf16>, vector<2x16x128xbf16>, vector<2x16x128xf32> -> vector<2x16x128xf32>
    %58 = vector.shape_cast %57 : vector<2x16x128xf32> to vector<32x128xf32>
    %59 = arith.truncf %58 : vector<32x128xf32> to vector<32x128xbf16>
    %c0_18 = arith.constant 0 : index
    %c128 = arith.constant 128 : index
    %60 = vector.load %arg15[%c0_18, %c128] : memref<32x256xbf16, #tpu.memory_space<vmem>>, vector<32x128xbf16>
    tpu.vector_store %arg15[%c0_18, %c128], %59 {strides = array<i32>} : memref<32x256xbf16, #tpu.memory_space<vmem>>, vector<32x128xbf16>,
    %c0_19 = arith.constant 0 : index
    %c0_20 = arith.constant 0 : index
    %61 = vector.load %arg15[%c0_19, %c0_20] : memref<32x256xbf16, #tpu.memory_space<vmem>>, vector<32x256xbf16>
    %c0_21 = arith.constant 0 : index
    %c0_22 = arith.constant 0 : index
    %62 = vector.load %arg4[%c0_21, %c0_22] : memref<256x256xbf16, #tpu.memory_space<vmem>>, vector<256x256xbf16>
    %cst_23 = arith.constant dense<0.000000e+00> : vector<32x256xf32>
    %63 = tpu.matmul %61, %62, %cst_23 {dimension_numbers = #tpu.dot_dimension_numbers<[1], [0], [0], [1], [0, 0, 1, 1], [], []>} : vector<32x256xbf16>, vector<256x256xbf16>, vector<32x256xf32> -> vector<32x256xf32>
    %c0_24 = arith.constant 0 : index
    %c0_25 = arith.constant 0 : index
    %64 = vector.load %arg5[%c0_24, %c0_25] : memref<1x256xf32, #tpu.memory_space<vmem>>, vector<1x256xf32>
    %65 = vector.shape_cast %64 : vector<1x256xf32> to vector<256xf32>
    %66 = vector.shape_cast %65 : vector<256xf32> to vector<1x256xf32>
    %67 = vector.broadcast %66 : vector<1x256xf32> to vector<32x256xf32>
    %68 = arith.addf %63, %67 : vector<32x256xf32>
    %69 = arith.addf %1, %68 : vector<32x256xf32>
    %c0_26 = arith.constant 0 : index
    %c0_27 = arith.constant 0 : index
    %70 = vector.load %arg10[%c0_26, %c0_27] : memref<1x256xf32, #tpu.memory_space<vmem>>, vector<1x256xf32>
    %71 = vector.shape_cast %70 : vector<1x256xf32> to vector<256xf32>
    %c0_28 = arith.constant 0 : index
    %c0_29 = arith.constant 0 : index
    %72 = vector.load %arg11[%c0_28, %c0_29] : memref<1x256xf32, #tpu.memory_space<vmem>>, vector<1x256xf32>
    %73 = vector.shape_cast %72 : vector<1x256xf32> to vector<256xf32>
    %cst_30 = arith.constant dense<0.000000e+00> : vector<32xf32>
    %74 = vector.multi_reduction <add>, %69, %cst_30 [1] : vector<32x256xf32> to vector<32xf32>
    %75 = vector.shape_cast %74 : vector<32xf32> to vector<32x1xf32>
    %cst_31 = arith.constant 2.560000e+02 : f32
    %76 = vector.broadcast %cst_31 : f32 to vector<32x1xf32>
    %77 = arith.divf %75, %76 : vector<32x1xf32>
    %78 = vector.broadcast %77 : vector<32x1xf32> to vector<32x256xf32>
    %79 = arith.subf %69, %78 : vector<32x256xf32>
    %80 = arith.mulf %79, %79 : vector<32x256xf32>
    %cst_32 = arith.constant dense<0.000000e+00> : vector<32xf32>
    %81 = vector.multi_reduction <add>, %80, %cst_32 [1] : vector<32x256xf32> to vector<32xf32>
    %82 = vector.shape_cast %81 : vector<32xf32> to vector<32x1xf32>
    %cst_33 = arith.constant 2.560000e+02 : f32
    %83 = vector.broadcast %cst_33 : f32 to vector<32x1xf32>
    %84 = arith.divf %82, %83 : vector<32x1xf32>
    %85 = vector.broadcast %77 : vector<32x1xf32> to vector<32x256xf32>
    %86 = arith.subf %69, %85 : vector<32x256xf32>
    %cst_34 = arith.constant 9.99999974E-6 : f32
    %87 = vector.broadcast %cst_34 : f32 to vector<32x1xf32>
    %88 = arith.addf %84, %87 : vector<32x1xf32>
    %89 = math.rsqrt %88 : vector<32x1xf32>
    %90 = vector.broadcast %89 : vector<32x1xf32> to vector<32x256xf32>
    %91 = arith.mulf %86, %90 : vector<32x256xf32>
    %92 = vector.shape_cast %71 : vector<256xf32> to vector<1x256xf32>
    %93 = vector.broadcast %92 : vector<1x256xf32> to vector<32x256xf32>
    %94 = arith.mulf %91, %93 : vector<32x256xf32>
    %95 = vector.shape_cast %73 : vector<256xf32> to vector<1x256xf32>
    %96 = vector.broadcast %95 : vector<1x256xf32> to vector<32x256xf32>
    %97 = arith.addf %94, %96 : vector<32x256xf32>
    %98 = arith.truncf %97 : vector<32x256xf32> to vector<32x256xbf16>
    %c0_35 = arith.constant 0 : index
    %c0_36 = arith.constant 0 : index
    %99 = vector.load %arg7[%c0_35, %c0_36] : memref<1x512xf32, #tpu.memory_space<vmem>>, vector<1x512xf32>
    %100 = vector.shape_cast %99 : vector<1x512xf32> to vector<512xf32>
    %cst_37 = arith.constant 0.000000e+00 : f32
    %101 = vector.broadcast %cst_37 : f32 to vector<32x256xf32>
    %c0_38 = arith.constant 0 : index
    %c0_39 = arith.constant 0 : index
    %102 = vector.load %arg6[%c0_38, %c0_39] : memref<256x512xbf16, #tpu.memory_space<vmem>>, vector<256x512xbf16>
    %cst_40 = arith.constant dense<0.000000e+00> : vector<32x512xf32>
    %103 = tpu.matmul %98, %102, %cst_40 {dimension_numbers = #tpu.dot_dimension_numbers<[1], [0], [0], [1], [0, 0, 1, 1], [], []>} : vector<32x256xbf16>, vector<256x512xbf16>, vector<32x512xf32> -> vector<32x512xf32>
    %104 = vector.shape_cast %100 : vector<512xf32> to vector<1x512xf32>
    %105 = vector.broadcast %104 : vector<1x512xf32> to vector<32x512xf32>
    %106 = arith.addf %103, %105 : vector<32x512xf32>
    %cst_41 = arith.constant 0.000000e+00 : f32
    %107 = vector.broadcast %cst_41 : f32 to vector<32x512xf32>
    %108 = arith.maximumf %106, %107 : vector<32x512xf32>
    %109 = arith.truncf %108 : vector<32x512xf32> to vector<32x512xbf16>
    %c0_42 = arith.constant 0 : index
    %c0_43 = arith.constant 0 : index
    %110 = vector.load %arg8[%c0_42, %c0_43] : memref<512x256xbf16, #tpu.memory_space<vmem>>, vector<512x256xbf16>
    %cst_44 = arith.constant dense<0.000000e+00> : vector<32x256xf32>
    %111 = tpu.matmul %109, %110, %cst_44 {dimension_numbers = #tpu.dot_dimension_numbers<[1], [0], [0], [1], [0, 0, 1, 1], [], []>} : vector<32x512xbf16>, vector<512x256xbf16>, vector<32x256xf32> -> vector<32x256xf32>
    %112 = arith.addf %101, %111 : vector<32x256xf32>
    %113 = arith.addf %97, %112 : vector<32x256xf32>
    %c0_45 = arith.constant 0 : index
    %c0_46 = arith.constant 0 : index
    %114 = vector.load %arg9[%c0_45, %c0_46] : memref<1x256xf32, #tpu.memory_space<vmem>>, vector<1x256xf32>
    %115 = vector.shape_cast %114 : vector<1x256xf32> to vector<256xf32>
    %116 = vector.shape_cast %115 : vector<256xf32> to vector<1x256xf32>
    %117 = vector.broadcast %116 : vector<1x256xf32> to vector<32x256xf32>
    %118 = arith.addf %113, %117 : vector<32x256xf32>
    %c0_47 = arith.constant 0 : index
    %c0_48 = arith.constant 0 : index
    %119 = vector.load %arg12[%c0_47, %c0_48] : memref<1x256xf32, #tpu.memory_space<vmem>>, vector<1x256xf32>
    %120 = vector.shape_cast %119 : vector<1x256xf32> to vector<256xf32>
    %c0_49 = arith.constant 0 : index
    %c0_50 = arith.constant 0 : index
    %121 = vector.load %arg13[%c0_49, %c0_50] : memref<1x256xf32, #tpu.memory_space<vmem>>, vector<1x256xf32>
    %122 = vector.shape_cast %121 : vector<1x256xf32> to vector<256xf32>
    %cst_51 = arith.constant dense<0.000000e+00> : vector<32xf32>
    %123 = vector.multi_reduction <add>, %118, %cst_51 [1] : vector<32x256xf32> to vector<32xf32>
    %124 = vector.shape_cast %123 : vector<32xf32> to vector<32x1xf32>
    %cst_52 = arith.constant 2.560000e+02 : f32
    %125 = vector.broadcast %cst_52 : f32 to vector<32x1xf32>
    %126 = arith.divf %124, %125 : vector<32x1xf32>
    %127 = vector.broadcast %126 : vector<32x1xf32> to vector<32x256xf32>
    %128 = arith.subf %118, %127 : vector<32x256xf32>
    %129 = arith.mulf %128, %128 : vector<32x256xf32>
    %cst_53 = arith.constant dense<0.000000e+00> : vector<32xf32>
    %130 = vector.multi_reduction <add>, %129, %cst_53 [1] : vector<32x256xf32> to vector<32xf32>
    %131 = vector.shape_cast %130 : vector<32xf32> to vector<32x1xf32>
    %cst_54 = arith.constant 2.560000e+02 : f32
    %132 = vector.broadcast %cst_54 : f32 to vector<32x1xf32>
    %133 = arith.divf %131, %132 : vector<32x1xf32>
    %134 = vector.broadcast %126 : vector<32x1xf32> to vector<32x256xf32>
    %135 = arith.subf %118, %134 : vector<32x256xf32>
    %cst_55 = arith.constant 9.99999974E-6 : f32
    %136 = vector.broadcast %cst_55 : f32 to vector<32x1xf32>
    %137 = arith.addf %133, %136 : vector<32x1xf32>
    %138 = math.rsqrt %137 : vector<32x1xf32>
    %139 = vector.broadcast %138 : vector<32x1xf32> to vector<32x256xf32>
    %140 = arith.mulf %135, %139 : vector<32x256xf32>
    %141 = vector.shape_cast %120 : vector<256xf32> to vector<1x256xf32>
    %142 = vector.broadcast %141 : vector<1x256xf32> to vector<32x256xf32>
    %143 = arith.mulf %140, %142 : vector<32x256xf32>
    %144 = vector.shape_cast %122 : vector<256xf32> to vector<1x256xf32>
    %145 = vector.broadcast %144 : vector<1x256xf32> to vector<32x256xf32>
    %146 = arith.addf %143, %145 : vector<32x256xf32>
    %147 = vector.shape_cast %146 : vector<32x256xf32> to vector<2x16x256xf32>
    %c0_56 = arith.constant 0 : index
    %c0_57 = arith.constant 0 : index
    %c0_58 = arith.constant 0 : index
    %148 = vector.load %arg14[%c0_56, %c0_57, %c0_58] : memref<2x16x256xf32, #tpu.memory_space<vmem>>, vector<2x16x256xf32>
    tpu.vector_store %arg14[%c0_56, %c0_57, %c0_58], %147 {strides = array<i32>} : memref<2x16x256xf32, #tpu.memory_space<vmem>>, vector<2x16x256xf32>,
    return
  }
  func.func @transform_0(%arg0: i32) -> (i32, i32, i32) {
    %c0_i32 = arith.constant 0 : i32
    %c0_i32_0 = arith.constant 0 : i32
    %c0_i32_1 = arith.constant 0 : i32
    return %arg0, %c0_i32, %c0_i32_0 : i32, i32, i32
  }
  func.func @transform_1(%arg0: i32) -> (i32, i32) {
    %c0_i32 = arith.constant 0 : i32
    %c0_i32_0 = arith.constant 0 : i32
    %c0_i32_1 = arith.constant 0 : i32
    return %c0_i32, %c0_i32_0 : i32, i32
  }
  func.func @transform_2(%arg0: i32) -> (i32, i32) {
    %c0_i32 = arith.constant 0 : i32
    %c0_i32_0 = arith.constant 0 : i32
    %c0_i32_1 = arith.constant 0 : i32
    return %c0_i32, %c0_i32_0 : i32, i32
  }
  func.func @transform_3(%arg0: i32) -> (i32, i32) {
    %c0_i32 = arith.constant 0 : i32
    %c0_i32_0 = arith.constant 0 : i32
    %c0_i32_1 = arith.constant 0 : i32
    return %c0_i32, %c0_i32_0 : i32, i32
  }
  func.func @transform_4(%arg0: i32) -> (i32, i32) {
    %c0_i32 = arith.constant 0 : i32
    %c0_i32_0 = arith.constant 0 : i32
    %c0_i32_1 = arith.constant 0 : i32
    return %c0_i32, %c0_i32_0 : i32, i32
  }
  func.func @transform_5(%arg0: i32) -> (i32, i32) {
    %c0_i32 = arith.constant 0 : i32
    %c0_i32_0 = arith.constant 0 : i32
    %c0_i32_1 = arith.constant 0 : i32
    return %c0_i32, %c0_i32_0 : i32, i32
  }
  func.func @transform_6(%arg0: i32) -> (i32, i32) {
    %c0_i32 = arith.constant 0 : i32
    %c0_i32_0 = arith.constant 0 : i32
    %c0_i32_1 = arith.constant 0 : i32
    return %c0_i32, %c0_i32_0 : i32, i32
  }
  func.func @transform_7(%arg0: i32) -> (i32, i32) {
    %c0_i32 = arith.constant 0 : i32
    %c0_i32_0 = arith.constant 0 : i32
    %c0_i32_1 = arith.constant 0 : i32
    return %c0_i32, %c0_i32_0 : i32, i32
  }
  func.func @transform_8(%arg0: i32) -> (i32, i32) {
    %c0_i32 = arith.constant 0 : i32
    %c0_i32_0 = arith.constant 0 : i32
    %c0_i32_1 = arith.constant 0 : i32
    return %c0_i32, %c0_i32_0 : i32, i32
  }
  func.func @transform_9(%arg0: i32) -> (i32, i32) {
    %c0_i32 = arith.constant 0 : i32
    %c0_i32_0 = arith.constant 0 : i32
    %c0_i32_1 = arith.constant 0 : i32
    return %c0_i32, %c0_i32_0 : i32, i32
  }
  func.func @transform_10(%arg0: i32) -> (i32, i32) {
    %c0_i32 = arith.constant 0 : i32
    %c0_i32_0 = arith.constant 0 : i32
    %c0_i32_1 = arith.constant 0 : i32
    return %c0_i32, %c0_i32_0 : i32, i32
  }
  func.func @transform_11(%arg0: i32) -> (i32, i32) {
    %c0_i32 = arith.constant 0 : i32
    %c0_i32_0 = arith.constant 0 : i32
    %c0_i32_1 = arith.constant 0 : i32
    return %c0_i32, %c0_i32_0 : i32, i32
  }
  func.func @transform_12(%arg0: i32) -> (i32, i32) {
    %c0_i32 = arith.constant 0 : i32
    %c0_i32_0 = arith.constant 0 : i32
    %c0_i32_1 = arith.constant 0 : i32
    return %c0_i32, %c0_i32_0 : i32, i32
  }
  func.func @transform_13(%arg0: i32) -> (i32, i32, i32) {
    %c0_i32 = arith.constant 0 : i32
    %c0_i32_0 = arith.constant 0 : i32
    %c0_i32_1 = arith.constant 0 : i32
    return %arg0, %c0_i32, %c0_i32_0 : i32, i32, i32
  }
}

</mosaic_0001>

<llo_original>
// kernel: tpu_custom_call.1
$region0: #{tpu_custom_call.1}
  #allocation0 [shape = 'u32[]', space=smem, size = 0x4, offset = 0x4, fixed_abs, tag = 'smem constant byte address 0x4 - core index']
  #allocation1 [shape = 'u32[144,128]{1,0:T(1,128)}', space=vmem, size = 0x12000, scoped, tag = 'internal scratch']
  #allocation2 [shape = 'bf16[32,256]{1,0:T(16,128)(2,1)}', space=vmem, size = 0x4000, scoped, tag = 'scratch operand']
  %s0 = inlined_call_operand.hbm [shape: f32[4,16,256], index: 0, kind: input, shape index: {}]
  %s1 = inlined_call_operand.hbm [shape: bf16[256,768], index: 1, kind: input, shape index: {}]
  %s2 = inlined_call_operand.vmem [shape: f32[1,768], index: 2, kind: input, shape index: {}]
  %s3 = inlined_call_operand.hbm [shape: bf16[256,256], index: 3, kind: input, shape index: {}]
  %s4 = inlined_call_operand.vmem [shape: f32[1,256], index: 4, kind: input, shape index: {}]
  %s5 = inlined_call_operand.hbm [shape: bf16[256,512], index: 5, kind: input, shape index: {}]
  %s6 = inlined_call_operand.vmem [shape: f32[1,512], index: 6, kind: input, shape index: {}]
  %s7 = inlined_call_operand.hbm [shape: bf16[512,256], index: 7, kind: input, shape index: {}]
  %s8 = inlined_call_operand.vmem [shape: f32[1,256], index: 8, kind: input, shape index: {}]
  %s9 = inlined_call_operand.vmem [shape: f32[1,256], index: 9, kind: input, shape index: {}]
  %s10 = inlined_call_operand.vmem [shape: f32[1,256], index: 10, kind: input, shape index: {}]
  %s11 = inlined_call_operand.vmem [shape: f32[1,256], index: 11, kind: input, shape index: {}]
  %s12 = inlined_call_operand.vmem [shape: f32[1,256], index: 12, kind: input, shape index: {}]
  %s13 = inlined_call_operand.hbm [shape: f32[4,16,256], index: 13, kind: output, shape index: {}]
  %s14 = sld [smem:[#allocation0]]
  $region105: #{tpu_custom_call.1} parent=0
    _
  %s16 = ssub.s32 1, %s14
  %s17 = scalar_select 0, %s16, %s14
  $region1: #{tpu_custom_call.1} parent=0
    #allocation3 [shape = 'u8[65536]{0}', space=vmem, size = 0x10000, scoped, tag = 'input window, operand 0']
    #allocation4 [shape = 's32[2]{0}', space=sflag, size = 0x8, scoped, tag = 'scoped memory for tpu_custom_call.1']
    #allocation5 [shape = 's32[2]{0}', space=sflag, size = 0x8, scoped, tag = 'scoped memory for tpu_custom_call.1']
    #allocation6 [shape = 'u8[393216]{0}', space=vmem, size = 0x60000, scoped, tag = 'input window, operand 1, single buffered']
    #allocation7 [shape = 's32[1]{0}', space=sflag, size = 0x4, scoped, tag = 'scoped memory for tpu_custom_call.1']
    #allocation8 [shape = 'u8[131072]{0}', space=vmem, size = 0x20000, scoped, tag = 'input window, operand 3, single buffered']
    #allocation9 [shape = 'u8[262144]{0}', space=vmem, size = 0x40000, scoped, tag = 'input window, operand 5, single buffered']
    #allocation10 [shape = 's32[1]{0}', space=sflag, size = 0x4, scoped, tag = 'scoped memory for tpu_custom_call.1']
    #allocation11 [shape = 'u8[262144]{0}', space=vmem, size = 0x40000, scoped, tag = 'input window, operand 7, single buffered']
    #allocation12 [shape = 'u8[65536]{0}', space=vmem, size = 0x10000, scoped, tag = 'output window, operand 0']
    %18 = vsyncpa [#allocation4], 0
    %s19 = scalar_lea.sflag [#allocation4], 1
    %20 = vsyncpa %s19, 0
    %21 = vsyncpa [#allocation7], 0
    %22 = vsyncpa [#allocation10], 0
    %23 = vsyncpa [#allocation5], 0
    %s24 = scalar_lea.sflag [#allocation5], 1
    %25 = vsyncpa %s24, 0
    loop: start=0, step=1, limit=4
    $region2: #{tpu_custom_call.1} parent=1 // loop_pre_header
      _
    $region3: #{tpu_custom_call.1} parent=1 // loop_header
      %s27 = sphi 0, %s31
      %p28 = scmp.ge.s32.totalorder %s27, 4
      %s37 = sphi 0, %s39
      %s40 = sphi 0, %s37
      %s41 = sphi 0, %s40
      %s57 = sphi 0, %s41
      %s61 = sphi 0, %s61
      %s63 = sphi 0, %s61
      %s64 = sphi 0, %s63
      %s78 = sphi 0, %s64
      %s82 = sphi 0, %s82
      %s84 = sphi 0, %s82
      %s85 = sphi 0, %s84
      %s99 = sphi 0, %s85
      %s103 = sphi 0, %s103
      %s105 = sphi 0, %s103
      %s106 = sphi 0, %s105
      %s120 = sphi 0, %s106
      %s124 = sphi 0, %s124
      %s126 = sphi 0, %s124
      %s127 = sphi 0, %s126
      %s141 = sphi 0, %s127
      %s145 = sphi 0, %s145
      %s147 = sphi 0, %s145
      %s148 = sphi 0, %s147
      %s162 = sphi 0, %s148
      %s166 = sphi 0, %s166
      %s168 = sphi 0, %s166
      %s169 = sphi 0, %s168
      %s183 = sphi 0, %s169
      %s187 = sphi 0, %s187
      %s189 = sphi 0, %s187
      %s190 = sphi 0, %s189
      %s204 = sphi 0, %s190
      %s208 = sphi 0, %s208
      %s210 = sphi 0, %s208
      %s211 = sphi 0, %s210
      %s225 = sphi 0, %s211
      %s229 = sphi 0, %s229
      %s231 = sphi 0, %s229
      %s232 = sphi 0, %s231
      %s246 = sphi 0, %s232
      %s250 = sphi 0, %s250
      %s252 = sphi 0, %s250
      %s253 = sphi 0, %s252
      %s267 = sphi 0, %s253
      %s271 = sphi 0, %s271
      %s273 = sphi 0, %s271
      %s274 = sphi 0, %s273
      %s288 = sphi 0, %s274
      %s292 = sphi 0, %s292
      %s294 = sphi 0, %s292
      %s295 = sphi 0, %s294
      %s309 = sphi 0, %s295
      %s315 = sphi 0, %s317
      %s318 = sphi 0, %s315
      %s319 = sphi 0, %s318
      %s335 = sphi 0, %s319
    $region4: #{tpu_custom_call.1} parent=1 // loop_header_branch
      %30 = sbr.rel (%p28) target = $region8
    $region5: #{tpu_custom_call.1} parent=1 // loop_body
      %s32 = ssub.s32 %s27, 1
      %s33 = ssub.s32 %s27, 2
      %s34 = sadd.s32 %s27, 1
      %s35 = ssub.s32 %s27, %s34
      %p36 = scmp.eq.s32.totalorder %s35, 0
      %s38 = sadd.s32 %s37, 1
      %s39 = scalar_select %p36, %s37, %s38
      %p42 = pneg %p36
      %p43 = scmp.eq.s32.totalorder %s27, 1
      %p44 = por %p42, %p43
      %p45 = scmp.ne.s32.totalorder %s37, %s40
      %p46 = scmp.eq.s32.totalorder %s27, 0
      %p47 = por %p45, %p46
      %p48 = scmp.ne.s32.totalorder %s37, %s40
      %p49 = scmp.eq.s32.totalorder %s32, 1
      %p50 = por %p48, %p49
      %p51 = scmp.ne.s32.totalorder %s40, %s41
      %p52 = scmp.eq.s32.totalorder %s32, 0
      %p53 = por %p51, %p52
      %p54 = scmp.ne.s32.totalorder %s40, %s41
      %p55 = scmp.eq.s32.totalorder %s33, 1
      %p56 = por %p54, %p55
      %p58 = scmp.ne.s32.totalorder %s41, %s57
      %p59 = scmp.eq.s32.totalorder %s33, 0
      %p60 = por %p58, %p59
      %s62 = sadd.s32 %s61, 1
      %p65 = scmp.eq.s32.totalorder %s27, 1
      %p66 = scmp.ne.s32.totalorder %s61, %s63
      %p67 = scmp.eq.s32.totalorder %s27, 0
      %p68 = por %p66, %p67
      %p69 = scmp.ne.s32.totalorder %s61, %s63
      %p70 = scmp.eq.s32.totalorder %s32, 1
      %p71 = por %p69, %p70
      %p72 = scmp.ne.s32.totalorder %s63, %s64
      %p73 = scmp.eq.s32.totalorder %s32, 0
      %p74 = por %p72, %p73
      %p75 = scmp.ne.s32.totalorder %s63, %s64
      %p76 = scmp.eq.s32.totalorder %s33, 1
      %p77 = por %p75, %p76
      %p79 = scmp.ne.s32.totalorder %s64, %s78
      %p80 = scmp.eq.s32.totalorder %s33, 0
      %p81 = por %p79, %p80
      %s83 = sadd.s32 %s82, 1
      %p86 = scmp.eq.s32.totalorder %s27, 1
      %p87 = scmp.ne.s32.totalorder %s82, %s84
      %p88 = scmp.eq.s32.totalorder %s27, 0
      %p89 = por %p87, %p88
      %p90 = scmp.ne.s32.totalorder %s82, %s84
      %p91 = scmp.eq.s32.totalorder %s32, 1
      %p92 = por %p90, %p91
      %p93 = scmp.ne.s32.totalorder %s84, %s85
      %p94 = scmp.eq.s32.totalorder %s32, 0
      %p95 = por %p93, %p94
      %p96 = scmp.ne.s32.totalorder %s84, %s85
      %p97 = scmp.eq.s32.totalorder %s33, 1
      %p98 = por %p96, %p97
      %p100 = scmp.ne.s32.totalorder %s85, %s99
      %p101 = scmp.eq.s32.totalorder %s33, 0
      %p102 = por %p100, %p101
      %s104 = sadd.s32 %s103, 1
      %p107 = scmp.eq.s32.totalorder %s27, 1
      %p108 = scmp.ne.s32.totalorder %s103, %s105
      %p109 = scmp.eq.s32.totalorder %s27, 0
      %p110 = por %p108, %p109
      %p111 = scmp.ne.s32.totalorder %s103, %s105
      %p112 = scmp.eq.s32.totalorder %s32, 1
      %p113 = por %p111, %p112
      %p114 = scmp.ne.s32.totalorder %s105, %s106
      %p115 = scmp.eq.s32.totalorder %s32, 0
      %p116 = por %p114, %p115
      %p117 = scmp.ne.s32.totalorder %s105, %s106
      %p118 = scmp.eq.s32.totalorder %s33, 1
      %p119 = por %p117, %p118
      %p121 = scmp.ne.s32.totalorder %s106, %s120
      %p122 = scmp.eq.s32.totalorder %s33, 0
      %p123 = por %p121, %p122
      %s125 = sadd.s32 %s124, 1
      %p128 = scmp.eq.s32.totalorder %s27, 1
      %p129 = scmp.ne.s32.totalorder %s124, %s126
      %p130 = scmp.eq.s32.totalorder %s27, 0
      %p131 = por %p129, %p130
      %p132 = scmp.ne.s32.totalorder %s124, %s126
      %p133 = scmp.eq.s32.totalorder %s32, 1
      %p134 = por %p132, %p133
      %p135 = scmp.ne.s32.totalorder %s126, %s127
      %p136 = scmp.eq.s32.totalorder %s32, 0
      %p137 = por %p135, %p136
      %p138 = scmp.ne.s32.totalorder %s126, %s127
      %p139 = scmp.eq.s32.totalorder %s33, 1
      %p140 = por %p138, %p139
      %p142 = scmp.ne.s32.totalorder %s127, %s141
      %p143 = scmp.eq.s32.totalorder %s33, 0
      %p144 = por %p142, %p143
      %s146 = sadd.s32 %s145, 1
      %p149 = scmp.eq.s32.totalorder %s27, 1
      %p150 = scmp.ne.s32.totalorder %s145, %s147
      %p151 = scmp.eq.s32.totalorder %s27, 0
      %p152 = por %p150, %p151
      %p153 = scmp.ne.s32.totalorder %s145, %s147
      %p154 = scmp.eq.s32.totalorder %s32, 1
      %p155 = por %p153, %p154
      %p156 = scmp.ne.s32.totalorder %s147, %s148
      %p157 = scmp.eq.s32.totalorder %s32, 0
      %p158 = por %p156, %p157
      %p159 = scmp.ne.s32.totalorder %s147, %s148
      %p160 = scmp.eq.s32.totalorder %s33, 1
      %p161 = por %p159, %p160
      %p163 = scmp.ne.s32.totalorder %s148, %s162
      %p164 = scmp.eq.s32.totalorder %s33, 0
      %p165 = por %p163, %p164
      %s167 = sadd.s32 %s166, 1
      %p170 = scmp.eq.s32.totalorder %s27, 1
      %p171 = scmp.ne.s32.totalorder %s166, %s168
      %p172 = scmp.eq.s32.totalorder %s27, 0
      %p173 = por %p171, %p172
      %p174 = scmp.ne.s32.totalorder %s166, %s168
      %p175 = scmp.eq.s32.totalorder %s32, 1
      %p176 = por %p174, %p175
      %p177 = scmp.ne.s32.totalorder %s168, %s169
      %p178 = scmp.eq.s32.totalorder %s32, 0
      %p179 = por %p177, %p178
      %p180 = scmp.ne.s32.totalorder %s168, %s169
      %p181 = scmp.eq.s32.totalorder %s33, 1
      %p182 = por %p180, %p181
      %p184 = scmp.ne.s32.totalorder %s169, %s183
      %p185 = scmp.eq.s32.totalorder %s33, 0
      %p186 = por %p184, %p185
      %s188 = sadd.s32 %s187, 1
      %p191 = scmp.eq.s32.totalorder %s27, 1
      %p192 = scmp.ne.s32.totalorder %s187, %s189
      %p193 = scmp.eq.s32.totalorder %s27, 0
      %p194 = por %p192, %p193
      %p195 = scmp.ne.s32.totalorder %s187, %s189
      %p196 = scmp.eq.s32.totalorder %s32, 1
      %p197 = por %p195, %p196
      %p198 = scmp.ne.s32.totalorder %s189, %s190
      %p199 = scmp.eq.s32.totalorder %s32, 0
      %p200 = por %p198, %p199
      %p201 = scmp.ne.s32.totalorder %s189, %s190
      %p202 = scmp.eq.s32.totalorder %s33, 1
      %p203 = por %p201, %p202
      %p205 = scmp.ne.s32.totalorder %s190, %s204
      %p206 = scmp.eq.s32.totalorder %s33, 0
      %p207 = por %p205, %p206
      %s209 = sadd.s32 %s208, 1
      %p212 = scmp.eq.s32.totalorder %s27, 1
      %p213 = scmp.ne.s32.totalorder %s208, %s210
      %p214 = scmp.eq.s32.totalorder %s27, 0
      %p215 = por %p213, %p214
      %p216 = scmp.ne.s32.totalorder %s208, %s210
      %p217 = scmp.eq.s32.totalorder %s32, 1
      %p218 = por %p216, %p217
      %p219 = scmp.ne.s32.totalorder %s210, %s211
      %p220 = scmp.eq.s32.totalorder %s32, 0
      %p221 = por %p219, %p220
      %p222 = scmp.ne.s32.totalorder %s210, %s211
      %p223 = scmp.eq.s32.totalorder %s33, 1
      %p224 = por %p222, %p223
      %p226 = scmp.ne.s32.totalorder %s211, %s225
      %p227 = scmp.eq.s32.totalorder %s33, 0
      %p228 = por %p226, %p227
      %s230 = sadd.s32 %s229, 1
      %p233 = scmp.eq.s32.totalorder %s27, 1
      %p234 = scmp.ne.s32.totalorder %s229, %s231
      %p235 = scmp.eq.s32.totalorder %s27, 0
      %p236 = por %p234, %p235
      %p237 = scmp.ne.s32.totalorder %s229, %s231
      %p238 = scmp.eq.s32.totalorder %s32, 1
      %p239 = por %p237, %p238
      %p240 = scmp.ne.s32.totalorder %s231, %s232
      %p241 = scmp.eq.s32.totalorder %s32, 0
      %p242 = por %p240, %p241
      %p243 = scmp.ne.s32.totalorder %s231, %s232
      %p244 = scmp.eq.s32.totalorder %s33, 1
      %p245 = por %p243, %p244
      %p247 = scmp.ne.s32.totalorder %s232, %s246
      %p248 = scmp.eq.s32.totalorder %s33, 0
      %p249 = por %p247, %p248
      %s251 = sadd.s32 %s250, 1
      %p254 = scmp.eq.s32.totalorder %s27, 1
      %p255 = scmp.ne.s32.totalorder %s250, %s252
      %p256 = scmp.eq.s32.totalorder %s27, 0
      %p257 = por %p255, %p256
      %p258 = scmp.ne.s32.totalorder %s250, %s252
      %p259 = scmp.eq.s32.totalorder %s32, 1
      %p260 = por %p258, %p259
      %p261 = scmp.ne.s32.totalorder %s252, %s253
      %p262 = scmp.eq.s32.totalorder %s32, 0
      %p263 = por %p261, %p262
      %p264 = scmp.ne.s32.totalorder %s252, %s253
      %p265 = scmp.eq.s32.totalorder %s33, 1
      %p266 = por %p264, %p265
      %p268 = scmp.ne.s32.totalorder %s253, %s267
      %p269 = scmp.eq.s32.totalorder %s33, 0
      %p270 = por %p268, %p269
      %s272 = sadd.s32 %s271, 1
      %p275 = scmp.eq.s32.totalorder %s27, 1
      %p276 = scmp.ne.s32.totalorder %s271, %s273
      %p277 = scmp.eq.s32.totalorder %s27, 0
      %p278 = por %p276, %p277
      %p279 = scmp.ne.s32.totalorder %s271, %s273
      %p280 = scmp.eq.s32.totalorder %s32, 1
      %p281 = por %p279, %p280
      %p282 = scmp.ne.s32.totalorder %s273, %s274
      %p283 = scmp.eq.s32.totalorder %s32, 0
      %p284 = por %p282, %p283
      %p285 = scmp.ne.s32.totalorder %s273, %s274
      %p286 = scmp.eq.s32.totalorder %s33, 1
      %p287 = por %p285, %p286
      %p289 = scmp.ne.s32.totalorder %s274, %s288
      %p290 = scmp.eq.s32.totalorder %s33, 0
      %p291 = por %p289, %p290
      %s293 = sadd.s32 %s292, 1
      %p296 = scmp.eq.s32.totalorder %s27, 1
      %p297 = scmp.ne.s32.totalorder %s292, %s294
      %p298 = scmp.eq.s32.totalorder %s27, 0
      %p299 = por %p297, %p298
      %p300 = scmp.ne.s32.totalorder %s292, %s294
      %p301 = scmp.eq.s32.totalorder %s32, 1
      %p302 = por %p300, %p301
      %p303 = scmp.ne.s32.totalorder %s294, %s295
      %p304 = scmp.eq.s32.totalorder %s32, 0
      %p305 = por %p303, %p304
      %p306 = scmp.ne.s32.totalorder %s294, %s295
      %p307 = scmp.eq.s32.totalorder %s33, 1
      %p308 = por %p306, %p307
      %p310 = scmp.ne.s32.totalorder %s295, %s309
      %p311 = scmp.eq.s32.totalorder %s33, 0
      %p312 = por %p310, %p311
      %s313 = ssub.s32 %s27, %s34
      %p314 = scmp.eq.s32.totalorder %s313, 0
      %s316 = sadd.s32 %s315, 1
      %s317 = scalar_select %p314, %s315, %s316
      %p320 = pneg %p314
      %p321 = scmp.eq.s32.totalorder %s27, 1
      %p322 = por %p320, %p321
      %p323 = scmp.ne.s32.totalorder %s315, %s318
      %p324 = scmp.eq.s32.totalorder %s27, 0
      %p325 = por %p323, %p324
      %p326 = scmp.ne.s32.totalorder %s315, %s318
      %p327 = scmp.eq.s32.totalorder %s32, 1
      %p328 = por %p326, %p327
      %p329 = scmp.ne.s32.totalorder %s318, %s319
      %p330 = scmp.eq.s32.totalorder %s32, 0
      %p331 = por %p329, %p330
      %p332 = scmp.ne.s32.totalorder %s318, %s319
      %p333 = scmp.eq.s32.totalorder %s33, 1
      %p334 = por %p332, %p333
      %p336 = scmp.ne.s32.totalorder %s319, %s335
      %p337 = scmp.eq.s32.totalorder %s33, 0
      %p338 = por %p336, %p337
      %p339 = scmp.le.s32.totalorder 1, %s27
      %p340 = scmp.lt.s32.totalorder %s27, 3
      %p341 = pnand %p339, %p340
      %p342 = pneg %p341
      // Predicated region
      $region9: #{tpu_custom_call.1} parent=5 // pred_check
        _
      $region10: #{tpu_custom_call.1} parent=5 // pred_check_branch
        %344 = sbr.rel (%p341) target = $region12
      $region11: #{tpu_custom_call.1} parent=5 // pred_region
        %s345 = ssub.s32 %s27, 1
        // Predicated region
        $region13: #{tpu_custom_call.1} parent=11 // pred_check
          %p346 = pneg %p74
        $region14: #{tpu_custom_call.1} parent=11 // pred_check_branch
          %348 = sbr.rel (%p346) target = $region16
        $region15: #{tpu_custom_call.1} parent=11 // pred_region
          %s350 = ssub.s32 12288, 12288
          %351 = vsyncadd [#allocation7], %s350
          %s352 = sshll.u32 [#allocation6], 4
          %s353 = int_to_ptr.vmem [resolvable:$true] %s352
          %358 = dma.hbm_to_vmem [thread:$0]  %s1, 12288, %s353, [#allocation7], 384, 384, 24
        $region16: #{tpu_custom_call.1} parent=11 // pred_fallthru
          _
        // Predicated region
        $region17: #{tpu_custom_call.1} parent=11 // pred_check
          %p359 = pneg %p95
        $region18: #{tpu_custom_call.1} parent=11 // pred_check_branch
          %361 = sbr.rel (%p359) target = $region20
        $region19: #{tpu_custom_call.1} parent=11 // pred_region
          _
        $region20: #{tpu_custom_call.1} parent=11 // pred_fallthru
          _
        // Predicated region
        $region21: #{tpu_custom_call.1} parent=11 // pred_check
          %p362 = pneg %p116
        $region22: #{tpu_custom_call.1} parent=11 // pred_check_branch
          %364 = sbr.rel (%p362) target = $region24
        $region23: #{tpu_custom_call.1} parent=11 // pred_region
          %s366 = ssub.s32 4096, 4096
          %367 = vsyncadd [#allocation7], %s366
          %s368 = sshll.u32 [#allocation8], 4
          %s369 = int_to_ptr.vmem [resolvable:$true] %s368
          %374 = dma.hbm_to_vmem [thread:$0]  %s3, 4096, %s369, [#allocation7], 128, 128, 8
        $region24: #{tpu_custom_call.1} parent=11 // pred_fallthru
          _
        // Predicated region
        $region25: #{tpu_custom_call.1} parent=11 // pred_check
          %p375 = pneg %p137
        $region26: #{tpu_custom_call.1} parent=11 // pred_check_branch
          %377 = sbr.rel (%p375) target = $region28
        $region27: #{tpu_custom_call.1} parent=11 // pred_region
          _
        $region28: #{tpu_custom_call.1} parent=11 // pred_fallthru
          _
        // Predicated region
        $region29: #{tpu_custom_call.1} parent=11 // pred_check
          %p378 = pneg %p158
        $region30: #{tpu_custom_call.1} parent=11 // pred_check_branch
          %380 = sbr.rel (%p378) target = $region32
        $region31: #{tpu_custom_call.1} parent=11 // pred_region
          %s382 = ssub.s32 8192, 8192
          %383 = vsyncadd [#allocation10], %s382
          %s384 = sshll.u32 [#allocation9], 4
          %s385 = int_to_ptr.vmem [resolvable:$true] %s384
          %390 = dma.hbm_to_vmem [thread:$0]  %s5, 8192, %s385, [#allocation10], 256, 256, 16
        $region32: #{tpu_custom_call.1} parent=11 // pred_fallthru
          _
        // Predicated region
        $region33: #{tpu_custom_call.1} parent=11 // pred_check
          %p391 = pneg %p179
        $region34: #{tpu_custom_call.1} parent=11 // pred_check_branch
          %393 = sbr.rel (%p391) target = $region36
        $region35: #{tpu_custom_call.1} parent=11 // pred_region
          _
        $region36: #{tpu_custom_call.1} parent=11 // pred_fallthru
          _
        // Predicated region
        $region37: #{tpu_custom_call.1} parent=11 // pred_check
          %p394 = pneg %p200
        $region38: #{tpu_custom_call.1} parent=11 // pred_check_branch
          %396 = sbr.rel (%p394) target = $region40
        $region39: #{tpu_custom_call.1} parent=11 // pred_region
          %s398 = ssub.s32 8192, 8192
          %399 = vsyncadd [#allocation10], %s398
          %s400 = sshll.u32 [#allocation11], 4
          %s401 = int_to_ptr.vmem [resolvable:$true] %s400
          %406 = dma.hbm_to_vmem [thread:$0]  %s7, 8192, %s401, [#allocation10], 128, 128, 8
        $region40: #{tpu_custom_call.1} parent=11 // pred_fallthru
          _
        // Predicated region
        $region41: #{tpu_custom_call.1} parent=11 // pred_check
          %p407 = pneg %p221
        $region42: #{tpu_custom_call.1} parent=11 // pred_check_branch
          %409 = sbr.rel (%p407) target = $region44
        $region43: #{tpu_custom_call.1} parent=11 // pred_region
          _
        $region44: #{tpu_custom_call.1} parent=11 // pred_fallthru
          _
        // Predicated region
        $region45: #{tpu_custom_call.1} parent=11 // pred_check
          %p410 = pneg %p242
        $region46: #{tpu_custom_call.1} parent=11 // pred_check_branch
          %412 = sbr.rel (%p410) target = $region48
        $region47: #{tpu_custom_call.1} parent=11 // pred_region
          _
        $region48: #{tpu_custom_call.1} parent=11 // pred_fallthru
          _
        // Predicated region
        $region49: #{tpu_custom_call.1} parent=11 // pred_check
          %p413 = pneg %p263
        $region50: #{tpu_custom_call.1} parent=11 // pred_check_branch
          %415 = sbr.rel (%p413) target = $region52
        $region51: #{tpu_custom_call.1} parent=11 // pred_region
          _
        $region52: #{tpu_custom_call.1} parent=11 // pred_fallthru
          _
        // Predicated region
        $region53: #{tpu_custom_call.1} parent=11 // pred_check
          %p416 = pneg %p284
        $region54: #{tpu_custom_call.1} parent=11 // pred_check_branch
          %418 = sbr.rel (%p416) target = $region56
        $region55: #{tpu_custom_call.1} parent=11 // pred_region
          _
        $region56: #{tpu_custom_call.1} parent=11 // pred_fallthru
          _
        // Predicated region
        $region57: #{tpu_custom_call.1} parent=11 // pred_check
          %p419 = pneg %p305
        $region58: #{tpu_custom_call.1} parent=11 // pred_check_branch
          %421 = sbr.rel (%p419) target = $region60
        $region59: #{tpu_custom_call.1} parent=11 // pred_region
          _
        $region60: #{tpu_custom_call.1} parent=11 // pred_fallthru
          _
      $region12: #{tpu_custom_call.1} parent=5 // pred_fallthru
        _
      %p422 = scmp.lt.s32.totalorder %s27, 2
      // Predicated region
      $region61: #{tpu_custom_call.1} parent=5 // pred_check
        %p423 = pneg %p422
      $region62: #{tpu_custom_call.1} parent=5 // pred_check_branch
        %425 = sbr.rel (%p423) target = $region64
      $region63: #{tpu_custom_call.1} parent=5 // pred_region
        // Predicated region
        $region65: #{tpu_custom_call.1} parent=63 // pred_check
          %p426 = pneg %p47
        $region66: #{tpu_custom_call.1} parent=63 // pred_check_branch
          %428 = sbr.rel (%p426) target = $region68
        $region67: #{tpu_custom_call.1} parent=63 // pred_region
          %s429 = sand.u32 %s37, 1
          %s430 = scalar_lea.sflag [#allocation4], %s429
          %s431 = sand.u32 %s37, 1
          %s432 = smul.addr %s431, 64
          %s433 = scalar_lea.vmem [#allocation3], %s432
          %s434 = smul.u32 2, %s27
          %s436 = ssub.s32 1024, 1024
          %437 = vsyncadd %s430, %s436
          %s438 = smul.addr %s434, 4
          %s439 = smul.addr %s438, 128
          %s440 = scalar_lea.hbm %s0, %s439
          %s441 = sshll.u32 %s433, 4
          %s442 = int_to_ptr.vmem [resolvable:$true] %s441
          %447 = dma.hbm_to_vmem [thread:$0]  %s440, 1024, %s442, %s430, 256, 256, 16
        $region68: #{tpu_custom_call.1} parent=63 // pred_fallthru
          _
      $region64: #{tpu_custom_call.1} parent=5 // pred_fallthru
        _
      %p448 = scmp.le.s32.totalorder 1, %s27
      %p449 = scmp.lt.s32.totalorder %s27, 3
      %p450 = pnand %p448, %p449
      %p451 = pneg %p450
      // Predicated region
      $region69: #{tpu_custom_call.1} parent=5 // pred_check
        _
      $region70: #{tpu_custom_call.1} parent=5 // pred_check_branch
        %453 = sbr.rel (%p450) target = $region72
      $region71: #{tpu_custom_call.1} parent=5 // pred_region
        %s454 = ssub.s32 %s27, 1
        %s455 = sand.u32 %s40, 1
        %s456 = scalar_lea.sflag [#allocation4], %s455
        %s457 = sand.u32 %s40, 1
        %s458 = smul.addr %s457, 64
        %s459 = scalar_lea.vmem [#allocation3], %s458
        // Predicated region
        $region73: #{tpu_custom_call.1} parent=71 // pred_check
          %p460 = pneg %p53
        $region74: #{tpu_custom_call.1} parent=71 // pred_check_branch
          %462 = sbr.rel (%p460) target = $region76
        $region75: #{tpu_custom_call.1} parent=71 // pred_region
          %463 = dma.done %s456, 1024
        $region76: #{tpu_custom_call.1} parent=71 // pred_fallthru
          _
        // Predicated region
        $region77: #{tpu_custom_call.1} parent=71 // pred_check
          %p464 = pneg %p74
        $region78: #{tpu_custom_call.1} parent=71 // pred_check_branch
          %466 = sbr.rel (%p464) target = $region80
        $region79: #{tpu_custom_call.1} parent=71 // pred_region
          %467 = dma.done [#allocation7], 12288
        $region80: #{tpu_custom_call.1} parent=71 // pred_fallthru
          _
        // Predicated region
        $region81: #{tpu_custom_call.1} parent=71 // pred_check
          %p468 = pneg %p116
        $region82: #{tpu_custom_call.1} parent=71 // pred_check_branch
          %470 = sbr.rel (%p468) target = $region84
        $region83: #{tpu_custom_call.1} parent=71 // pred_region
          %471 = dma.done [#allocation7], 4096
        $region84: #{tpu_custom_call.1} parent=71 // pred_fallthru
          _
        // Predicated region
        $region85: #{tpu_custom_call.1} parent=71 // pred_check
          %p472 = pneg %p158
        $region86: #{tpu_custom_call.1} parent=71 // pred_check_branch
          %474 = sbr.rel (%p472) target = $region88
        $region87: #{tpu_custom_call.1} parent=71 // pred_region
          %475 = dma.done [#allocation10], 8192
        $region88: #{tpu_custom_call.1} parent=71 // pred_fallthru
          _
        // Predicated region
        $region89: #{tpu_custom_call.1} parent=71 // pred_check
          %p476 = pneg %p200
        $region90: #{tpu_custom_call.1} parent=71 // pred_check_branch
          %478 = sbr.rel (%p476) target = $region92
        $region91: #{tpu_custom_call.1} parent=71 // pred_region
          %479 = dma.done [#allocation10], 8192
        $region92: #{tpu_custom_call.1} parent=71 // pred_fallthru
          _
        %s480 = sand.u32 %s40, 1
        %s481 = scalar_lea.sflag [#allocation4], %s480
        %s482 = sand.u32 %s40, 1
        %s483 = smul.addr %s482, 64
        %s484 = scalar_lea.vmem [#allocation3], %s483
        %p485 = pneg %p53
        %p486 = pneg %p50
        %p487 = pneg %p74
        %p488 = pneg %p71
        %p489 = pneg %p95
        %p490 = pneg %p92
        %p491 = pneg %p116
        %p492 = pneg %p113
        %p493 = pneg %p137
        %p494 = pneg %p134
        %p495 = pneg %p158
        %p496 = pneg %p155
        %p497 = pneg %p179
        %p498 = pneg %p176
        %p499 = pneg %p200
        %p500 = pneg %p197
        %p501 = pneg %p221
        %p502 = pneg %p218
        %p503 = pneg %p242
        %p504 = pneg %p239
        %p505 = pneg %p263
        %p506 = pneg %p260
        %p507 = pneg %p284
        %p508 = pneg %p281
        %p509 = pneg %p305
        %p510 = pneg %p302
        %p511 = pneg %p331
        %p512 = pneg %p328
        %s513 = sand.u32 %s318, 1
        %s514 = scalar_lea.sflag [#allocation5], %s513
        %s515 = sand.u32 %s318, 1
        %s516 = smul.addr %s515, 64
        %s517 = scalar_lea.vmem [#allocation12], %s516
        %s518 = smul.u32 2, %s32
        %s519 = smul.u32 2, %s32
        %v521 = vld [vmem:[%s459] sm:$0xff]
        %v522 = vld [vmem:[%s459 + $0x8] sm:$0xff]
        %v523 = vld [vmem:[%s459 + $0x10] sm:$0xff]
        %v524 = vld [vmem:[%s459 + $0x18] sm:$0xff]
        %v525 = vld [vmem:[%s459 + $0x20] sm:$0xff]
        %v526 = vld [vmem:[%s459 + $0x28] sm:$0xff]
        %v527 = vld [vmem:[%s459 + $0x30] sm:$0xff]
        %v528 = vld [vmem:[%s459 + $0x38] sm:$0xff]
        %v529 = vpack.c.bf16 %v523, %v521
        %v530 = vpack.c.bf16 %v524, %v522
        %v531 = vpack.c.bf16 %v527, %v525
        %v532 = vpack.c.bf16 %v528, %v526
        %v533 = vld [vmem:[#allocation6] sm:$0xff]
        %v534 = vld [vmem:[#allocation6 + $0x8] sm:$0xff]
        %v535 = vld [vmem:[#allocation6 + $0x10] sm:$0xff]
        %v536 = vld [vmem:[#allocation6 + $0x18] sm:$0xff]
        %v537 = vld [vmem:[#allocation6 + $0x20] sm:$0xff]
        %v538 = vld [vmem:[#allocation6 + $0x28] sm:$0xff]
        %v539 = vld [vmem:[#allocation6 + $0x30] sm:$0xff]
        %v540 = vld [vmem:[#allocation6 + $0x38] sm:$0xff]
        %v541 = vld [vmem:[#allocation6 + $0x40] sm:$0xff]
        %v542 = vld [vmem:[#allocation6 + $0x48] sm:$0xff]
        %v543 = vld [vmem:[#allocation6 + $0x50] sm:$0xff]
        %v544 = vld [vmem:[#allocation6 + $0x58] sm:$0xff]
        %v545 = vld [vmem:[#allocation6 + $0x60] sm:$0xff]
        %v546 = vld [vmem:[#allocation6 + $0x68] sm:$0xff]
        %v547 = vld [vmem:[#allocation6 + $0x70] sm:$0xff]
        %v548 = vld [vmem:[#allocation6 + $0x78] sm:$0xff]
        %v549 = vld [vmem:[#allocation6 + $0x80] sm:$0xff]
        %v550 = vld [vmem:[#allocation6 + $0x88] sm:$0xff]
        %v551 = vld [vmem:[#allocation6 + $0x90] sm:$0xff]
        %v552 = vld [vmem:[#allocation6 + $0x98] sm:$0xff]
        %v553 = vld [vmem:[#allocation6 + $0xa0] sm:$0xff]
        %v554 = vld [vmem:[#allocation6 + $0xa8] sm:$0xff]
        %v555 = vld [vmem:[#allocation6 + $0xb0] sm:$0xff]
        %v556 = vld [vmem:[#allocation6 + $0xb8] sm:$0xff]
        %v557 = vld [vmem:[#allocation6 + $0xc0] sm:$0xff]
        %v558 = vld [vmem:[#allocation6 + $0xc8] sm:$0xff]
        %v559 = vld [vmem:[#allocation6 + $0xd0] sm:$0xff]
        %v560 = vld [vmem:[#allocation6 + $0xd8] sm:$0xff]
        %v561 = vld [vmem:[#allocation6 + $0xe0] sm:$0xff]
        %v562 = vld [vmem:[#allocation6 + $0xe8] sm:$0xff]
        %v563 = vld [vmem:[#allocation6 + $0xf0] sm:$0xff]
        %v564 = vld [vmem:[#allocation6 + $0xf8] sm:$0xff]
        %v565 = vld [vmem:[#allocation6 + $0x100] sm:$0xff]
        %v566 = vld [vmem:[#allocation6 + $0x108] sm:$0xff]
        %v567 = vld [vmem:[#allocation6 + $0x110] sm:$0xff]
        %v568 = vld [vmem:[#allocation6 + $0x118] sm:$0xff]
        %v569 = vld [vmem:[#allocation6 + $0x120] sm:$0xff]
        %v570 = vld [vmem:[#allocation6 + $0x128] sm:$0xff]
        %v571 = vld [vmem:[#allocation6 + $0x130] sm:$0xff]
        %v572 = vld [vmem:[#allocation6 + $0x138] sm:$0xff]
        %v573 = vld [vmem:[#allocation6 + $0x140] sm:$0xff]
        %v574 = vld [vmem:[#allocation6 + $0x148] sm:$0xff]
        %v575 = vld [vmem:[#allocation6 + $0x150] sm:$0xff]
        %v576 = vld [vmem:[#allocation6 + $0x158] sm:$0xff]
        %v577 = vld [vmem:[#allocation6 + $0x160] sm:$0xff]
        %v578 = vld [vmem:[#allocation6 + $0x168] sm:$0xff]
        %v579 = vld [vmem:[#allocation6 + $0x170] sm:$0xff]
        %v580 = vld [vmem:[#allocation6 + $0x178] sm:$0xff]
        %v581 = vld [vmem:[#allocation6 + $0x180] sm:$0xff]
        %v582 = vld [vmem:[#allocation6 + $0x188] sm:$0xff]
        %v583 = vld [vmem:[#allocation6 + $0x190] sm:$0xff]
        %v584 = vld [vmem:[#allocation6 + $0x198] sm:$0xff]
        %v585 = vld [vmem:[#allocation6 + $0x1a0] sm:$0xff]
        %v586 = vld [vmem:[#allocation6 + $0x1a8] sm:$0xff]
        %v587 = vld [vmem:[#allocation6 + $0x1b0] sm:$0xff]
        %v588 = vld [vmem:[#allocation6 + $0x1b8] sm:$0xff]
        %v589 = vld [vmem:[#allocation6 + $0x1c0] sm:$0xff]
        %v590 = vld [vmem:[#allocation6 + $0x1c8] sm:$0xff]
        %v591 = vld [vmem:[#allocation6 + $0x1d0] sm:$0xff]
        %v592 = vld [vmem:[#allocation6 + $0x1d8] sm:$0xff]
        %v593 = vld [vmem:[#allocation6 + $0x1e0] sm:$0xff]
        %v594 = vld [vmem:[#allocation6 + $0x1e8] sm:$0xff]
        %v595 = vld [vmem:[#allocation6 + $0x1f0] sm:$0xff]
        %v596 = vld [vmem:[#allocation6 + $0x1f8] sm:$0xff]
        %v597 = vld [vmem:[#allocation6 + $0x200] sm:$0xff]
        %v598 = vld [vmem:[#allocation6 + $0x208] sm:$0xff]
        %v599 = vld [vmem:[#allocation6 + $0x210] sm:$0xff]
        %v600 = vld [vmem:[#allocation6 + $0x218] sm:$0xff]
        %v601 = vld [vmem:[#allocation6 + $0x220] sm:$0xff]
        %v602 = vld [vmem:[#allocation6 + $0x228] sm:$0xff]
        %v603 = vld [vmem:[#allocation6 + $0x230] sm:$0xff]
        %v604 = vld [vmem:[#allocation6 + $0x238] sm:$0xff]
        %v605 = vld [vmem:[#allocation6 + $0x240] sm:$0xff]
        %v606 = vld [vmem:[#allocation6 + $0x248] sm:$0xff]
        %v607 = vld [vmem:[#allocation6 + $0x250] sm:$0xff]
        %v608 = vld [vmem:[#allocation6 + $0x258] sm:$0xff]
        %v609 = vld [vmem:[#allocation6 + $0x260] sm:$0xff]
        %v610 = vld [vmem:[#allocation6 + $0x268] sm:$0xff]
        %v611 = vld [vmem:[#allocation6 + $0x270] sm:$0xff]
        %v612 = vld [vmem:[#allocation6 + $0x278] sm:$0xff]
        %v613 = vld [vmem:[#allocation6 + $0x280] sm:$0xff]
        %v614 = vld [vmem:[#allocation6 + $0x288] sm:$0xff]
        %v615 = vld [vmem:[#allocation6 + $0x290] sm:$0xff]
        %v616 = vld [vmem:[#allocation6 + $0x298] sm:$0xff]
        %v617 = vld [vmem:[#allocation6 + $0x2a0] sm:$0xff]
        %v618 = vld [vmem:[#allocation6 + $0x2a8] sm:$0xff]
        %v619 = vld [vmem:[#allocation6 + $0x2b0] sm:$0xff]
        %v620 = vld [vmem:[#allocation6 + $0x2b8] sm:$0xff]
        %v621 = vld [vmem:[#allocation6 + $0x2c0] sm:$0xff]
        %v622 = vld [vmem:[#allocation6 + $0x2c8] sm:$0xff]
        %v623 = vld [vmem:[#allocation6 + $0x2d0] sm:$0xff]
        %v624 = vld [vmem:[#allocation6 + $0x2d8] sm:$0xff]
        %v625 = vld [vmem:[#allocation6 + $0x2e0] sm:$0xff]
        %v626 = vld [vmem:[#allocation6 + $0x2e8] sm:$0xff]
        %v627 = vld [vmem:[#allocation6 + $0x2f0] sm:$0xff]
        %v628 = vld [vmem:[#allocation6 + $0x2f8] sm:$0xff]
        %v629 = vld [vmem:[%s2] sm:$0x3f]
        %v631 = vlaneseq
        %v632 = vshrl.u32 %v631, 7
        %v633 = vsub.s32 0, %v632
        %v634 = vrot.slane %v629, %v633
        %v635 = vlaneseq
        %v636 = vshrl.u32 %v635, 7
        %v637 = vsub.s32 1, %v636
        %v638 = vrot.slane %v629, %v637
        %v639 = vlaneseq
        %v640 = vshrl.u32 %v639, 7
        %v641 = vsub.s32 2, %v640
        %v642 = vrot.slane %v629, %v641
        %v643 = vlaneseq
        %v644 = vshrl.u32 %v643, 7
        %v645 = vsub.s32 3, %v644
        %v646 = vrot.slane %v629, %v645
        %v647 = vlaneseq
        %v648 = vshrl.u32 %v647, 7
        %v649 = vsub.s32 4, %v648
        %v650 = vrot.slane %v629, %v649
        %v651 = vlaneseq
        %v652 = vshrl.u32 %v651, 7
        %v653 = vsub.s32 5, %v652
        %v654 = vrot.slane %v629, %v653
        %v757 = vunpack.c.l.b16 %v533
        %v758 = vunpack.c.h.b16 %v533
        %v759 = vunpack.c.l.b16 %v534
        %v760 = vunpack.c.h.b16 %v534
        %v761 = vunpack.c.l.b16 %v535
        %v762 = vunpack.c.h.b16 %v535
        %v763 = vunpack.c.l.b16 %v536
        %v764 = vunpack.c.h.b16 %v536
        %v765 = vunpack.c.l.b16 %v537
        %v766 = vunpack.c.h.b16 %v537
        %v767 = vunpack.c.l.b16 %v538
        %v768 = vunpack.c.h.b16 %v538
        %v769 = vunpack.c.l.b16 %v539
        %v770 = vunpack.c.h.b16 %v539
        %v771 = vunpack.c.l.b16 %v540
        %v772 = vunpack.c.h.b16 %v540
        %v773 = vunpack.c.l.b16 %v541
        %v774 = vunpack.c.h.b16 %v541
        %v775 = vunpack.c.l.b16 %v542
        %v776 = vunpack.c.h.b16 %v542
        %v777 = vunpack.c.l.b16 %v543
        %v778 = vunpack.c.h.b16 %v543
        %v779 = vunpack.c.l.b16 %v544
        %v780 = vunpack.c.h.b16 %v544
        %v781 = vunpack.c.l.b16 %v545
        %v782 = vunpack.c.h.b16 %v545
        %v783 = vunpack.c.l.b16 %v546
        %v784 = vunpack.c.h.b16 %v546
        %v785 = vunpack.c.l.b16 %v547
        %v786 = vunpack.c.h.b16 %v547
        %v787 = vunpack.c.l.b16 %v548
        %v788 = vunpack.c.h.b16 %v548
        %v789 = vunpack.c.l.b16 %v549
        %v790 = vunpack.c.h.b16 %v549
        %v791 = vunpack.c.l.b16 %v550
        %v792 = vunpack.c.h.b16 %v550
        %v793 = vunpack.c.l.b16 %v551
        %v794 = vunpack.c.h.b16 %v551
        %v795 = vunpack.c.l.b16 %v552
        %v796 = vunpack.c.h.b16 %v552
        %v797 = vunpack.c.l.b16 %v553
        %v798 = vunpack.c.h.b16 %v553
        %v799 = vunpack.c.l.b16 %v554
        %v800 = vunpack.c.h.b16 %v554
        %v801 = vunpack.c.l.b16 %v555
        %v802 = vunpack.c.h.b16 %v555
        %v803 = vunpack.c.l.b16 %v556
        %v804 = vunpack.c.h.b16 %v556
        %v805 = vunpack.c.l.b16 %v557
        %v806 = vunpack.c.h.b16 %v557
        %v807 = vunpack.c.l.b16 %v558
        %v808 = vunpack.c.h.b16 %v558
        %v809 = vunpack.c.l.b16 %v559
        %v810 = vunpack.c.h.b16 %v559
        %v811 = vunpack.c.l.b16 %v560
        %v812 = vunpack.c.h.b16 %v560
        %v813 = vunpack.c.l.b16 %v561
        %v814 = vunpack.c.h.b16 %v561
        %v815 = vunpack.c.l.b16 %v562
        %v816 = vunpack.c.h.b16 %v562
        %v817 = vunpack.c.l.b16 %v563
        %v818 = vunpack.c.h.b16 %v563
        %v819 = vunpack.c.l.b16 %v564
        %v820 = vunpack.c.h.b16 %v564
        %v821 = vunpack.c.l.b16 %v565
        %v822 = vunpack.c.h.b16 %v565
        %v823 = vunpack.c.l.b16 %v566
        %v824 = vunpack.c.h.b16 %v566
        %v825 = vunpack.c.l.b16 %v567
        %v826 = vunpack.c.h.b16 %v567
        %v827 = vunpack.c.l.b16 %v568
        %v828 = vunpack.c.h.b16 %v568
        %v829 = vunpack.c.l.b16 %v569
        %v830 = vunpack.c.h.b16 %v569
        %v831 = vunpack.c.l.b16 %v570
        %v832 = vunpack.c.h.b16 %v570
        %v833 = vunpack.c.l.b16 %v571
        %v834 = vunpack.c.h.b16 %v571
        %v835 = vunpack.c.l.b16 %v572
        %v836 = vunpack.c.h.b16 %v572
        %v837 = vunpack.c.l.b16 %v573
        %v838 = vunpack.c.h.b16 %v573
        %v839 = vunpack.c.l.b16 %v574
        %v840 = vunpack.c.h.b16 %v574
        %v841 = vunpack.c.l.b16 %v575
        %v842 = vunpack.c.h.b16 %v575
        %v843 = vunpack.c.l.b16 %v576
        %v844 = vunpack.c.h.b16 %v576
        %v845 = vunpack.c.l.b16 %v577
        %v846 = vunpack.c.h.b16 %v577
        %v847 = vunpack.c.l.b16 %v578
        %v848 = vunpack.c.h.b16 %v578
        %v849 = vunpack.c.l.b16 %v579
        %v850 = vunpack.c.h.b16 %v579
        %v851 = vunpack.c.l.b16 %v580
        %v852 = vunpack.c.h.b16 %v580
        %v853 = vunpack.c.l.b16 %v581
        %v854 = vunpack.c.h.b16 %v581
        %v855 = vunpack.c.l.b16 %v582
        %v856 = vunpack.c.h.b16 %v582
        %v857 = vunpack.c.l.b16 %v583
        %v858 = vunpack.c.h.b16 %v583
        %v859 = vunpack.c.l.b16 %v584
        %v860 = vunpack.c.h.b16 %v584
        %v861 = vunpack.c.l.b16 %v585
        %v862 = vunpack.c.h.b16 %v585
        %v863 = vunpack.c.l.b16 %v586
        %v864 = vunpack.c.h.b16 %v586
        %v865 = vunpack.c.l.b16 %v587
        %v866 = vunpack.c.h.b16 %v587
        %v867 = vunpack.c.l.b16 %v588
        %v868 = vunpack.c.h.b16 %v588
        %v869 = vunpack.c.l.b16 %v589
        %v870 = vunpack.c.h.b16 %v589
        %v871 = vunpack.c.l.b16 %v590
        %v872 = vunpack.c.h.b16 %v590
        %v873 = vunpack.c.l.b16 %v591
        %v874 = vunpack.c.h.b16 %v591
        %v875 = vunpack.c.l.b16 %v592
        %v876 = vunpack.c.h.b16 %v592
        %v877 = vunpack.c.l.b16 %v593
        %v878 = vunpack.c.h.b16 %v593
        %v879 = vunpack.c.l.b16 %v594
        %v880 = vunpack.c.h.b16 %v594
        %v881 = vunpack.c.l.b16 %v595
        %v882 = vunpack.c.h.b16 %v595
        %v883 = vunpack.c.l.b16 %v596
        %v884 = vunpack.c.h.b16 %v596
        %v885 = vunpack.c.l.b16 %v597
        %v886 = vunpack.c.h.b16 %v597
        %v887 = vunpack.c.l.b16 %v598
        %v888 = vunpack.c.h.b16 %v598
        %v889 = vunpack.c.l.b16 %v599
        %v890 = vunpack.c.h.b16 %v599
        %v891 = vunpack.c.l.b16 %v600
        %v892 = vunpack.c.h.b16 %v600
        %v893 = vunpack.c.l.b16 %v601
        %v894 = vunpack.c.h.b16 %v601
        %v895 = vunpack.c.l.b16 %v602
        %v896 = vunpack.c.h.b16 %v602
        %v897 = vunpack.c.l.b16 %v603
        %v898 = vunpack.c.h.b16 %v603
        %v899 = vunpack.c.l.b16 %v604
        %v900 = vunpack.c.h.b16 %v604
        %v901 = vunpack.c.l.b16 %v605
        %v902 = vunpack.c.h.b16 %v605
        %v903 = vunpack.c.l.b16 %v606
        %v904 = vunpack.c.h.b16 %v606
        %v905 = vunpack.c.l.b16 %v607
        %v906 = vunpack.c.h.b16 %v607
        %v907 = vunpack.c.l.b16 %v608
        %v908 = vunpack.c.h.b16 %v608
        %v909 = vunpack.c.l.b16 %v609
        %v910 = vunpack.c.h.b16 %v609
        %v911 = vunpack.c.l.b16 %v610
        %v912 = vunpack.c.h.b16 %v610
        %v913 = vunpack.c.l.b16 %v611
        %v914 = vunpack.c.h.b16 %v611
        %v915 = vunpack.c.l.b16 %v612
        %v916 = vunpack.c.h.b16 %v612
        %v917 = vunpack.c.l.b16 %v613
        %v918 = vunpack.c.h.b16 %v613
        %v919 = vunpack.c.l.b16 %v614
        %v920 = vunpack.c.h.b16 %v614
        %v921 = vunpack.c.l.b16 %v615
        %v922 = vunpack.c.h.b16 %v615
        %v923 = vunpack.c.l.b16 %v616
        %v924 = vunpack.c.h.b16 %v616
        %v925 = vunpack.c.l.b16 %v617
        %v926 = vunpack.c.h.b16 %v617
        %v927 = vunpack.c.l.b16 %v618
        %v928 = vunpack.c.h.b16 %v618
        %v929 = vunpack.c.l.b16 %v619
        %v930 = vunpack.c.h.b16 %v619
        %v931 = vunpack.c.l.b16 %v620
        %v932 = vunpack.c.h.b16 %v620
        %v933 = vunpack.c.l.b16 %v621
        %v934 = vunpack.c.h.b16 %v621
        %v935 = vunpack.c.l.b16 %v622
        %v936 = vunpack.c.h.b16 %v622
        %v937 = vunpack.c.l.b16 %v623
        %v938 = vunpack.c.h.b16 %v623
        %v939 = vunpack.c.l.b16 %v624
        %v940 = vunpack.c.h.b16 %v624
        %v941 = vunpack.c.l.b16 %v625
        %v942 = vunpack.c.h.b16 %v625
        %v943 = vunpack.c.l.b16 %v626
        %v944 = vunpack.c.h.b16 %v626
        %v945 = vunpack.c.l.b16 %v627
        %v946 = vunpack.c.h.b16 %v627
        %v947 = vunpack.c.l.b16 %v628
        %v948 = vunpack.c.h.b16 %v628
        %v949 = vpack.c.b16 %v763, %v757
        %v950 = vpack.c.b16 %v764, %v758
        %v951 = vpack.c.b16 %v765, %v759
        %v952 = vpack.c.b16 %v766, %v760
        %v953 = vpack.c.b16 %v767, %v761
        %v954 = vpack.c.b16 %v768, %v762
        %v955 = vpack.c.b16 %v775, %v769
        %v956 = vpack.c.b16 %v776, %v770
        %v957 = vpack.c.b16 %v777, %v771
        %v958 = vpack.c.b16 %v778, %v772
        %v959 = vpack.c.b16 %v779, %v773
        %v960 = vpack.c.b16 %v780, %v774
        %v961 = vpack.c.b16 %v787, %v781
        %v962 = vpack.c.b16 %v788, %v782
        %v963 = vpack.c.b16 %v789, %v783
        %v964 = vpack.c.b16 %v790, %v784
        %v965 = vpack.c.b16 %v791, %v785
        %v966 = vpack.c.b16 %v792, %v786
        %v967 = vpack.c.b16 %v799, %v793
        %v968 = vpack.c.b16 %v800, %v794
        %v969 = vpack.c.b16 %v801, %v795
        %v970 = vpack.c.b16 %v802, %v796
        %v971 = vpack.c.b16 %v803, %v797
        %v972 = vpack.c.b16 %v804, %v798
        %v973 = vpack.c.b16 %v811, %v805
        %v974 = vpack.c.b16 %v812, %v806
        %v975 = vpack.c.b16 %v813, %v807
        %v976 = vpack.c.b16 %v814, %v808
        %v977 = vpack.c.b16 %v815, %v809
        %v978 = vpack.c.b16 %v816, %v810
        %v979 = vpack.c.b16 %v823, %v817
        %v980 = vpack.c.b16 %v824, %v818
        %v981 = vpack.c.b16 %v825, %v819
        %v982 = vpack.c.b16 %v826, %v820
        %v983 = vpack.c.b16 %v827, %v821
        %v984 = vpack.c.b16 %v828, %v822
        %v985 = vpack.c.b16 %v835, %v829
        %v986 = vpack.c.b16 %v836, %v830
        %v987 = vpack.c.b16 %v837, %v831
        %v988 = vpack.c.b16 %v838, %v832
        %v989 = vpack.c.b16 %v839, %v833
        %v990 = vpack.c.b16 %v840, %v834
        %v991 = vpack.c.b16 %v847, %v841
        %v992 = vpack.c.b16 %v848, %v842
        %v993 = vpack.c.b16 %v849, %v843
        %v994 = vpack.c.b16 %v850, %v844
        %v995 = vpack.c.b16 %v851, %v845
        %v996 = vpack.c.b16 %v852, %v846
        %v997 = vpack.c.b16 %v859, %v853
        %v998 = vpack.c.b16 %v860, %v854
        %v999 = vpack.c.b16 %v861, %v855
        %v1000 = vpack.c.b16 %v862, %v856
        %v1001 = vpack.c.b16 %v863, %v857
        %v1002 = vpack.c.b16 %v864, %v858
        %v1003 = vpack.c.b16 %v871, %v865
        %v1004 = vpack.c.b16 %v872, %v866
        %v1005 = vpack.c.b16 %v873, %v867
        %v1006 = vpack.c.b16 %v874, %v868
        %v1007 = vpack.c.b16 %v875, %v869
        %v1008 = vpack.c.b16 %v876, %v870
        %v1009 = vpack.c.b16 %v883, %v877
        %v1010 = vpack.c.b16 %v884, %v878
        %v1011 = vpack.c.b16 %v885, %v879
        %v1012 = vpack.c.b16 %v886, %v880
        %v1013 = vpack.c.b16 %v887, %v881
        %v1014 = vpack.c.b16 %v888, %v882
        %v1015 = vpack.c.b16 %v895, %v889
        %v1016 = vpack.c.b16 %v896, %v890
        %v1017 = vpack.c.b16 %v897, %v891
        %v1018 = vpack.c.b16 %v898, %v892
        %v1019 = vpack.c.b16 %v899, %v893
        %v1020 = vpack.c.b16 %v900, %v894
        %v1021 = vpack.c.b16 %v907, %v901
        %v1022 = vpack.c.b16 %v908, %v902
        %v1023 = vpack.c.b16 %v909, %v903
        %v1024 = vpack.c.b16 %v910, %v904
        %v1025 = vpack.c.b16 %v911, %v905
        %v1026 = vpack.c.b16 %v912, %v906
        %v1027 = vpack.c.b16 %v919, %v913
        %v1028 = vpack.c.b16 %v920, %v914
        %v1029 = vpack.c.b16 %v921, %v915
        %v1030 = vpack.c.b16 %v922, %v916
        %v1031 = vpack.c.b16 %v923, %v917
        %v1032 = vpack.c.b16 %v924, %v918
        %v1033 = vpack.c.b16 %v931, %v925
        %v1034 = vpack.c.b16 %v932, %v926
        %v1035 = vpack.c.b16 %v933, %v927
        %v1036 = vpack.c.b16 %v934, %v928
        %v1037 = vpack.c.b16 %v935, %v929
        %v1038 = vpack.c.b16 %v936, %v930
        %v1039 = vpack.c.b16 %v943, %v937
        %v1040 = vpack.c.b16 %v944, %v938
        %v1041 = vpack.c.b16 %v945, %v939
        %v1042 = vpack.c.b16 %v946, %v940
        %v1043 = vpack.c.b16 %v947, %v941
        %v1044 = vpack.c.b16 %v948, %v942
        %1141 = vmatprep.subr.bf16.mxu0 %v950
        %1142 = vmatpush1.bf16.msra.mxu0 %v949
        %1143 = vmatprep.subr.bf16.mxu0 %v956
        %1144 = vmatpush1.bf16.msra.mxu0 %v955
        %1145 = vmatprep.subr.bf16.mxu0 %v962
        %1146 = vmatpush1.bf16.msra.mxu0 %v961
        %1147 = vmatprep.subr.bf16.mxu0 %v968
        %1148 = vmatpush1.bf16.msra.mxu0 %v967
        %1149 = vmatprep.subr.bf16.mxu0 %v974
        %1150 = vmatpush1.bf16.msra.mxu0 %v973
        %1151 = vmatprep.subr.bf16.mxu0 %v980
        %1152 = vmatpush1.bf16.msra.mxu0 %v979
        %1153 = vmatprep.subr.bf16.mxu0 %v986
        %1154 = vmatpush1.bf16.msra.mxu0 %v985
        %1155 = vmatprep.subr.bf16.mxu0 %v992
        %1156 = vmatpush1.bf16.msra.mxu0 %v991
        %1157 = vmatprep.subr.bf16.mxu0 %v998
        %1158 = vmatpush1.bf16.msra.mxu0 %v997
        %1159 = vmatprep.subr.bf16.mxu0 %v1004
        %1160 = vmatpush1.bf16.msra.mxu0 %v1003
        %1161 = vmatprep.subr.bf16.mxu0 %v1010
        %1162 = vmatpush1.bf16.msra.mxu0 %v1009
        %1163 = vmatprep.subr.bf16.mxu0 %v1016
        %1164 = vmatpush1.bf16.msra.mxu0 %v1015
        %1165 = vmatprep.subr.bf16.mxu0 %v1022
        %1166 = vmatpush1.bf16.msra.mxu0 %v1021
        %1167 = vmatprep.subr.bf16.mxu0 %v1028
        %1168 = vmatpush1.bf16.msra.mxu0 %v1027
        %1169 = vmatprep.subr.bf16.mxu0 %v1034
        %1170 = vmatpush1.bf16.msra.mxu0 %v1033
        %1171 = vmatprep.subr.bf16.mxu0 %v1040
        %1172 = vmatpush1.bf16.msra.mxu0 %v1039
        %1173 = vmatprep.mubr.bf16.mxu0 %v530
        %1174 = vmatmul.mubr.bf16.gmra.mrb[0].mxu0 %v529
        %v1175 = vpop.f32.mrb[0].mxu0
        %v1176 = vadd.f32 %v634, %v1175
        %v1177 = vpop.f32.mrb[0].mxu0
        %v1178 = vadd.f32 %v638, %v1177
        %v1179 = vpop.f32.mrb[0].mxu0
        %v1180 = vadd.f32 %v634, %v1179
        %v1181 = vpop.f32.mrb[0].mxu0
        %v1182 = vadd.f32 %v638, %v1181
        %1183 = vmatprep.mubr.bf16.mxu0 %v532
        %1184 = vmatmul.mubr.bf16.gmra.mrb[0].mxu0 %v531
        %v1185 = vpop.f32.mrb[0].mxu0
        %v1186 = vadd.f32 %v634, %v1185
        %v1187 = vpop.f32.mrb[0].mxu0
        %v1188 = vadd.f32 %v638, %v1187
        %v1189 = vpop.f32.mrb[0].mxu0
        %v1190 = vadd.f32 %v634, %v1189
        %v1191 = vpop.f32.mrb[0].mxu0
        %v1192 = vadd.f32 %v638, %v1191
        %1193 = vdwg.mxu0
        %1194 = vmatprep.subr.bf16.mxu0 %v952
        %1195 = vmatpush1.bf16.msra.mxu0 %v951
        %1196 = vmatprep.subr.bf16.mxu0 %v958
        %1197 = vmatpush1.bf16.msra.mxu0 %v957
        %1198 = vmatprep.subr.bf16.mxu0 %v964
        %1199 = vmatpush1.bf16.msra.mxu0 %v963
        %1200 = vmatprep.subr.bf16.mxu0 %v970
        %1201 = vmatpush1.bf16.msra.mxu0 %v969
        %1202 = vmatprep.subr.bf16.mxu0 %v976
        %1203 = vmatpush1.bf16.msra.mxu0 %v975
        %1204 = vmatprep.subr.bf16.mxu0 %v982
        %1205 = vmatpush1.bf16.msra.mxu0 %v981
        %1206 = vmatprep.subr.bf16.mxu0 %v988
        %1207 = vmatpush1.bf16.msra.mxu0 %v987
        %1208 = vmatprep.subr.bf16.mxu0 %v994
        %1209 = vmatpush1.bf16.msra.mxu0 %v993
        %1210 = vmatprep.subr.bf16.mxu0 %v1000
        %1211 = vmatpush1.bf16.msra.mxu0 %v999
        %1212 = vmatprep.subr.bf16.mxu0 %v1006
        %1213 = vmatpush1.bf16.msra.mxu0 %v1005
        %1214 = vmatprep.subr.bf16.mxu0 %v1012
        %1215 = vmatpush1.bf16.msra.mxu0 %v1011
        %1216 = vmatprep.subr.bf16.mxu0 %v1018
        %1217 = vmatpush1.bf16.msra.mxu0 %v1017
        %1218 = vmatprep.subr.bf16.mxu0 %v1024
        %1219 = vmatpush1.bf16.msra.mxu0 %v1023
        %1220 = vmatprep.subr.bf16.mxu0 %v1030
        %1221 = vmatpush1.bf16.msra.mxu0 %v1029
        %1222 = vmatprep.subr.bf16.mxu0 %v1036
        %1223 = vmatpush1.bf16.msra.mxu0 %v1035
        %1224 = vmatprep.subr.bf16.mxu0 %v1042
        %1225 = vmatpush1.bf16.msra.mxu0 %v1041
        %1226 = vmatprep.mubr.bf16.mxu0 %v530
        %1227 = vmatmul.mubr.bf16.gmra.mrb[0].mxu0 %v529
        %v1228 = vpop.f32.mrb[0].mxu0
        %v1229 = vadd.f32 %v642, %v1228
        %v1230 = vpop.f32.mrb[0].mxu0
        %v1231 = vadd.f32 %v646, %v1230
        %v1232 = vpop.f32.mrb[0].mxu0
        %v1233 = vadd.f32 %v642, %v1232
        %v1234 = vpop.f32.mrb[0].mxu0
        %v1235 = vadd.f32 %v646, %v1234
        %1236 = vmatprep.mubr.bf16.mxu0 %v532
        %1237 = vmatmul.mubr.bf16.gmra.mrb[0].mxu0 %v531
        %v1238 = vpop.f32.mrb[0].mxu0
        %v1239 = vadd.f32 %v642, %v1238
        %v1240 = vpop.f32.mrb[0].mxu0
        %v1241 = vadd.f32 %v646, %v1240
        %v1242 = vpop.f32.mrb[0].mxu0
        %v1243 = vadd.f32 %v642, %v1242
        %v1244 = vpop.f32.mrb[0].mxu0
        %v1245 = vadd.f32 %v646, %v1244
        %1246 = vdwg.mxu0
        %1247 = vmatprep.subr.bf16.mxu0 %v954
        %1248 = vmatpush1.bf16.msra.mxu0 %v953
        %1249 = vmatprep.subr.bf16.mxu0 %v960
        %1250 = vmatpush1.bf16.msra.mxu0 %v959
        %1251 = vmatprep.subr.bf16.mxu0 %v966
        %1252 = vmatpush1.bf16.msra.mxu0 %v965
        %1253 = vmatprep.subr.bf16.mxu0 %v972
        %1254 = vmatpush1.bf16.msra.mxu0 %v971
        %1255 = vmatprep.subr.bf16.mxu0 %v978
        %1256 = vmatpush1.bf16.msra.mxu0 %v977
        %1257 = vmatprep.subr.bf16.mxu0 %v984
        %1258 = vmatpush1.bf16.msra.mxu0 %v983
        %1259 = vmatprep.subr.bf16.mxu0 %v990
        %1260 = vmatpush1.bf16.msra.mxu0 %v989
        %1261 = vmatprep.subr.bf16.mxu0 %v996
        %1262 = vmatpush1.bf16.msra.mxu0 %v995
        %1263 = vmatprep.subr.bf16.mxu0 %v1002
        %1264 = vmatpush1.bf16.msra.mxu0 %v1001
        %1265 = vmatprep.subr.bf16.mxu0 %v1008
        %1266 = vmatpush1.bf16.msra.mxu0 %v1007
        %1267 = vmatprep.subr.bf16.mxu0 %v1014
        %1268 = vmatpush1.bf16.msra.mxu0 %v1013
        %1269 = vmatprep.subr.bf16.mxu0 %v1020
        %1270 = vmatpush1.bf16.msra.mxu0 %v1019
        %1271 = vmatprep.subr.bf16.mxu0 %v1026
        %1272 = vmatpush1.bf16.msra.mxu0 %v1025
        %1273 = vmatprep.subr.bf16.mxu0 %v1032
        %1274 = vmatpush1.bf16.msra.mxu0 %v1031
        %1275 = vmatprep.subr.bf16.mxu0 %v1038
        %1276 = vmatpush1.bf16.msra.mxu0 %v1037
        %1277 = vmatprep.subr.bf16.mxu0 %v1044
        %1278 = vmatpush1.bf16.msra.mxu0 %v1043
        %1279 = vmatprep.mubr.bf16.mxu0 %v530
        %1280 = vmatmul.mubr.bf16.gmra.mrb[0].mxu0 %v529
        %v1281 = vpop.f32.mrb[0].mxu0
        %v1282 = vadd.f32 %v650, %v1281
        %v1283 = vpop.f32.mrb[0].mxu0
        %v1284 = vadd.f32 %v654, %v1283
        %v1285 = vpop.f32.mrb[0].mxu0
        %v1286 = vadd.f32 %v650, %v1285
        %v1287 = vpop.f32.mrb[0].mxu0
        %v1288 = vadd.f32 %v654, %v1287
        %1289 = vmatprep.mubr.bf16.mxu0 %v532
        %1290 = vmatmul.mubr.bf16.gmra.mrb[0].mxu0 %v531
        %v1291 = vpop.f32.mrb[0].mxu0
        %v1292 = vadd.f32 %v650, %v1291
        %v1293 = vpop.f32.mrb[0].mxu0
        %v1294 = vadd.f32 %v654, %v1293
        %v1295 = vpop.f32.mrb[0].mxu0
        %v1296 = vadd.f32 %v650, %v1295
        %v1297 = vpop.f32.mrb[0].mxu0
        %v1298 = vadd.f32 %v654, %v1297
        %1299 = vdwg.mxu0
        %v1300 = vpack.c.bf16 %v1180, %v1176
        %v1301 = vpack.c.bf16 %v1182, %v1178
        %v1302 = vpack.c.bf16 %v1190, %v1186
        %v1303 = vpack.c.bf16 %v1192, %v1188
        %v1304 = vpack.c.bf16 %v1233, %v1229
        %v1305 = vpack.c.bf16 %v1235, %v1231
        %v1306 = vpack.c.bf16 %v1243, %v1239
        %v1307 = vpack.c.bf16 %v1245, %v1241
        %v1308 = vpack.c.bf16 %v1286, %v1282
        %v1309 = vpack.c.bf16 %v1288, %v1284
        %v1310 = vpack.c.bf16 %v1296, %v1292
        %v1311 = vpack.c.bf16 %v1298, %v1294
        %1312 = vmatprep.subr.bf16.mxu0 0
        %1313 = vmatpush1.bf16.xpose.msra.mxu0 %v1304
        %1314 = vmatprep.subr.bf16.mxu0 0
        %1315 = vmatpush1.bf16.xpose.msra.mxu0 0
        %1316 = vmatprep.subr.bf16.mxu0 0
        %1317 = vmatpush1.bf16.xpose.msra.mxu0 0
        %1318 = vmatprep.subr.bf16.mxu0 0
        %1319 = vmatpush1.bf16.xpose.msra.mxu0 0
        %1320 = vmatprep.subr.bf16.mxu0 0
        %1321 = vmatpush1.bf16.xpose.msra.mxu0 0
        %1322 = vmatprep.subr.bf16.mxu0 0
        %1323 = vmatpush1.bf16.xpose.msra.mxu0 0
        %1324 = vmatprep.subr.bf16.mxu0 0
        %1325 = vmatpush1.bf16.xpose.msra.mxu0 0
        %1326 = vmatprep.subr.bf16.mxu0 0
        %1327 = vmatpush1.bf16.xpose.msra.mxu0 0
        %1328 = vmatprep.subr.bf16.mxu0 0
        %1329 = vmatpush1.bf16.xpose.msra.mxu0 0
        %1330 = vmatprep.subr.bf16.mxu0 0
        %1331 = vmatpush1.bf16.xpose.msra.mxu0 0
        %1332 = vmatprep.subr.bf16.mxu0 0
        %1333 = vmatpush1.bf16.xpose.msra.mxu0 0
        %1334 = vmatprep.subr.bf16.mxu0 0
        %1335 = vmatpush1.bf16.xpose.msra.mxu0 0
        %1336 = vmatprep.subr.bf16.mxu0 0
        %1337 = vmatpush1.bf16.xpose.msra.mxu0 0
        %1338 = vmatprep.subr.bf16.mxu0 0
        %1339 = vmatpush1.bf16.xpose.msra.mxu0 0
        %1340 = vmatprep.subr.bf16.mxu0 0
        %1341 = vmatpush1.bf16.xpose.msra.mxu0 0
        %1342 = vmatprep.subr.bf16.mxu0 0
        %1343 = vmatpush1.bf16.xpose.msra.mxu0 0
        %1344 = vmatprep.mubr.bf16.mxu0 0
        %1345 = vmatmul.mubr.bf16.gmra.mrb[0].mxu0 %v1300
        %v1346 = vpop.f32.mrb[0].mxu0
        %v1347 = vadd.f32 0.0, %v1346
        %v1348 = vpop.f32.mrb[0].mxu0
        %v1349 = vpop.f32.mrb[0].mxu0
        %v1350 = vadd.f32 0.0, %v1349
        %v1351 = vpop.f32.mrb[0].mxu0
        %1352 = vdwg.mxu0
        %1353 = vmatprep.subr.bf16.mxu0 0
        %1354 = vmatpush1.bf16.xpose.msra.mxu0 %v1306
        %1355 = vmatprep.subr.bf16.mxu0 0
        %1356 = vmatpush1.bf16.xpose.msra.mxu0 0
        %1357 = vmatprep.subr.bf16.mxu0 0
        %1358 = vmatpush1.bf16.xpose.msra.mxu0 0
        %1359 = vmatprep.subr.bf16.mxu0 0
        %1360 = vmatpush1.bf16.xpose.msra.mxu0 0
        %1361 = vmatprep.subr.bf16.mxu0 0
        %1362 = vmatpush1.bf16.xpose.msra.mxu0 0
        %1363 = vmatprep.subr.bf16.mxu0 0
        %1364 = vmatpush1.bf16.xpose.msra.mxu0 0
        %1365 = vmatprep.subr.bf16.mxu0 0
        %1366 = vmatpush1.bf16.xpose.msra.mxu0 0
        %1367 = vmatprep.subr.bf16.mxu0 0
        %1368 = vmatpush1.bf16.xpose.msra.mxu0 0
        %1369 = vmatprep.subr.bf16.mxu0 0
        %1370 = vmatpush1.bf16.xpose.msra.mxu0 0
        %1371 = vmatprep.subr.bf16.mxu0 0
        %1372 = vmatpush1.bf16.xpose.msra.mxu0 0
        %1373 = vmatprep.subr.bf16.mxu0 0
        %1374 = vmatpush1.bf16.xpose.msra.mxu0 0
        %1375 = vmatprep.subr.bf16.mxu0 0
        %1376 = vmatpush1.bf16.xpose.msra.mxu0 0
        %1377 = vmatprep.subr.bf16.mxu0 0
        %1378 = vmatpush1.bf16.xpose.msra.mxu0 0
        %1379 = vmatprep.subr.bf16.mxu0 0
        %1380 = vmatpush1.bf16.xpose.msra.mxu0 0
        %1381 = vmatprep.subr.bf16.mxu0 0
        %1382 = vmatpush1.bf16.xpose.msra.mxu0 0
        %1383 = vmatprep.subr.bf16.mxu0 0
        %1384 = vmatpush1.bf16.xpose.msra.mxu0 0
        %1385 = vmatprep.mubr.bf16.mxu0 0
        %1386 = vmatmul.mubr.bf16.gmra.mrb[0].mxu0 %v1302
        %v1387 = vpop.f32.mrb[0].mxu0
        %v1388 = vadd.f32 0.0, %v1387
        %v1389 = vpop.f32.mrb[0].mxu0
        %v1390 = vpop.f32.mrb[0].mxu0
        %v1391 = vadd.f32 0.0, %v1390
        %v1392 = vpop.f32.mrb[0].mxu0
        %1393 = vdwg.mxu0
        %v1394 = vmul.f32 %v1347, 0.088388346
        %v1395 = vmul.f32 %v1350, 0.088388346
        %v1396 = vmul.f32 %v1388, 0.088388346
        %v1397 = vmul.f32 %v1391, 0.088388346
        %vm1398 = vcmask 130048
        %v1399 = vsel %vm1398, %v1394, -inf
        %1400 = vmax.xlane.f32.xlu0 %v1399
        %v1401 = vpop.xlane.xlu0 %1400
        %v1402 = vsel %vm1398, %v1395, -inf
        %1403 = vmax.xlane.f32.xlu0 %v1402
        %v1404 = vpop.xlane.xlu0 %1403
        %v1405 = vsel %vm1398, %v1396, -inf
        %1406 = vmax.xlane.f32.xlu0 %v1405
        %v1407 = vpop.xlane.xlu0 %1406
        %v1408 = vsel %vm1398, %v1397, -inf
        %1409 = vmax.xlane.f32.xlu0 %v1408
        %v1410 = vpop.xlane.xlu0 %1409
        %v1411 = vsub.f32 %v1394, %v1401
        %v1412 = vsub.f32 %v1395, %v1404
        %v1413 = vsub.f32 %v1396, %v1407
        %v1414 = vsub.f32 %v1397, %v1410
        %v1415 = vmul.f32 %v1411, 1.442695
        %v1416 = vpow.pop %v1415
        %v1417 = vmul.f32 %v1412, 1.442695
        %v1418 = vpow.pop %v1417
        %v1419 = vmul.f32 %v1413, 1.442695
        %v1420 = vpow.pop %v1419
        %v1421 = vmul.f32 %v1414, 1.442695
        %v1422 = vpow.pop %v1421
        %v1423 = vsel %vm1398, %v1416, 0.0
        %1424 = vadd.xlane.f32.xlu0 %v1423
        %v1425 = vpop.xlane.xlu0 %1424
        %v1426 = vsel %vm1398, %v1418, 0.0
        %1427 = vadd.xlane.f32.xlu0 %v1426
        %v1428 = vpop.xlane.xlu0 %1427
        %v1429 = vsel %vm1398, %v1420, 0.0
        %1430 = vadd.xlane.f32.xlu0 %v1429
        %v1431 = vpop.xlane.xlu0 %1430
        %v1432 = vsel %vm1398, %v1422, 0.0
        %1433 = vadd.xlane.f32.xlu0 %v1432
        %v1434 = vpop.xlane.xlu0 %1433
        %v1435 = vrcp.pop %v1425
        %v1436 = vrcp.pop %v1428
        %v1437 = vrcp.pop %v1431
        %v1438 = vrcp.pop %v1434
        %v1439 = vmul.f32 %v1416, %v1435
        %v1440 = vmul.f32 %v1418, %v1436
        %v1441 = vmul.f32 %v1420, %v1437
        %v1442 = vmul.f32 %v1422, %v1438
        %v1443 = vpack.c.bf16 %v1440, %v1439
        %v1444 = vpack.c.bf16 %v1442, %v1441
        %v1446 = vsel %vm1398, %v1443, 0
        %1448 = vmatprep.subr.bf16.mxu0 0
        %1449 = vmatpush1.bf16.msra.mxu0 %v1308
        %1450 = vmatprep.subr.bf16.mxu0 0
        %1451 = vmatpush1.bf16.msra.mxu0 0
        %1452 = vmatprep.subr.bf16.mxu0 0
        %1453 = vmatpush1.bf16.msra.mxu0 0
        %1454 = vmatprep.subr.bf16.mxu0 0
        %1455 = vmatpush1.bf16.msra.mxu0 0
        %1456 = vmatprep.subr.bf16.mxu0 0
        %1457 = vmatpush1.bf16.msra.mxu0 0
        %1458 = vmatprep.subr.bf16.mxu0 0
        %1459 = vmatpush1.bf16.msra.mxu0 0
        %1460 = vmatprep.subr.bf16.mxu0 0
        %1461 = vmatpush1.bf16.msra.mxu0 0
        %1462 = vmatprep.subr.bf16.mxu0 0
        %1463 = vmatpush1.bf16.msra.mxu0 0
        %1464 = vmatprep.subr.bf16.mxu0 0
        %1465 = vmatpush1.bf16.msra.mxu0 0
        %1466 = vmatprep.subr.bf16.mxu0 0
        %1467 = vmatpush1.bf16.msra.mxu0 0
        %1468 = vmatprep.subr.bf16.mxu0 0
        %1469 = vmatpush1.bf16.msra.mxu0 0
        %1470 = vmatprep.subr.bf16.mxu0 0
        %1471 = vmatpush1.bf16.msra.mxu0 0
        %1472 = vmatprep.subr.bf16.mxu0 0
        %1473 = vmatpush1.bf16.msra.mxu0 0
        %1474 = vmatprep.subr.bf16.mxu0 0
        %1475 = vmatpush1.bf16.msra.mxu0 0
        %1476 = vmatprep.subr.bf16.mxu0 0
        %1477 = vmatpush1.bf16.msra.mxu0 0
        %1478 = vmatprep.subr.bf16.mxu0 0
        %1479 = vmatpush1.bf16.msra.mxu0 0
        %1480 = vmatprep.mubr.bf16.mxu0 0
        %1481 = vmatmul.mubr.bf16.gmra.mrb[0].mxu0 %v1446
        %v1482 = vpop.f32.mrb[0].mxu0
        %v1483 = vadd.f32 0.0, %v1482
        %v1484 = vpop.f32.mrb[0].mxu0
        %v1485 = vpop.f32.mrb[0].mxu0
        %v1486 = vadd.f32 0.0, %v1485
        %v1487 = vpop.f32.mrb[0].mxu0
        %1488 = vdwg.mxu0
        %v1490 = vsel %vm1398, %v1444, 0
        %1492 = vmatprep.subr.bf16.mxu0 0
        %1493 = vmatpush1.bf16.msra.mxu0 %v1310
        %1494 = vmatprep.subr.bf16.mxu0 0
        %1495 = vmatpush1.bf16.msra.mxu0 0
        %1496 = vmatprep.subr.bf16.mxu0 0
        %1497 = vmatpush1.bf16.msra.mxu0 0
        %1498 = vmatprep.subr.bf16.mxu0 0
        %1499 = vmatpush1.bf16.msra.mxu0 0
        %1500 = vmatprep.subr.bf16.mxu0 0
        %1501 = vmatpush1.bf16.msra.mxu0 0
        %1502 = vmatprep.subr.bf16.mxu0 0
        %1503 = vmatpush1.bf16.msra.mxu0 0
        %1504 = vmatprep.subr.bf16.mxu0 0
        %1505 = vmatpush1.bf16.msra.mxu0 0
        %1506 = vmatprep.subr.bf16.mxu0 0
        %1507 = vmatpush1.bf16.msra.mxu0 0
        %1508 = vmatprep.subr.bf16.mxu0 0
        %1509 = vmatpush1.bf16.msra.mxu0 0
        %1510 = vmatprep.subr.bf16.mxu0 0
        %1511 = vmatpush1.bf16.msra.mxu0 0
        %1512 = vmatprep.subr.bf16.mxu0 0
        %1513 = vmatpush1.bf16.msra.mxu0 0
        %1514 = vmatprep.subr.bf16.mxu0 0
        %1515 = vmatpush1.bf16.msra.mxu0 0
        %1516 = vmatprep.subr.bf16.mxu0 0
        %1517 = vmatpush1.bf16.msra.mxu0 0
        %1518 = vmatprep.subr.bf16.mxu0 0
        %1519 = vmatpush1.bf16.msra.mxu0 0
        %1520 = vmatprep.subr.bf16.mxu0 0
        %1521 = vmatpush1.bf16.msra.mxu0 0
        %1522 = vmatprep.subr.bf16.mxu0 0
        %1523 = vmatpush1.bf16.msra.mxu0 0
        %1524 = vmatprep.mubr.bf16.mxu0 0
        %1525 = vmatmul.mubr.bf16.gmra.mrb[0].mxu0 %v1490
        %v1526 = vpop.f32.mrb[0].mxu0
        %v1527 = vadd.f32 0.0, %v1526
        %v1528 = vpop.f32.mrb[0].mxu0
        %v1529 = vpop.f32.mrb[0].mxu0
        %v1530 = vadd.f32 0.0, %v1529
        %v1531 = vpop.f32.mrb[0].mxu0
        %1532 = vdwg.mxu0
        %v1533 = vpack.c.bf16 %v1486, %v1483
        %v1534 = vpack.c.bf16 %v1530, %v1527
        %1535 = vst [vmem:[#allocation2] sm:$0xff] %v1533
        %1536 = vst [vmem:[#allocation2 + $0x10] sm:$0xff] %v1534
        %1537 = vmatprep.subr.bf16.mxu0 0
        %1538 = vmatpush1.bf16.xpose.msra.mxu0 %v1305
        %1539 = vmatprep.subr.bf16.mxu0 0
        %1540 = vmatpush1.bf16.xpose.msra.mxu0 0
        %1541 = vmatprep.subr.bf16.mxu0 0
        %1542 = vmatpush1.bf16.xpose.msra.mxu0 0
        %1543 = vmatprep.subr.bf16.mxu0 0
        %1544 = vmatpush1.bf16.xpose.msra.mxu0 0
        %1545 = vmatprep.subr.bf16.mxu0 0
        %1546 = vmatpush1.bf16.xpose.msra.mxu0 0
        %1547 = vmatprep.subr.bf16.mxu0 0
        %1548 = vmatpush1.bf16.xpose.msra.mxu0 0
        %1549 = vmatprep.subr.bf16.mxu0 0
        %1550 = vmatpush1.bf16.xpose.msra.mxu0 0
        %1551 = vmatprep.subr.bf16.mxu0 0
        %1552 = vmatpush1.bf16.xpose.msra.mxu0 0
        %1553 = vmatprep.subr.bf16.mxu0 0
        %1554 = vmatpush1.bf16.xpose.msra.mxu0 0
        %1555 = vmatprep.subr.bf16.mxu0 0
        %1556 = vmatpush1.bf16.xpose.msra.mxu0 0
        %1557 = vmatprep.subr.bf16.mxu0 0
        %1558 = vmatpush1.bf16.xpose.msra.mxu0 0
        %1559 = vmatprep.subr.bf16.mxu0 0
        %1560 = vmatpush1.bf16.xpose.msra.mxu0 0
        %1561 = vmatprep.subr.bf16.mxu0 0
        %1562 = vmatpush1.bf16.xpose.msra.mxu0 0
        %1563 = vmatprep.subr.bf16.mxu0 0
        %1564 = vmatpush1.bf16.xpose.msra.mxu0 0
        %1565 = vmatprep.subr.bf16.mxu0 0
        %1566 = vmatpush1.bf16.xpose.msra.mxu0 0
        %1567 = vmatprep.subr.bf16.mxu0 0
        %1568 = vmatpush1.bf16.xpose.msra.mxu0 0
        %1569 = vmatprep.mubr.bf16.mxu0 0
        %1570 = vmatmul.mubr.bf16.gmra.mrb[0].mxu0 %v1301
        %v1571 = vpop.f32.mrb[0].mxu0
        %v1572 = vadd.f32 0.0, %v1571
        %v1573 = vpop.f32.mrb[0].mxu0
        %v1574 = vpop.f32.mrb[0].mxu0
        %v1575 = vadd.f32 0.0, %v1574
        %v1576 = vpop.f32.mrb[0].mxu0
        %1577 = vdwg.mxu0
        %1578 = vmatprep.subr.bf16.mxu0 0
        %1579 = vmatpush1.bf16.xpose.msra.mxu0 %v1307
        %1580 = vmatprep.subr.bf16.mxu0 0
        %1581 = vmatpush1.bf16.xpose.msra.mxu0 0
        %1582 = vmatprep.subr.bf16.mxu0 0
        %1583 = vmatpush1.bf16.xpose.msra.mxu0 0
        %1584 = vmatprep.subr.bf16.mxu0 0
        %1585 = vmatpush1.bf16.xpose.msra.mxu0 0
        %1586 = vmatprep.subr.bf16.mxu0 0
        %1587 = vmatpush1.bf16.xpose.msra.mxu0 0
        %1588 = vmatprep.subr.bf16.mxu0 0
        %1589 = vmatpush1.bf16.xpose.msra.mxu0 0
        %1590 = vmatprep.subr.bf16.mxu0 0
        %1591 = vmatpush1.bf16.xpose.msra.mxu0 0
        %1592 = vmatprep.subr.bf16.mxu0 0
        %1593 = vmatpush1.bf16.xpose.msra.mxu0 0
        %1594 = vmatprep.subr.bf16.mxu0 0
        %1595 = vmatpush1.bf16.xpose.msra.mxu0 0
        %1596 = vmatprep.subr.bf16.mxu0 0
        %1597 = vmatpush1.bf16.xpose.msra.mxu0 0
        %1598 = vmatprep.subr.bf16.mxu0 0
        %1599 = vmatpush1.bf16.xpose.msra.mxu0 0
        %1600 = vmatprep.subr.bf16.mxu0 0
        %1601 = vmatpush1.bf16.xpose.msra.mxu0 0
        %1602 = vmatprep.subr.bf16.mxu0 0
        %1603 = vmatpush1.bf16.xpose.msra.mxu0 0
        %1604 = vmatprep.subr.bf16.mxu0 0
        %1605 = vmatpush1.bf16.xpose.msra.mxu0 0
        %1606 = vmatprep.subr.bf16.mxu0 0
        %1607 = vmatpush1.bf16.xpose.msra.mxu0 0
        %1608 = vmatprep.subr.bf16.mxu0 0
        %1609 = vmatpush1.bf16.xpose.msra.mxu0 0
        %1610 = vmatprep.mubr.bf16.mxu0 0
        %1611 = vmatmul.mubr.bf16.gmra.mrb[0].mxu0 %v1303
        %v1612 = vpop.f32.mrb[0].mxu0
        %v1613 = vadd.f32 0.0, %v1612
        %v1614 = vpop.f32.mrb[0].mxu0
        %v1615 = vpop.f32.mrb[0].mxu0
        %v1616 = vadd.f32 0.0, %v1615
        %v1617 = vpop.f32.mrb[0].mxu0
        %1618 = vdwg.mxu0
        %v1619 = vmul.f32 %v1572, 0.088388346
        %v1620 = vmul.f32 %v1575, 0.088388346
        %v1621 = vmul.f32 %v1613, 0.088388346
        %v1622 = vmul.f32 %v1616, 0.088388346
        %v1623 = vsel %vm1398, %v1619, -inf
        %1624 = vmax.xlane.f32.xlu0 %v1623
        %v1625 = vpop.xlane.xlu0 %1624
        %v1626 = vsel %vm1398, %v1620, -inf
        %1627 = vmax.xlane.f32.xlu0 %v1626
        %v1628 = vpop.xlane.xlu0 %1627
        %v1629 = vsel %vm1398, %v1621, -inf
        %1630 = vmax.xlane.f32.xlu0 %v1629
        %v1631 = vpop.xlane.xlu0 %1630
        %v1632 = vsel %vm1398, %v1622, -inf
        %1633 = vmax.xlane.f32.xlu0 %v1632
        %v1634 = vpop.xlane.xlu0 %1633
        %v1635 = vsub.f32 %v1619, %v1625
        %v1636 = vsub.f32 %v1620, %v1628
        %v1637 = vsub.f32 %v1621, %v1631
        %v1638 = vsub.f32 %v1622, %v1634
        %v1639 = vmul.f32 %v1635, 1.442695
        %v1640 = vpow.pop %v1639
        %v1641 = vmul.f32 %v1636, 1.442695
        %v1642 = vpow.pop %v1641
        %v1643 = vmul.f32 %v1637, 1.442695
        %v1644 = vpow.pop %v1643
        %v1645 = vmul.f32 %v1638, 1.442695
        %v1646 = vpow.pop %v1645
        %v1647 = vsel %vm1398, %v1640, 0.0
        %1648 = vadd.xlane.f32.xlu0 %v1647
        %v1649 = vpop.xlane.xlu0 %1648
        %v1650 = vsel %vm1398, %v1642, 0.0
        %1651 = vadd.xlane.f32.xlu0 %v1650
        %v1652 = vpop.xlane.xlu0 %1651
        %v1653 = vsel %vm1398, %v1644, 0.0
        %1654 = vadd.xlane.f32.xlu0 %v1653
        %v1655 = vpop.xlane.xlu0 %1654
        %v1656 = vsel %vm1398, %v1646, 0.0
        %1657 = vadd.xlane.f32.xlu0 %v1656
        %v1658 = vpop.xlane.xlu0 %1657
        %v1659 = vrcp.pop %v1649
        %v1660 = vrcp.pop %v1652
        %v1661 = vrcp.pop %v1655
        %v1662 = vrcp.pop %v1658
        %v1663 = vmul.f32 %v1640, %v1659
        %v1664 = vmul.f32 %v1642, %v1660
        %v1665 = vmul.f32 %v1644, %v1661
        %v1666 = vmul.f32 %v1646, %v1662
        %v1667 = vpack.c.bf16 %v1664, %v1663
        %v1668 = vpack.c.bf16 %v1666, %v1665
        %v1670 = vsel %vm1398, %v1667, 0
        %1672 = vmatprep.subr.bf16.mxu0 0
        %1673 = vmatpush1.bf16.msra.mxu0 %v1309
        %1674 = vmatprep.subr.bf16.mxu0 0
        %1675 = vmatpush1.bf16.msra.mxu0 0
        %1676 = vmatprep.subr.bf16.mxu0 0
        %1677 = vmatpush1.bf16.msra.mxu0 0
        %1678 = vmatprep.subr.bf16.mxu0 0
        %1679 = vmatpush1.bf16.msra.mxu0 0
        %1680 = vmatprep.subr.bf16.mxu0 0
        %1681 = vmatpush1.bf16.msra.mxu0 0
        %1682 = vmatprep.subr.bf16.mxu0 0
        %1683 = vmatpush1.bf16.msra.mxu0 0
        %1684 = vmatprep.subr.bf16.mxu0 0
        %1685 = vmatpush1.bf16.msra.mxu0 0
        %1686 = vmatprep.subr.bf16.mxu0 0
        %1687 = vmatpush1.bf16.msra.mxu0 0
        %1688 = vmatprep.subr.bf16.mxu0 0
        %1689 = vmatpush1.bf16.msra.mxu0 0
        %1690 = vmatprep.subr.bf16.mxu0 0
        %1691 = vmatpush1.bf16.msra.mxu0 0
        %1692 = vmatprep.subr.bf16.mxu0 0
        %1693 = vmatpush1.bf16.msra.mxu0 0
        %1694 = vmatprep.subr.bf16.mxu0 0
        %1695 = vmatpush1.bf16.msra.mxu0 0
        %1696 = vmatprep.subr.bf16.mxu0 0
        %1697 = vmatpush1.bf16.msra.mxu0 0
        %1698 = vmatprep.subr.bf16.mxu0 0
        %1699 = vmatpush1.bf16.msra.mxu0 0
        %1700 = vmatprep.subr.bf16.mxu0 0
        %1701 = vmatpush1.bf16.msra.mxu0 0
        %1702 = vmatprep.subr.bf16.mxu0 0
        %1703 = vmatpush1.bf16.msra.mxu0 0
        %1704 = vmatprep.mubr.bf16.mxu0 0
        %1705 = vmatmul.mubr.bf16.gmra.mrb[0].mxu0 %v1670
        %v1706 = vpop.f32.mrb[0].mxu0
        %v1707 = vadd.f32 0.0, %v1706
        %v1708 = vpop.f32.mrb[0].mxu0
        %v1709 = vpop.f32.mrb[0].mxu0
        %v1710 = vadd.f32 0.0, %v1709
        %v1711 = vpop.f32.mrb[0].mxu0
        %1712 = vdwg.mxu0
        %v1714 = vsel %vm1398, %v1668, 0
        %1716 = vmatprep.subr.bf16.mxu0 0
        %1717 = vmatpush1.bf16.msra.mxu0 %v1311
        %1718 = vmatprep.subr.bf16.mxu0 0
        %1719 = vmatpush1.bf16.msra.mxu0 0
        %1720 = vmatprep.subr.bf16.mxu0 0
        %1721 = vmatpush1.bf16.msra.mxu0 0
        %1722 = vmatprep.subr.bf16.mxu0 0
        %1723 = vmatpush1.bf16.msra.mxu0 0
        %1724 = vmatprep.subr.bf16.mxu0 0
        %1725 = vmatpush1.bf16.msra.mxu0 0
        %1726 = vmatprep.subr.bf16.mxu0 0
        %1727 = vmatpush1.bf16.msra.mxu0 0
        %1728 = vmatprep.subr.bf16.mxu0 0
        %1729 = vmatpush1.bf16.msra.mxu0 0
        %1730 = vmatprep.subr.bf16.mxu0 0
        %1731 = vmatpush1.bf16.msra.mxu0 0
        %1732 = vmatprep.subr.bf16.mxu0 0
        %1733 = vmatpush1.bf16.msra.mxu0 0
        %1734 = vmatprep.subr.bf16.mxu0 0
        %1735 = vmatpush1.bf16.msra.mxu0 0
        %1736 = vmatprep.subr.bf16.mxu0 0
        %1737 = vmatpush1.bf16.msra.mxu0 0
        %1738 = vmatprep.subr.bf16.mxu0 0
        %1739 = vmatpush1.bf16.msra.mxu0 0
        %1740 = vmatprep.subr.bf16.mxu0 0
        %1741 = vmatpush1.bf16.msra.mxu0 0
        %1742 = vmatprep.subr.bf16.mxu0 0
        %1743 = vmatpush1.bf16.msra.mxu0 0
        %1744 = vmatprep.subr.bf16.mxu0 0
        %1745 = vmatpush1.bf16.msra.mxu0 0
        %1746 = vmatprep.subr.bf16.mxu0 0
        %1747 = vmatpush1.bf16.msra.mxu0 0
        %1748 = vmatprep.mubr.bf16.mxu0 0
        %1749 = vmatmul.mubr.bf16.gmra.mrb[0].mxu0 %v1714
        %v1750 = vpop.f32.mrb[0].mxu0
        %v1751 = vadd.f32 0.0, %v1750
        %v1752 = vpop.f32.mrb[0].mxu0
        %v1753 = vpop.f32.mrb[0].mxu0
        %v1754 = vadd.f32 0.0, %v1753
        %v1755 = vpop.f32.mrb[0].mxu0
        %1756 = vdwg.mxu0
        %v1757 = vpack.c.bf16 %v1710, %v1707
        %v1758 = vpack.c.bf16 %v1754, %v1751
        %1759 = vst [vmem:[#allocation2 + $0x8] sm:$0xff] %v1757
        %1760 = vst [vmem:[#allocation2 + $0x18] sm:$0xff] %v1758
        %v1761 = vld [vmem:[#allocation2] sm:$0xff]
        %v1762 = vld [vmem:[#allocation2 + $0x8] sm:$0xff]
        %v1763 = vld [vmem:[#allocation2 + $0x10] sm:$0xff]
        %v1764 = vld [vmem:[#allocation2 + $0x18] sm:$0xff]
        %v1765 = vld [vmem:[#allocation8] sm:$0xff]
        %v1766 = vld [vmem:[#allocation8 + $0x8] sm:$0xff]
        %v1767 = vld [vmem:[#allocation8 + $0x10] sm:$0xff]
        %v1768 = vld [vmem:[#allocation8 + $0x18] sm:$0xff]
        %v1769 = vld [vmem:[#allocation8 + $0x20] sm:$0xff]
        %v1770 = vld [vmem:[#allocation8 + $0x28] sm:$0xff]
        %v1771 = vld [vmem:[#allocation8 + $0x30] sm:$0xff]
        %v1772 = vld [vmem:[#allocation8 + $0x38] sm:$0xff]
        %v1773 = vld [vmem:[#allocation8 + $0x40] sm:$0xff]
        %v1774 = vld [vmem:[#allocation8 + $0x48] sm:$0xff]
        %v1775 = vld [vmem:[#allocation8 + $0x50] sm:$0xff]
        %v1776 = vld [vmem:[#allocation8 + $0x58] sm:$0xff]
        %v1777 = vld [vmem:[#allocation8 + $0x60] sm:$0xff]
        %v1778 = vld [vmem:[#allocation8 + $0x68] sm:$0xff]
        %v1779 = vld [vmem:[#allocation8 + $0x70] sm:$0xff]
        %v1780 = vld [vmem:[#allocation8 + $0x78] sm:$0xff]
        %v1781 = vld [vmem:[#allocation8 + $0x80] sm:$0xff]
        %v1782 = vld [vmem:[#allocation8 + $0x88] sm:$0xff]
        %v1783 = vld [vmem:[#allocation8 + $0x90] sm:$0xff]
        %v1784 = vld [vmem:[#allocation8 + $0x98] sm:$0xff]
        %v1785 = vld [vmem:[#allocation8 + $0xa0] sm:$0xff]
        %v1786 = vld [vmem:[#allocation8 + $0xa8] sm:$0xff]
        %v1787 = vld [vmem:[#allocation8 + $0xb0] sm:$0xff]
        %v1788 = vld [vmem:[#allocation8 + $0xb8] sm:$0xff]
        %v1789 = vld [vmem:[#allocation8 + $0xc0] sm:$0xff]
        %v1790 = vld [vmem:[#allocation8 + $0xc8] sm:$0xff]
        %v1791 = vld [vmem:[#allocation8 + $0xd0] sm:$0xff]
        %v1792 = vld [vmem:[#allocation8 + $0xd8] sm:$0xff]
        %v1793 = vld [vmem:[#allocation8 + $0xe0] sm:$0xff]
        %v1794 = vld [vmem:[#allocation8 + $0xe8] sm:$0xff]
        %v1795 = vld [vmem:[#allocation8 + $0xf0] sm:$0xff]
        %v1796 = vld [vmem:[#allocation8 + $0xf8] sm:$0xff]
        %v1797 = vld [vmem:[%s4] sm:$0x3]
        %v1799 = vlaneseq
        %v1800 = vshrl.u32 %v1799, 7
        %v1801 = vsub.s32 0, %v1800
        %v1802 = vrot.slane %v1797, %v1801
        %v1803 = vlaneseq
        %v1804 = vshrl.u32 %v1803, 7
        %v1805 = vsub.s32 1, %v1804
        %v1806 = vrot.slane %v1797, %v1805
        %v1841 = vunpack.c.l.b16 %v1765
        %v1842 = vunpack.c.h.b16 %v1765
        %v1843 = vunpack.c.l.b16 %v1766
        %v1844 = vunpack.c.h.b16 %v1766
        %v1845 = vunpack.c.l.b16 %v1767
        %v1846 = vunpack.c.h.b16 %v1767
        %v1847 = vunpack.c.l.b16 %v1768
        %v1848 = vunpack.c.h.b16 %v1768
        %v1849 = vunpack.c.l.b16 %v1769
        %v1850 = vunpack.c.h.b16 %v1769
        %v1851 = vunpack.c.l.b16 %v1770
        %v1852 = vunpack.c.h.b16 %v1770
        %v1853 = vunpack.c.l.b16 %v1771
        %v1854 = vunpack.c.h.b16 %v1771
        %v1855 = vunpack.c.l.b16 %v1772
        %v1856 = vunpack.c.h.b16 %v1772
        %v1857 = vunpack.c.l.b16 %v1773
        %v1858 = vunpack.c.h.b16 %v1773
        %v1859 = vunpack.c.l.b16 %v1774
        %v1860 = vunpack.c.h.b16 %v1774
        %v1861 = vunpack.c.l.b16 %v1775
        %v1862 = vunpack.c.h.b16 %v1775
        %v1863 = vunpack.c.l.b16 %v1776
        %v1864 = vunpack.c.h.b16 %v1776
        %v1865 = vunpack.c.l.b16 %v1777
        %v1866 = vunpack.c.h.b16 %v1777
        %v1867 = vunpack.c.l.b16 %v1778
        %v1868 = vunpack.c.h.b16 %v1778
        %v1869 = vunpack.c.l.b16 %v1779
        %v1870 = vunpack.c.h.b16 %v1779
        %v1871 = vunpack.c.l.b16 %v1780
        %v1872 = vunpack.c.h.b16 %v1780
        %v1873 = vunpack.c.l.b16 %v1781
        %v1874 = vunpack.c.h.b16 %v1781
        %v1875 = vunpack.c.l.b16 %v1782
        %v1876 = vunpack.c.h.b16 %v1782
        %v1877 = vunpack.c.l.b16 %v1783
        %v1878 = vunpack.c.h.b16 %v1783
        %v1879 = vunpack.c.l.b16 %v1784
        %v1880 = vunpack.c.h.b16 %v1784
        %v1881 = vunpack.c.l.b16 %v1785
        %v1882 = vunpack.c.h.b16 %v1785
        %v1883 = vunpack.c.l.b16 %v1786
        %v1884 = vunpack.c.h.b16 %v1786
        %v1885 = vunpack.c.l.b16 %v1787
        %v1886 = vunpack.c.h.b16 %v1787
        %v1887 = vunpack.c.l.b16 %v1788
        %v1888 = vunpack.c.h.b16 %v1788
        %v1889 = vunpack.c.l.b16 %v1789
        %v1890 = vunpack.c.h.b16 %v1789
        %v1891 = vunpack.c.l.b16 %v1790
        %v1892 = vunpack.c.h.b16 %v1790
        %v1893 = vunpack.c.l.b16 %v1791
        %v1894 = vunpack.c.h.b16 %v1791
        %v1895 = vunpack.c.l.b16 %v1792
        %v1896 = vunpack.c.h.b16 %v1792
        %v1897 = vunpack.c.l.b16 %v1793
        %v1898 = vunpack.c.h.b16 %v1793
        %v1899 = vunpack.c.l.b16 %v1794
        %v1900 = vunpack.c.h.b16 %v1794
        %v1901 = vunpack.c.l.b16 %v1795
        %v1902 = vunpack.c.h.b16 %v1795
        %v1903 = vunpack.c.l.b16 %v1796
        %v1904 = vunpack.c.h.b16 %v1796
        %v1905 = vpack.c.b16 %v1843, %v1841
        %v1906 = vpack.c.b16 %v1844, %v1842
        %v1907 = vpack.c.b16 %v1847, %v1845
        %v1908 = vpack.c.b16 %v1848, %v1846
        %v1909 = vpack.c.b16 %v1851, %v1849
        %v1910 = vpack.c.b16 %v1852, %v1850
        %v1911 = vpack.c.b16 %v1855, %v1853
        %v1912 = vpack.c.b16 %v1856, %v1854
        %v1913 = vpack.c.b16 %v1859, %v1857
        %v1914 = vpack.c.b16 %v1860, %v1858
        %v1915 = vpack.c.b16 %v1863, %v1861
        %v1916 = vpack.c.b16 %v1864, %v1862
        %v1917 = vpack.c.b16 %v1867, %v1865
        %v1918 = vpack.c.b16 %v1868, %v1866
        %v1919 = vpack.c.b16 %v1871, %v1869
        %v1920 = vpack.c.b16 %v1872, %v1870
        %v1921 = vpack.c.b16 %v1875, %v1873
        %v1922 = vpack.c.b16 %v1876, %v1874
        %v1923 = vpack.c.b16 %v1879, %v1877
        %v1924 = vpack.c.b16 %v1880, %v1878
        %v1925 = vpack.c.b16 %v1883, %v1881
        %v1926 = vpack.c.b16 %v1884, %v1882
        %v1927 = vpack.c.b16 %v1887, %v1885
        %v1928 = vpack.c.b16 %v1888, %v1886
        %v1929 = vpack.c.b16 %v1891, %v1889
        %v1930 = vpack.c.b16 %v1892, %v1890
        %v1931 = vpack.c.b16 %v1895, %v1893
        %v1932 = vpack.c.b16 %v1896, %v1894
        %v1933 = vpack.c.b16 %v1899, %v1897
        %v1934 = vpack.c.b16 %v1900, %v1898
        %v1935 = vpack.c.b16 %v1903, %v1901
        %v1936 = vpack.c.b16 %v1904, %v1902
        %1969 = vmatprep.subr.bf16.mxu0 %v1906
        %1970 = vmatpush1.bf16.msra.mxu0 %v1905
        %1971 = vmatprep.subr.bf16.mxu0 %v1908
        %1972 = vmatpush1.bf16.msra.mxu0 %v1907
        %1973 = vmatprep.subr.bf16.mxu0 %v1910
        %1974 = vmatpush1.bf16.msra.mxu0 %v1909
        %1975 = vmatprep.subr.bf16.mxu0 %v1912
        %1976 = vmatpush1.bf16.msra.mxu0 %v1911
        %1977 = vmatprep.subr.bf16.mxu0 %v1914
        %1978 = vmatpush1.bf16.msra.mxu0 %v1913
        %1979 = vmatprep.subr.bf16.mxu0 %v1916
        %1980 = vmatpush1.bf16.msra.mxu0 %v1915
        %1981 = vmatprep.subr.bf16.mxu0 %v1918
        %1982 = vmatpush1.bf16.msra.mxu0 %v1917
        %1983 = vmatprep.subr.bf16.mxu0 %v1920
        %1984 = vmatpush1.bf16.msra.mxu0 %v1919
        %1985 = vmatprep.subr.bf16.mxu0 %v1922
        %1986 = vmatpush1.bf16.msra.mxu0 %v1921
        %1987 = vmatprep.subr.bf16.mxu0 %v1924
        %1988 = vmatpush1.bf16.msra.mxu0 %v1923
        %1989 = vmatprep.subr.bf16.mxu0 %v1926
        %1990 = vmatpush1.bf16.msra.mxu0 %v1925
        %1991 = vmatprep.subr.bf16.mxu0 %v1928
        %1992 = vmatpush1.bf16.msra.mxu0 %v1927
        %1993 = vmatprep.subr.bf16.mxu0 %v1930
        %1994 = vmatpush1.bf16.msra.mxu0 %v1929
        %1995 = vmatprep.subr.bf16.mxu0 %v1932
        %1996 = vmatpush1.bf16.msra.mxu0 %v1931
        %1997 = vmatprep.subr.bf16.mxu0 %v1934
        %1998 = vmatpush1.bf16.msra.mxu0 %v1933
        %1999 = vmatprep.subr.bf16.mxu0 %v1936
        %2000 = vmatpush1.bf16.msra.mxu0 %v1935
        %2001 = vmatprep.mubr.bf16.mxu0 %v1762
        %2002 = vmatmul.mubr.bf16.gmra.mrb[0].mxu0 %v1761
        %v2003 = vpop.f32.mrb[0].mxu0
        %v2004 = vadd.f32 %v1802, %v2003
        %v2005 = vpop.f32.mrb[0].mxu0
        %v2006 = vadd.f32 %v1806, %v2005
        %v2007 = vpop.f32.mrb[0].mxu0
        %v2008 = vadd.f32 %v1802, %v2007
        %v2009 = vpop.f32.mrb[0].mxu0
        %v2010 = vadd.f32 %v1806, %v2009
        %2011 = vmatprep.mubr.bf16.mxu0 %v1764
        %2012 = vmatmul.mubr.bf16.gmra.mrb[0].mxu0 %v1763
        %v2013 = vpop.f32.mrb[0].mxu0
        %v2014 = vadd.f32 %v1802, %v2013
        %v2015 = vpop.f32.mrb[0].mxu0
        %v2016 = vadd.f32 %v1806, %v2015
        %v2017 = vpop.f32.mrb[0].mxu0
        %v2018 = vadd.f32 %v1802, %v2017
        %v2019 = vpop.f32.mrb[0].mxu0
        %v2020 = vadd.f32 %v1806, %v2019
        %2021 = vdwg.mxu0
        %v2022 = vadd.f32 %v521, %v2004
        %v2023 = vadd.f32 %v522, %v2006
        %v2024 = vadd.f32 %v523, %v2008
        %v2025 = vadd.f32 %v524, %v2010
        %v2026 = vadd.f32 %v525, %v2014
        %v2027 = vadd.f32 %v526, %v2016
        %v2028 = vadd.f32 %v527, %v2018
        %v2029 = vadd.f32 %v528, %v2020
        %v2030 = vld [vmem:[%s9] sm:$0x3]
        %v2031 = vld [vmem:[%s10] sm:$0x3]
        %v2032 = vadd.f32 %v2022, %v2023
        %2033 = vadd.xlane.f32.xlu0 %v2032
        %v2034 = vpop.xlane.xlu0 %2033
        %v2035 = vadd.f32 %v2024, %v2025
        %2036 = vadd.xlane.f32.xlu0 %v2035
        %v2037 = vpop.xlane.xlu0 %2036
        %v2038 = vadd.f32 %v2026, %v2027
        %2039 = vadd.xlane.f32.xlu0 %v2038
        %v2040 = vpop.xlane.xlu0 %2039
        %v2041 = vadd.f32 %v2028, %v2029
        %2042 = vadd.xlane.f32.xlu0 %v2041
        %v2043 = vpop.xlane.xlu0 %2042
        %v2044 = vrcp.pop 256.0
        %v2045 = vmul.f32 %v2034, %v2044
        %v2046 = vmul.f32 %v2037, %v2044
        %v2047 = vmul.f32 %v2040, %v2044
        %v2048 = vmul.f32 %v2043, %v2044
        %v2049 = vsub.f32 %v2022, %v2045
        %v2050 = vsub.f32 %v2023, %v2045
        %v2051 = vsub.f32 %v2024, %v2046
        %v2052 = vsub.f32 %v2025, %v2046
        %v2053 = vsub.f32 %v2026, %v2047
        %v2054 = vsub.f32 %v2027, %v2047
        %v2055 = vsub.f32 %v2028, %v2048
        %v2056 = vsub.f32 %v2029, %v2048
        %v2057 = vmul.f32 %v2049, %v2049
        %v2058 = vmul.f32 %v2050, %v2050
        %v2059 = vmul.f32 %v2051, %v2051
        %v2060 = vmul.f32 %v2052, %v2052
        %v2061 = vmul.f32 %v2053, %v2053
        %v2062 = vmul.f32 %v2054, %v2054
        %v2063 = vmul.f32 %v2055, %v2055
        %v2064 = vmul.f32 %v2056, %v2056
        %v2065 = vadd.f32 %v2057, %v2058
        %2066 = vadd.xlane.f32.xlu0 %v2065
        %v2067 = vpop.xlane.xlu0 %2066
        %v2068 = vadd.f32 %v2059, %v2060
        %2069 = vadd.xlane.f32.xlu0 %v2068
        %v2070 = vpop.xlane.xlu0 %2069
        %v2071 = vadd.f32 %v2061, %v2062
        %2072 = vadd.xlane.f32.xlu0 %v2071
        %v2073 = vpop.xlane.xlu0 %2072
        %v2074 = vadd.f32 %v2063, %v2064
        %2075 = vadd.xlane.f32.xlu0 %v2074
        %v2076 = vpop.xlane.xlu0 %2075
        %v2077 = vmul.f32 %v2067, %v2044
        %v2078 = vmul.f32 %v2070, %v2044
        %v2079 = vmul.f32 %v2073, %v2044
        %v2080 = vmul.f32 %v2076, %v2044
        %v2081 = vadd.f32 %v2077, 1e-05
        %v2082 = vadd.f32 %v2078, 1e-05
        %v2083 = vadd.f32 %v2079, 1e-05
        %v2084 = vadd.f32 %v2080, 1e-05
        %v2085 = vrsqrt.pop %v2081
        %v2086 = vrsqrt.pop %v2082
        %v2087 = vrsqrt.pop %v2083
        %v2088 = vrsqrt.pop %v2084
        %v2089 = vmul.f32 %v2049, %v2085
        %v2090 = vmul.f32 %v2050, %v2085
        %v2091 = vmul.f32 %v2051, %v2086
        %v2092 = vmul.f32 %v2052, %v2086
        %v2093 = vmul.f32 %v2053, %v2087
        %v2094 = vmul.f32 %v2054, %v2087
        %v2095 = vmul.f32 %v2055, %v2088
        %v2096 = vmul.f32 %v2056, %v2088
        %v2098 = vlaneseq
        %v2099 = vshrl.u32 %v2098, 7
        %v2100 = vsub.s32 0, %v2099
        %v2101 = vrot.slane %v2030, %v2100
        %v2102 = vlaneseq
        %v2103 = vshrl.u32 %v2102, 7
        %v2104 = vsub.s32 1, %v2103
        %v2105 = vrot.slane %v2030, %v2104
        %v2108 = vmul.f32 %v2089, %v2101
        %v2109 = vmul.f32 %v2090, %v2105
        %v2110 = vmul.f32 %v2091, %v2101
        %v2111 = vmul.f32 %v2092, %v2105
        %v2112 = vmul.f32 %v2093, %v2101
        %v2113 = vmul.f32 %v2094, %v2105
        %v2114 = vmul.f32 %v2095, %v2101
        %v2115 = vmul.f32 %v2096, %v2105
        %v2117 = vlaneseq
        %v2118 = vshrl.u32 %v2117, 7
        %v2119 = vsub.s32 0, %v2118
        %v2120 = vrot.slane %v2031, %v2119
        %v2121 = vlaneseq
        %v2122 = vshrl.u32 %v2121, 7
        %v2123 = vsub.s32 1, %v2122
        %v2124 = vrot.slane %v2031, %v2123
        %v2127 = vadd.f32 %v2108, %v2120
        %v2128 = vadd.f32 %v2109, %v2124
        %v2129 = vadd.f32 %v2110, %v2120
        %v2130 = vadd.f32 %v2111, %v2124
        %v2131 = vadd.f32 %v2112, %v2120
        %v2132 = vadd.f32 %v2113, %v2124
        %v2133 = vadd.f32 %v2114, %v2120
        %v2134 = vadd.f32 %v2115, %v2124
        %v2135 = vpack.c.bf16 %v2129, %v2127
        %v2136 = vpack.c.bf16 %v2130, %v2128
        %v2137 = vpack.c.bf16 %v2133, %v2131
        %v2138 = vpack.c.bf16 %v2134, %v2132
        %v2139 = vld [vmem:[%s6] sm:$0xf]
        %v2140 = vld [vmem:[#allocation9] sm:$0xff]
        %v2141 = vld [vmem:[#allocation9 + $0x8] sm:$0xff]
        %v2142 = vld [vmem:[#allocation9 + $0x10] sm:$0xff]
        %v2143 = vld [vmem:[#allocation9 + $0x18] sm:$0xff]
        %v2144 = vld [vmem:[#allocation9 + $0x20] sm:$0xff]
        %v2145 = vld [vmem:[#allocation9 + $0x28] sm:$0xff]
        %v2146 = vld [vmem:[#allocation9 + $0x30] sm:$0xff]
        %v2147 = vld [vmem:[#allocation9 + $0x38] sm:$0xff]
        %v2148 = vld [vmem:[#allocation9 + $0x40] sm:$0xff]
        %v2149 = vld [vmem:[#allocation9 + $0x48] sm:$0xff]
        %v2150 = vld [vmem:[#allocation9 + $0x50] sm:$0xff]
        %v2151 = vld [vmem:[#allocation9 + $0x58] sm:$0xff]
        %v2152 = vld [vmem:[#allocation9 + $0x60] sm:$0xff]
        %v2153 = vld [vmem:[#allocation9 + $0x68] sm:$0xff]
        %v2154 = vld [vmem:[#allocation9 + $0x70] sm:$0xff]
        %v2155 = vld [vmem:[#allocation9 + $0x78] sm:$0xff]
        %v2156 = vld [vmem:[#allocation9 + $0x80] sm:$0xff]
        %v2157 = vld [vmem:[#allocation9 + $0x88] sm:$0xff]
        %v2158 = vld [vmem:[#allocation9 + $0x90] sm:$0xff]
        %v2159 = vld [vmem:[#allocation9 + $0x98] sm:$0xff]
        %v2160 = vld [vmem:[#allocation9 + $0xa0] sm:$0xff]
        %v2161 = vld [vmem:[#allocation9 + $0xa8] sm:$0xff]
        %v2162 = vld [vmem:[#allocation9 + $0xb0] sm:$0xff]
        %v2163 = vld [vmem:[#allocation9 + $0xb8] sm:$0xff]
        %v2164 = vld [vmem:[#allocation9 + $0xc0] sm:$0xff]
        %v2165 = vld [vmem:[#allocation9 + $0xc8] sm:$0xff]
        %v2166 = vld [vmem:[#allocation9 + $0xd0] sm:$0xff]
        %v2167 = vld [vmem:[#allocation9 + $0xd8] sm:$0xff]
        %v2168 = vld [vmem:[#allocation9 + $0xe0] sm:$0xff]
        %v2169 = vld [vmem:[#allocation9 + $0xe8] sm:$0xff]
        %v2170 = vld [vmem:[#allocation9 + $0xf0] sm:$0xff]
        %v2171 = vld [vmem:[#allocation9 + $0xf8] sm:$0xff]
        %v2172 = vld [vmem:[#allocation9 + $0x100] sm:$0xff]
        %v2173 = vld [vmem:[#allocation9 + $0x108] sm:$0xff]
        %v2174 = vld [vmem:[#allocation9 + $0x110] sm:$0xff]
        %v2175 = vld [vmem:[#allocation9 + $0x118] sm:$0xff]
        %v2176 = vld [vmem:[#allocation9 + $0x120] sm:$0xff]
        %v2177 = vld [vmem:[#allocation9 + $0x128] sm:$0xff]
        %v2178 = vld [vmem:[#allocation9 + $0x130] sm:$0xff]
        %v2179 = vld [vmem:[#allocation9 + $0x138] sm:$0xff]
        %v2180 = vld [vmem:[#allocation9 + $0x140] sm:$0xff]
        %v2181 = vld [vmem:[#allocation9 + $0x148] sm:$0xff]
        %v2182 = vld [vmem:[#allocation9 + $0x150] sm:$0xff]
        %v2183 = vld [vmem:[#allocation9 + $0x158] sm:$0xff]
        %v2184 = vld [vmem:[#allocation9 + $0x160] sm:$0xff]
        %v2185 = vld [vmem:[#allocation9 + $0x168] sm:$0xff]
        %v2186 = vld [vmem:[#allocation9 + $0x170] sm:$0xff]
        %v2187 = vld [vmem:[#allocation9 + $0x178] sm:$0xff]
        %v2188 = vld [vmem:[#allocation9 + $0x180] sm:$0xff]
        %v2189 = vld [vmem:[#allocation9 + $0x188] sm:$0xff]
        %v2190 = vld [vmem:[#allocation9 + $0x190] sm:$0xff]
        %v2191 = vld [vmem:[#allocation9 + $0x198] sm:$0xff]
        %v2192 = vld [vmem:[#allocation9 + $0x1a0] sm:$0xff]
        %v2193 = vld [vmem:[#allocation9 + $0x1a8] sm:$0xff]
        %v2194 = vld [vmem:[#allocation9 + $0x1b0] sm:$0xff]
        %v2195 = vld [vmem:[#allocation9 + $0x1b8] sm:$0xff]
        %v2196 = vld [vmem:[#allocation9 + $0x1c0] sm:$0xff]
        %v2197 = vld [vmem:[#allocation9 + $0x1c8] sm:$0xff]
        %v2198 = vld [vmem:[#allocation9 + $0x1d0] sm:$0xff]
        %v2199 = vld [vmem:[#allocation9 + $0x1d8] sm:$0xff]
        %v2200 = vld [vmem:[#allocation9 + $0x1e0] sm:$0xff]
        %v2201 = vld [vmem:[#allocation9 + $0x1e8] sm:$0xff]
        %v2202 = vld [vmem:[#allocation9 + $0x1f0] sm:$0xff]
        %v2203 = vld [vmem:[#allocation9 + $0x1f8] sm:$0xff]
        %v2205 = vlaneseq
        %v2206 = vshrl.u32 %v2205, 7
        %v2207 = vsub.s32 0, %v2206
        %v2208 = vrot.slane %v2139, %v2207
        %v2209 = vlaneseq
        %v2210 = vshrl.u32 %v2209, 7
        %v2211 = vsub.s32 1, %v2210
        %v2212 = vrot.slane %v2139, %v2211
        %v2213 = vlaneseq
        %v2214 = vshrl.u32 %v2213, 7
        %v2215 = vsub.s32 2, %v2214
        %v2216 = vrot.slane %v2139, %v2215
        %v2217 = vlaneseq
        %v2218 = vshrl.u32 %v2217, 7
        %v2219 = vsub.s32 3, %v2218
        %v2220 = vrot.slane %v2139, %v2219
        %v2289 = vunpack.c.l.b16 %v2140
        %v2290 = vunpack.c.h.b16 %v2140
        %v2291 = vunpack.c.l.b16 %v2141
        %v2292 = vunpack.c.h.b16 %v2141
        %v2293 = vunpack.c.l.b16 %v2142
        %v2294 = vunpack.c.h.b16 %v2142
        %v2295 = vunpack.c.l.b16 %v2143
        %v2296 = vunpack.c.h.b16 %v2143
        %v2297 = vunpack.c.l.b16 %v2144
        %v2298 = vunpack.c.h.b16 %v2144
        %v2299 = vunpack.c.l.b16 %v2145
        %v2300 = vunpack.c.h.b16 %v2145
        %v2301 = vunpack.c.l.b16 %v2146
        %v2302 = vunpack.c.h.b16 %v2146
        %v2303 = vunpack.c.l.b16 %v2147
        %v2304 = vunpack.c.h.b16 %v2147
        %v2305 = vunpack.c.l.b16 %v2148
        %v2306 = vunpack.c.h.b16 %v2148
        %v2307 = vunpack.c.l.b16 %v2149
        %v2308 = vunpack.c.h.b16 %v2149
        %v2309 = vunpack.c.l.b16 %v2150
        %v2310 = vunpack.c.h.b16 %v2150
        %v2311 = vunpack.c.l.b16 %v2151
        %v2312 = vunpack.c.h.b16 %v2151
        %v2313 = vunpack.c.l.b16 %v2152
        %v2314 = vunpack.c.h.b16 %v2152
        %v2315 = vunpack.c.l.b16 %v2153
        %v2316 = vunpack.c.h.b16 %v2153
        %v2317 = vunpack.c.l.b16 %v2154
        %v2318 = vunpack.c.h.b16 %v2154
        %v2319 = vunpack.c.l.b16 %v2155
        %v2320 = vunpack.c.h.b16 %v2155
        %v2321 = vunpack.c.l.b16 %v2156
        %v2322 = vunpack.c.h.b16 %v2156
        %v2323 = vunpack.c.l.b16 %v2157
        %v2324 = vunpack.c.h.b16 %v2157
        %v2325 = vunpack.c.l.b16 %v2158
        %v2326 = vunpack.c.h.b16 %v2158
        %v2327 = vunpack.c.l.b16 %v2159
        %v2328 = vunpack.c.h.b16 %v2159
        %v2329 = vunpack.c.l.b16 %v2160
        %v2330 = vunpack.c.h.b16 %v2160
        %v2331 = vunpack.c.l.b16 %v2161
        %v2332 = vunpack.c.h.b16 %v2161
        %v2333 = vunpack.c.l.b16 %v2162
        %v2334 = vunpack.c.h.b16 %v2162
        %v2335 = vunpack.c.l.b16 %v2163
        %v2336 = vunpack.c.h.b16 %v2163
        %v2337 = vunpack.c.l.b16 %v2164
        %v2338 = vunpack.c.h.b16 %v2164
        %v2339 = vunpack.c.l.b16 %v2165
        %v2340 = vunpack.c.h.b16 %v2165
        %v2341 = vunpack.c.l.b16 %v2166
        %v2342 = vunpack.c.h.b16 %v2166
        %v2343 = vunpack.c.l.b16 %v2167
        %v2344 = vunpack.c.h.b16 %v2167
        %v2345 = vunpack.c.l.b16 %v2168
        %v2346 = vunpack.c.h.b16 %v2168
        %v2347 = vunpack.c.l.b16 %v2169
        %v2348 = vunpack.c.h.b16 %v2169
        %v2349 = vunpack.c.l.b16 %v2170
        %v2350 = vunpack.c.h.b16 %v2170
        %v2351 = vunpack.c.l.b16 %v2171
        %v2352 = vunpack.c.h.b16 %v2171
        %v2353 = vunpack.c.l.b16 %v2172
        %v2354 = vunpack.c.h.b16 %v2172
        %v2355 = vunpack.c.l.b16 %v2173
        %v2356 = vunpack.c.h.b16 %v2173
        %v2357 = vunpack.c.l.b16 %v2174
        %v2358 = vunpack.c.h.b16 %v2174
        %v2359 = vunpack.c.l.b16 %v2175
        %v2360 = vunpack.c.h.b16 %v2175
        %v2361 = vunpack.c.l.b16 %v2176
        %v2362 = vunpack.c.h.b16 %v2176
        %v2363 = vunpack.c.l.b16 %v2177
        %v2364 = vunpack.c.h.b16 %v2177
        %v2365 = vunpack.c.l.b16 %v2178
        %v2366 = vunpack.c.h.b16 %v2178
        %v2367 = vunpack.c.l.b16 %v2179
        %v2368 = vunpack.c.h.b16 %v2179
        %v2369 = vunpack.c.l.b16 %v2180
        %v2370 = vunpack.c.h.b16 %v2180
        %v2371 = vunpack.c.l.b16 %v2181
        %v2372 = vunpack.c.h.b16 %v2181
        %v2373 = vunpack.c.l.b16 %v2182
        %v2374 = vunpack.c.h.b16 %v2182
        %v2375 = vunpack.c.l.b16 %v2183
        %v2376 = vunpack.c.h.b16 %v2183
        %v2377 = vunpack.c.l.b16 %v2184
        %v2378 = vunpack.c.h.b16 %v2184
        %v2379 = vunpack.c.l.b16 %v2185
        %v2380 = vunpack.c.h.b16 %v2185
        %v2381 = vunpack.c.l.b16 %v2186
        %v2382 = vunpack.c.h.b16 %v2186
        %v2383 = vunpack.c.l.b16 %v2187
        %v2384 = vunpack.c.h.b16 %v2187
        %v2385 = vunpack.c.l.b16 %v2188
        %v2386 = vunpack.c.h.b16 %v2188
        %v2387 = vunpack.c.l.b16 %v2189
        %v2388 = vunpack.c.h.b16 %v2189
        %v2389 = vunpack.c.l.b16 %v2190
        %v2390 = vunpack.c.h.b16 %v2190
        %v2391 = vunpack.c.l.b16 %v2191
        %v2392 = vunpack.c.h.b16 %v2191
        %v2393 = vunpack.c.l.b16 %v2192
        %v2394 = vunpack.c.h.b16 %v2192
        %v2395 = vunpack.c.l.b16 %v2193
        %v2396 = vunpack.c.h.b16 %v2193
        %v2397 = vunpack.c.l.b16 %v2194
        %v2398 = vunpack.c.h.b16 %v2194
        %v2399 = vunpack.c.l.b16 %v2195
        %v2400 = vunpack.c.h.b16 %v2195
        %v2401 = vunpack.c.l.b16 %v2196
        %v2402 = vunpack.c.h.b16 %v2196
        %v2403 = vunpack.c.l.b16 %v2197
        %v2404 = vunpack.c.h.b16 %v2197
        %v2405 = vunpack.c.l.b16 %v2198
        %v2406 = vunpack.c.h.b16 %v2198
        %v2407 = vunpack.c.l.b16 %v2199
        %v2408 = vunpack.c.h.b16 %v2199
        %v2409 = vunpack.c.l.b16 %v2200
        %v2410 = vunpack.c.h.b16 %v2200
        %v2411 = vunpack.c.l.b16 %v2201
        %v2412 = vunpack.c.h.b16 %v2201
        %v2413 = vunpack.c.l.b16 %v2202
        %v2414 = vunpack.c.h.b16 %v2202
        %v2415 = vunpack.c.l.b16 %v2203
        %v2416 = vunpack.c.h.b16 %v2203
        %v2417 = vpack.c.b16 %v2293, %v2289
        %v2418 = vpack.c.b16 %v2294, %v2290
        %v2419 = vpack.c.b16 %v2295, %v2291
        %v2420 = vpack.c.b16 %v2296, %v2292
        %v2421 = vpack.c.b16 %v2301, %v2297
        %v2422 = vpack.c.b16 %v2302, %v2298
        %v2423 = vpack.c.b16 %v2303, %v2299
        %v2424 = vpack.c.b16 %v2304, %v2300
        %v2425 = vpack.c.b16 %v2309, %v2305
        %v2426 = vpack.c.b16 %v2310, %v2306
        %v2427 = vpack.c.b16 %v2311, %v2307
        %v2428 = vpack.c.b16 %v2312, %v2308
        %v2429 = vpack.c.b16 %v2317, %v2313
        %v2430 = vpack.c.b16 %v2318, %v2314
        %v2431 = vpack.c.b16 %v2319, %v2315
        %v2432 = vpack.c.b16 %v2320, %v2316
        %v2433 = vpack.c.b16 %v2325, %v2321
        %v2434 = vpack.c.b16 %v2326, %v2322
        %v2435 = vpack.c.b16 %v2327, %v2323
        %v2436 = vpack.c.b16 %v2328, %v2324
        %v2437 = vpack.c.b16 %v2333, %v2329
        %v2438 = vpack.c.b16 %v2334, %v2330
        %v2439 = vpack.c.b16 %v2335, %v2331
        %v2440 = vpack.c.b16 %v2336, %v2332
        %v2441 = vpack.c.b16 %v2341, %v2337
        %v2442 = vpack.c.b16 %v2342, %v2338
        %v2443 = vpack.c.b16 %v2343, %v2339
        %v2444 = vpack.c.b16 %v2344, %v2340
        %v2445 = vpack.c.b16 %v2349, %v2345
        %v2446 = vpack.c.b16 %v2350, %v2346
        %v2447 = vpack.c.b16 %v2351, %v2347
        %v2448 = vpack.c.b16 %v2352, %v2348
        %v2449 = vpack.c.b16 %v2357, %v2353
        %v2450 = vpack.c.b16 %v2358, %v2354
        %v2451 = vpack.c.b16 %v2359, %v2355
        %v2452 = vpack.c.b16 %v2360, %v2356
        %v2453 = vpack.c.b16 %v2365, %v2361
        %v2454 = vpack.c.b16 %v2366, %v2362
        %v2455 = vpack.c.b16 %v2367, %v2363
        %v2456 = vpack.c.b16 %v2368, %v2364
        %v2457 = vpack.c.b16 %v2373, %v2369
        %v2458 = vpack.c.b16 %v2374, %v2370
        %v2459 = vpack.c.b16 %v2375, %v2371
        %v2460 = vpack.c.b16 %v2376, %v2372
        %v2461 = vpack.c.b16 %v2381, %v2377
        %v2462 = vpack.c.b16 %v2382, %v2378
        %v2463 = vpack.c.b16 %v2383, %v2379
        %v2464 = vpack.c.b16 %v2384, %v2380
        %v2465 = vpack.c.b16 %v2389, %v2385
        %v2466 = vpack.c.b16 %v2390, %v2386
        %v2467 = vpack.c.b16 %v2391, %v2387
        %v2468 = vpack.c.b16 %v2392, %v2388
        %v2469 = vpack.c.b16 %v2397, %v2393
        %v2470 = vpack.c.b16 %v2398, %v2394
        %v2471 = vpack.c.b16 %v2399, %v2395
        %v2472 = vpack.c.b16 %v2400, %v2396
        %v2473 = vpack.c.b16 %v2405, %v2401
        %v2474 = vpack.c.b16 %v2406, %v2402
        %v2475 = vpack.c.b16 %v2407, %v2403
        %v2476 = vpack.c.b16 %v2408, %v2404
        %v2477 = vpack.c.b16 %v2413, %v2409
        %v2478 = vpack.c.b16 %v2414, %v2410
        %v2479 = vpack.c.b16 %v2415, %v2411
        %v2480 = vpack.c.b16 %v2416, %v2412
        %2545 = vmatprep.subr.bf16.mxu0 %v2418
        %2546 = vmatpush1.bf16.msra.mxu0 %v2417
        %2547 = vmatprep.subr.bf16.mxu0 %v2422
        %2548 = vmatpush1.bf16.msra.mxu0 %v2421
        %2549 = vmatprep.subr.bf16.mxu0 %v2426
        %2550 = vmatpush1.bf16.msra.mxu0 %v2425
        %2551 = vmatprep.subr.bf16.mxu0 %v2430
        %2552 = vmatpush1.bf16.msra.mxu0 %v2429
        %2553 = vmatprep.subr.bf16.mxu0 %v2434
        %2554 = vmatpush1.bf16.msra.mxu0 %v2433
        %2555 = vmatprep.subr.bf16.mxu0 %v2438
        %2556 = vmatpush1.bf16.msra.mxu0 %v2437
        %2557 = vmatprep.subr.bf16.mxu0 %v2442
        %2558 = vmatpush1.bf16.msra.mxu0 %v2441
        %2559 = vmatprep.subr.bf16.mxu0 %v2446
        %2560 = vmatpush1.bf16.msra.mxu0 %v2445
        %2561 = vmatprep.subr.bf16.mxu0 %v2450
        %2562 = vmatpush1.bf16.msra.mxu0 %v2449
        %2563 = vmatprep.subr.bf16.mxu0 %v2454
        %2564 = vmatpush1.bf16.msra.mxu0 %v2453
        %2565 = vmatprep.subr.bf16.mxu0 %v2458
        %2566 = vmatpush1.bf16.msra.mxu0 %v2457
        %2567 = vmatprep.subr.bf16.mxu0 %v2462
        %2568 = vmatpush1.bf16.msra.mxu0 %v2461
        %2569 = vmatprep.subr.bf16.mxu0 %v2466
        %2570 = vmatpush1.bf16.msra.mxu0 %v2465
        %2571 = vmatprep.subr.bf16.mxu0 %v2470
        %2572 = vmatpush1.bf16.msra.mxu0 %v2469
        %2573 = vmatprep.subr.bf16.mxu0 %v2474
        %2574 = vmatpush1.bf16.msra.mxu0 %v2473
        %2575 = vmatprep.subr.bf16.mxu0 %v2478
        %2576 = vmatpush1.bf16.msra.mxu0 %v2477
        %2577 = vmatprep.mubr.bf16.mxu0 %v2136
        %2578 = vmatmul.mubr.bf16.gmra.mrb[0].mxu0 %v2135
        %v2579 = vpop.f32.mrb[0].mxu0
        %v2580 = vadd.f32 %v2208, %v2579
        %v2581 = vpop.f32.mrb[0].mxu0
        %v2582 = vadd.f32 %v2212, %v2581
        %v2583 = vpop.f32.mrb[0].mxu0
        %v2584 = vadd.f32 %v2208, %v2583
        %v2585 = vpop.f32.mrb[0].mxu0
        %v2586 = vadd.f32 %v2212, %v2585
        %2587 = vmatprep.mubr.bf16.mxu0 %v2138
        %2588 = vmatmul.mubr.bf16.gmra.mrb[0].mxu0 %v2137
        %v2589 = vpop.f32.mrb[0].mxu0
        %v2590 = vadd.f32 %v2208, %v2589
        %v2591 = vpop.f32.mrb[0].mxu0
        %v2592 = vadd.f32 %v2212, %v2591
        %v2593 = vpop.f32.mrb[0].mxu0
        %v2594 = vadd.f32 %v2208, %v2593
        %v2595 = vpop.f32.mrb[0].mxu0
        %v2596 = vadd.f32 %v2212, %v2595
        %2597 = vdwg.mxu0
        %2598 = vmatprep.subr.bf16.mxu0 %v2420
        %2599 = vmatpush1.bf16.msra.mxu0 %v2419
        %2600 = vmatprep.subr.bf16.mxu0 %v2424
        %2601 = vmatpush1.bf16.msra.mxu0 %v2423
        %2602 = vmatprep.subr.bf16.mxu0 %v2428
        %2603 = vmatpush1.bf16.msra.mxu0 %v2427
        %2604 = vmatprep.subr.bf16.mxu0 %v2432
        %2605 = vmatpush1.bf16.msra.mxu0 %v2431
        %2606 = vmatprep.subr.bf16.mxu0 %v2436
        %2607 = vmatpush1.bf16.msra.mxu0 %v2435
        %2608 = vmatprep.subr.bf16.mxu0 %v2440
        %2609 = vmatpush1.bf16.msra.mxu0 %v2439
        %2610 = vmatprep.subr.bf16.mxu0 %v2444
        %2611 = vmatpush1.bf16.msra.mxu0 %v2443
        %2612 = vmatprep.subr.bf16.mxu0 %v2448
        %2613 = vmatpush1.bf16.msra.mxu0 %v2447
        %2614 = vmatprep.subr.bf16.mxu0 %v2452
        %2615 = vmatpush1.bf16.msra.mxu0 %v2451
        %2616 = vmatprep.subr.bf16.mxu0 %v2456
        %2617 = vmatpush1.bf16.msra.mxu0 %v2455
        %2618 = vmatprep.subr.bf16.mxu0 %v2460
        %2619 = vmatpush1.bf16.msra.mxu0 %v2459
        %2620 = vmatprep.subr.bf16.mxu0 %v2464
        %2621 = vmatpush1.bf16.msra.mxu0 %v2463
        %2622 = vmatprep.subr.bf16.mxu0 %v2468
        %2623 = vmatpush1.bf16.msra.mxu0 %v2467
        %2624 = vmatprep.subr.bf16.mxu0 %v2472
        %2625 = vmatpush1.bf16.msra.mxu0 %v2471
        %2626 = vmatprep.subr.bf16.mxu0 %v2476
        %2627 = vmatpush1.bf16.msra.mxu0 %v2475
        %2628 = vmatprep.subr.bf16.mxu0 %v2480
        %2629 = vmatpush1.bf16.msra.mxu0 %v2479
        %2630 = vmatprep.mubr.bf16.mxu0 %v2136
        %2631 = vmatmul.mubr.bf16.gmra.mrb[0].mxu0 %v2135
        %v2632 = vpop.f32.mrb[0].mxu0
        %v2633 = vadd.f32 %v2216, %v2632
        %v2634 = vpop.f32.mrb[0].mxu0
        %v2635 = vadd.f32 %v2220, %v2634
        %v2636 = vpop.f32.mrb[0].mxu0
        %v2637 = vadd.f32 %v2216, %v2636
        %v2638 = vpop.f32.mrb[0].mxu0
        %v2639 = vadd.f32 %v2220, %v2638
        %2640 = vmatprep.mubr.bf16.mxu0 %v2138
        %2641 = vmatmul.mubr.bf16.gmra.mrb[0].mxu0 %v2137
        %v2642 = vpop.f32.mrb[0].mxu0
        %v2643 = vadd.f32 %v2216, %v2642
        %v2644 = vpop.f32.mrb[0].mxu0
        %v2645 = vadd.f32 %v2220, %v2644
        %v2646 = vpop.f32.mrb[0].mxu0
        %v2647 = vadd.f32 %v2216, %v2646
        %v2648 = vpop.f32.mrb[0].mxu0
        %v2649 = vadd.f32 %v2220, %v2648
        %2650 = vdwg.mxu0
        %v2651 = vmax.f32 %v2580, 0.0
        %v2652 = vmax.f32 %v2582, 0.0
        %v2653 = vmax.f32 %v2633, 0.0
        %v2654 = vmax.f32 %v2635, 0.0
        %v2655 = vmax.f32 %v2584, 0.0
        %v2656 = vmax.f32 %v2586, 0.0
        %v2657 = vmax.f32 %v2637, 0.0
        %v2658 = vmax.f32 %v2639, 0.0
        %v2659 = vmax.f32 %v2590, 0.0
        %v2660 = vmax.f32 %v2592, 0.0
        %v2661 = vmax.f32 %v2643, 0.0
        %v2662 = vmax.f32 %v2645, 0.0
        %v2663 = vmax.f32 %v2594, 0.0
        %v2664 = vmax.f32 %v2596, 0.0
        %v2665 = vmax.f32 %v2647, 0.0
        %v2666 = vmax.f32 %v2649, 0.0
        %v2667 = vpack.c.bf16 %v2655, %v2651
        %v2668 = vpack.c.bf16 %v2656, %v2652
        %v2669 = vpack.c.bf16 %v2657, %v2653
        %v2670 = vpack.c.bf16 %v2658, %v2654
        %v2671 = vpack.c.bf16 %v2663, %v2659
        %v2672 = vpack.c.bf16 %v2664, %v2660
        %v2673 = vpack.c.bf16 %v2665, %v2661
        %v2674 = vpack.c.bf16 %v2666, %v2662
        %v2675 = vld [vmem:[#allocation11] sm:$0xff]
        %v2676 = vld [vmem:[#allocation11 + $0x8] sm:$0xff]
        %v2677 = vld [vmem:[#allocation11 + $0x10] sm:$0xff]
        %v2678 = vld [vmem:[#allocation11 + $0x18] sm:$0xff]
        %v2679 = vld [vmem:[#allocation11 + $0x20] sm:$0xff]
        %v2680 = vld [vmem:[#allocation11 + $0x28] sm:$0xff]
        %v2681 = vld [vmem:[#allocation11 + $0x30] sm:$0xff]
        %v2682 = vld [vmem:[#allocation11 + $0x38] sm:$0xff]
        %v2683 = vld [vmem:[#allocation11 + $0x40] sm:$0xff]
        %v2684 = vld [vmem:[#allocation11 + $0x48] sm:$0xff]
        %v2685 = vld [vmem:[#allocation11 + $0x50] sm:$0xff]
        %v2686 = vld [vmem:[#allocation11 + $0x58] sm:$0xff]
        %v2687 = vld [vmem:[#allocation11 + $0x60] sm:$0xff]
        %v2688 = vld [vmem:[#allocation11 + $0x68] sm:$0xff]
        %v2689 = vld [vmem:[#allocation11 + $0x70] sm:$0xff]
        %v2690 = vld [vmem:[#allocation11 + $0x78] sm:$0xff]
        %v2691 = vld [vmem:[#allocation11 + $0x80] sm:$0xff]
        %v2692 = vld [vmem:[#allocation11 + $0x88] sm:$0xff]
        %v2693 = vld [vmem:[#allocation11 + $0x90] sm:$0xff]
        %v2694 = vld [vmem:[#allocation11 + $0x98] sm:$0xff]
        %v2695 = vld [vmem:[#allocation11 + $0xa0] sm:$0xff]
        %v2696 = vld [vmem:[#allocation11 + $0xa8] sm:$0xff]
        %v2697 = vld [vmem:[#allocation11 + $0xb0] sm:$0xff]
        %v2698 = vld [vmem:[#allocation11 + $0xb8] sm:$0xff]
        %v2699 = vld [vmem:[#allocation11 + $0xc0] sm:$0xff]
        %v2700 = vld [vmem:[#allocation11 + $0xc8] sm:$0xff]
        %v2701 = vld [vmem:[#allocation11 + $0xd0] sm:$0xff]
        %v2702 = vld [vmem:[#allocation11 + $0xd8] sm:$0xff]
        %v2703 = vld [vmem:[#allocation11 + $0xe0] sm:$0xff]
        %v2704 = vld [vmem:[#allocation11 + $0xe8] sm:$0xff]
        %v2705 = vld [vmem:[#allocation11 + $0xf0] sm:$0xff]
        %v2706 = vld [vmem:[#allocation11 + $0xf8] sm:$0xff]
        %v2707 = vld [vmem:[#allocation11 + $0x100] sm:$0xff]
        %v2708 = vld [vmem:[#allocation11 + $0x108] sm:$0xff]
        %v2709 = vld [vmem:[#allocation11 + $0x110] sm:$0xff]
        %v2710 = vld [vmem:[#allocation11 + $0x118] sm:$0xff]
        %v2711 = vld [vmem:[#allocation11 + $0x120] sm:$0xff]
        %v2712 = vld [vmem:[#allocation11 + $0x128] sm:$0xff]
        %v2713 = vld [vmem:[#allocation11 + $0x130] sm:$0xff]
        %v2714 = vld [vmem:[#allocation11 + $0x138] sm:$0xff]
        %v2715 = vld [vmem:[#allocation11 + $0x140] sm:$0xff]
        %v2716 = vld [vmem:[#allocation11 + $0x148] sm:$0xff]
        %v2717 = vld [vmem:[#allocation11 + $0x150] sm:$0xff]
        %v2718 = vld [vmem:[#allocation11 + $0x158] sm:$0xff]
        %v2719 = vld [vmem:[#allocation11 + $0x160] sm:$0xff]
        %v2720 = vld [vmem:[#allocation11 + $0x168] sm:$0xff]
        %v2721 = vld [vmem:[#allocation11 + $0x170] sm:$0xff]
        %v2722 = vld [vmem:[#allocation11 + $0x178] sm:$0xff]
        %v2723 = vld [vmem:[#allocation11 + $0x180] sm:$0xff]
        %v2724 = vld [vmem:[#allocation11 + $0x188] sm:$0xff]
        %v2725 = vld [vmem:[#allocation11 + $0x190] sm:$0xff]
        %v2726 = vld [vmem:[#allocation11 + $0x198] sm:$0xff]
        %v2727 = vld [vmem:[#allocation11 + $0x1a0] sm:$0xff]
        %v2728 = vld [vmem:[#allocation11 + $0x1a8] sm:$0xff]
        %v2729 = vld [vmem:[#allocation11 + $0x1b0] sm:$0xff]
        %v2730 = vld [vmem:[#allocation11 + $0x1b8] sm:$0xff]
        %v2731 = vld [vmem:[#allocation11 + $0x1c0] sm:$0xff]
        %v2732 = vld [vmem:[#allocation11 + $0x1c8] sm:$0xff]
        %v2733 = vld [vmem:[#allocation11 + $0x1d0] sm:$0xff]
        %v2734 = vld [vmem:[#allocation11 + $0x1d8] sm:$0xff]
        %v2735 = vld [vmem:[#allocation11 + $0x1e0] sm:$0xff]
        %v2736 = vld [vmem:[#allocation11 + $0x1e8] sm:$0xff]
        %v2737 = vld [vmem:[#allocation11 + $0x1f0] sm:$0xff]
        %v2738 = vld [vmem:[#allocation11 + $0x1f8] sm:$0xff]
        %v2803 = vunpack.c.l.b16 %v2675
        %v2804 = vunpack.c.h.b16 %v2675
        %v2805 = vunpack.c.l.b16 %v2676
        %v2806 = vunpack.c.h.b16 %v2676
        %v2807 = vunpack.c.l.b16 %v2677
        %v2808 = vunpack.c.h.b16 %v2677
        %v2809 = vunpack.c.l.b16 %v2678
        %v2810 = vunpack.c.h.b16 %v2678
        %v2811 = vunpack.c.l.b16 %v2679
        %v2812 = vunpack.c.h.b16 %v2679
        %v2813 = vunpack.c.l.b16 %v2680
        %v2814 = vunpack.c.h.b16 %v2680
        %v2815 = vunpack.c.l.b16 %v2681
        %v2816 = vunpack.c.h.b16 %v2681
        %v2817 = vunpack.c.l.b16 %v2682
        %v2818 = vunpack.c.h.b16 %v2682
        %v2819 = vunpack.c.l.b16 %v2683
        %v2820 = vunpack.c.h.b16 %v2683
        %v2821 = vunpack.c.l.b16 %v2684
        %v2822 = vunpack.c.h.b16 %v2684
        %v2823 = vunpack.c.l.b16 %v2685
        %v2824 = vunpack.c.h.b16 %v2685
        %v2825 = vunpack.c.l.b16 %v2686
        %v2826 = vunpack.c.h.b16 %v2686
        %v2827 = vunpack.c.l.b16 %v2687
        %v2828 = vunpack.c.h.b16 %v2687
        %v2829 = vunpack.c.l.b16 %v2688
        %v2830 = vunpack.c.h.b16 %v2688
        %v2831 = vunpack.c.l.b16 %v2689
        %v2832 = vunpack.c.h.b16 %v2689
        %v2833 = vunpack.c.l.b16 %v2690
        %v2834 = vunpack.c.h.b16 %v2690
        %v2835 = vunpack.c.l.b16 %v2691
        %v2836 = vunpack.c.h.b16 %v2691
        %v2837 = vunpack.c.l.b16 %v2692
        %v2838 = vunpack.c.h.b16 %v2692
        %v2839 = vunpack.c.l.b16 %v2693
        %v2840 = vunpack.c.h.b16 %v2693
        %v2841 = vunpack.c.l.b16 %v2694
        %v2842 = vunpack.c.h.b16 %v2694
        %v2843 = vunpack.c.l.b16 %v2695
        %v2844 = vunpack.c.h.b16 %v2695
        %v2845 = vunpack.c.l.b16 %v2696
        %v2846 = vunpack.c.h.b16 %v2696
        %v2847 = vunpack.c.l.b16 %v2697
        %v2848 = vunpack.c.h.b16 %v2697
        %v2849 = vunpack.c.l.b16 %v2698
        %v2850 = vunpack.c.h.b16 %v2698
        %v2851 = vunpack.c.l.b16 %v2699
        %v2852 = vunpack.c.h.b16 %v2699
        %v2853 = vunpack.c.l.b16 %v2700
        %v2854 = vunpack.c.h.b16 %v2700
        %v2855 = vunpack.c.l.b16 %v2701
        %v2856 = vunpack.c.h.b16 %v2701
        %v2857 = vunpack.c.l.b16 %v2702
        %v2858 = vunpack.c.h.b16 %v2702
        %v2859 = vunpack.c.l.b16 %v2703
        %v2860 = vunpack.c.h.b16 %v2703
        %v2861 = vunpack.c.l.b16 %v2704
        %v2862 = vunpack.c.h.b16 %v2704
        %v2863 = vunpack.c.l.b16 %v2705
        %v2864 = vunpack.c.h.b16 %v2705
        %v2865 = vunpack.c.l.b16 %v2706
        %v2866 = vunpack.c.h.b16 %v2706
        %v2867 = vunpack.c.l.b16 %v2707
        %v2868 = vunpack.c.h.b16 %v2707
        %v2869 = vunpack.c.l.b16 %v2708
        %v2870 = vunpack.c.h.b16 %v2708
        %v2871 = vunpack.c.l.b16 %v2709
        %v2872 = vunpack.c.h.b16 %v2709
        %v2873 = vunpack.c.l.b16 %v2710
        %v2874 = vunpack.c.h.b16 %v2710
        %v2875 = vunpack.c.l.b16 %v2711
        %v2876 = vunpack.c.h.b16 %v2711
        %v2877 = vunpack.c.l.b16 %v2712
        %v2878 = vunpack.c.h.b16 %v2712
        %v2879 = vunpack.c.l.b16 %v2713
        %v2880 = vunpack.c.h.b16 %v2713
        %v2881 = vunpack.c.l.b16 %v2714
        %v2882 = vunpack.c.h.b16 %v2714
        %v2883 = vunpack.c.l.b16 %v2715
        %v2884 = vunpack.c.h.b16 %v2715
        %v2885 = vunpack.c.l.b16 %v2716
        %v2886 = vunpack.c.h.b16 %v2716
        %v2887 = vunpack.c.l.b16 %v2717
        %v2888 = vunpack.c.h.b16 %v2717
        %v2889 = vunpack.c.l.b16 %v2718
        %v2890 = vunpack.c.h.b16 %v2718
        %v2891 = vunpack.c.l.b16 %v2719
        %v2892 = vunpack.c.h.b16 %v2719
        %v2893 = vunpack.c.l.b16 %v2720
        %v2894 = vunpack.c.h.b16 %v2720
        %v2895 = vunpack.c.l.b16 %v2721
        %v2896 = vunpack.c.h.b16 %v2721
        %v2897 = vunpack.c.l.b16 %v2722
        %v2898 = vunpack.c.h.b16 %v2722
        %v2899 = vunpack.c.l.b16 %v2723
        %v2900 = vunpack.c.h.b16 %v2723
        %v2901 = vunpack.c.l.b16 %v2724
        %v2902 = vunpack.c.h.b16 %v2724
        %v2903 = vunpack.c.l.b16 %v2725
        %v2904 = vunpack.c.h.b16 %v2725
        %v2905 = vunpack.c.l.b16 %v2726
        %v2906 = vunpack.c.h.b16 %v2726
        %v2907 = vunpack.c.l.b16 %v2727
        %v2908 = vunpack.c.h.b16 %v2727
        %v2909 = vunpack.c.l.b16 %v2728
        %v2910 = vunpack.c.h.b16 %v2728
        %v2911 = vunpack.c.l.b16 %v2729
        %v2912 = vunpack.c.h.b16 %v2729
        %v2913 = vunpack.c.l.b16 %v2730
        %v2914 = vunpack.c.h.b16 %v2730
        %v2915 = vunpack.c.l.b16 %v2731
        %v2916 = vunpack.c.h.b16 %v2731
        %v2917 = vunpack.c.l.b16 %v2732
        %v2918 = vunpack.c.h.b16 %v2732
        %v2919 = vunpack.c.l.b16 %v2733
        %v2920 = vunpack.c.h.b16 %v2733
        %v2921 = vunpack.c.l.b16 %v2734
        %v2922 = vunpack.c.h.b16 %v2734
        %v2923 = vunpack.c.l.b16 %v2735
        %v2924 = vunpack.c.h.b16 %v2735
        %v2925 = vunpack.c.l.b16 %v2736
        %v2926 = vunpack.c.h.b16 %v2736
        %v2927 = vunpack.c.l.b16 %v2737
        %v2928 = vunpack.c.h.b16 %v2737
        %v2929 = vunpack.c.l.b16 %v2738
        %v2930 = vunpack.c.h.b16 %v2738
        %v2931 = vpack.c.b16 %v2805, %v2803
        %v2932 = vpack.c.b16 %v2806, %v2804
        %v2933 = vpack.c.b16 %v2809, %v2807
        %v2934 = vpack.c.b16 %v2810, %v2808
        %v2935 = vpack.c.b16 %v2813, %v2811
        %v2936 = vpack.c.b16 %v2814, %v2812
        %v2937 = vpack.c.b16 %v2817, %v2815
        %v2938 = vpack.c.b16 %v2818, %v2816
        %v2939 = vpack.c.b16 %v2821, %v2819
        %v2940 = vpack.c.b16 %v2822, %v2820
        %v2941 = vpack.c.b16 %v2825, %v2823
        %v2942 = vpack.c.b16 %v2826, %v2824
        %v2943 = vpack.c.b16 %v2829, %v2827
        %v2944 = vpack.c.b16 %v2830, %v2828
        %v2945 = vpack.c.b16 %v2833, %v2831
        %v2946 = vpack.c.b16 %v2834, %v2832
        %v2947 = vpack.c.b16 %v2837, %v2835
        %v2948 = vpack.c.b16 %v2838, %v2836
        %v2949 = vpack.c.b16 %v2841, %v2839
        %v2950 = vpack.c.b16 %v2842, %v2840
        %v2951 = vpack.c.b16 %v2845, %v2843
        %v2952 = vpack.c.b16 %v2846, %v2844
        %v2953 = vpack.c.b16 %v2849, %v2847
        %v2954 = vpack.c.b16 %v2850, %v2848
        %v2955 = vpack.c.b16 %v2853, %v2851
        %v2956 = vpack.c.b16 %v2854, %v2852
        %v2957 = vpack.c.b16 %v2857, %v2855
        %v2958 = vpack.c.b16 %v2858, %v2856
        %v2959 = vpack.c.b16 %v2861, %v2859
        %v2960 = vpack.c.b16 %v2862, %v2860
        %v2961 = vpack.c.b16 %v2865, %v2863
        %v2962 = vpack.c.b16 %v2866, %v2864
        %v2963 = vpack.c.b16 %v2869, %v2867
        %v2964 = vpack.c.b16 %v2870, %v2868
        %v2965 = vpack.c.b16 %v2873, %v2871
        %v2966 = vpack.c.b16 %v2874, %v2872
        %v2967 = vpack.c.b16 %v2877, %v2875
        %v2968 = vpack.c.b16 %v2878, %v2876
        %v2969 = vpack.c.b16 %v2881, %v2879
        %v2970 = vpack.c.b16 %v2882, %v2880
        %v2971 = vpack.c.b16 %v2885, %v2883
        %v2972 = vpack.c.b16 %v2886, %v2884
        %v2973 = vpack.c.b16 %v2889, %v2887
        %v2974 = vpack.c.b16 %v2890, %v2888
        %v2975 = vpack.c.b16 %v2893, %v2891
        %v2976 = vpack.c.b16 %v2894, %v2892
        %v2977 = vpack.c.b16 %v2897, %v2895
        %v2978 = vpack.c.b16 %v2898, %v2896
        %v2979 = vpack.c.b16 %v2901, %v2899
        %v2980 = vpack.c.b16 %v2902, %v2900
        %v2981 = vpack.c.b16 %v2905, %v2903
        %v2982 = vpack.c.b16 %v2906, %v2904
        %v2983 = vpack.c.b16 %v2909, %v2907
        %v2984 = vpack.c.b16 %v2910, %v2908
        %v2985 = vpack.c.b16 %v2913, %v2911
        %v2986 = vpack.c.b16 %v2914, %v2912
        %v2987 = vpack.c.b16 %v2917, %v2915
        %v2988 = vpack.c.b16 %v2918, %v2916
        %v2989 = vpack.c.b16 %v2921, %v2919
        %v2990 = vpack.c.b16 %v2922, %v2920
        %v2991 = vpack.c.b16 %v2925, %v2923
        %v2992 = vpack.c.b16 %v2926, %v2924
        %v2993 = vpack.c.b16 %v2929, %v2927
        %v2994 = vpack.c.b16 %v2930, %v2928
        %3059 = vmatprep.subr.bf16.mxu0 %v2932
        %3060 = vmatpush1.bf16.msra.mxu0 %v2931
        %3061 = vmatprep.subr.bf16.mxu0 %v2934
        %3062 = vmatpush1.bf16.msra.mxu0 %v2933
        %3063 = vmatprep.subr.bf16.mxu0 %v2936
        %3064 = vmatpush1.bf16.msra.mxu0 %v2935
        %3065 = vmatprep.subr.bf16.mxu0 %v2938
        %3066 = vmatpush1.bf16.msra.mxu0 %v2937
        %3067 = vmatprep.subr.bf16.mxu0 %v2940
        %3068 = vmatpush1.bf16.msra.mxu0 %v2939
        %3069 = vmatprep.subr.bf16.mxu0 %v2942
        %3070 = vmatpush1.bf16.msra.mxu0 %v2941
        %3071 = vmatprep.subr.bf16.mxu0 %v2944
        %3072 = vmatpush1.bf16.msra.mxu0 %v2943
        %3073 = vmatprep.subr.bf16.mxu0 %v2946
        %3074 = vmatpush1.bf16.msra.mxu0 %v2945
        %3075 = vmatprep.subr.bf16.mxu0 %v2948
        %3076 = vmatpush1.bf16.msra.mxu0 %v2947
        %3077 = vmatprep.subr.bf16.mxu0 %v2950
        %3078 = vmatpush1.bf16.msra.mxu0 %v2949
        %3079 = vmatprep.subr.bf16.mxu0 %v2952
        %3080 = vmatpush1.bf16.msra.mxu0 %v2951
        %3081 = vmatprep.subr.bf16.mxu0 %v2954
        %3082 = vmatpush1.bf16.msra.mxu0 %v2953
        %3083 = vmatprep.subr.bf16.mxu0 %v2956
        %3084 = vmatpush1.bf16.msra.mxu0 %v2955
        %3085 = vmatprep.subr.bf16.mxu0 %v2958
        %3086 = vmatpush1.bf16.msra.mxu0 %v2957
        %3087 = vmatprep.subr.bf16.mxu0 %v2960
        %3088 = vmatpush1.bf16.msra.mxu0 %v2959
        %3089 = vmatprep.subr.bf16.mxu0 %v2962
        %3090 = vmatpush1.bf16.msra.mxu0 %v2961
        %3091 = vmatprep.mubr.bf16.mxu0 %v2668
        %3092 = vmatmul.mubr.bf16.gmra.mrb[0].mxu0 %v2667
        %v3093 = vpop.f32.mrb[0].mxu0
        %v3094 = vadd.f32 0.0, %v3093
        %v3095 = vpop.f32.mrb[0].mxu0
        %v3096 = vadd.f32 0.0, %v3095
        %v3097 = vpop.f32.mrb[0].mxu0
        %v3098 = vadd.f32 0.0, %v3097
        %v3099 = vpop.f32.mrb[0].mxu0
        %v3100 = vadd.f32 0.0, %v3099
        %3101 = vmatprep.mubr.bf16.mxu0 %v2672
        %3102 = vmatmul.mubr.bf16.gmra.mrb[0].mxu0 %v2671
        %v3103 = vpop.f32.mrb[0].mxu0
        %v3104 = vadd.f32 0.0, %v3103
        %v3105 = vpop.f32.mrb[0].mxu0
        %v3106 = vadd.f32 0.0, %v3105
        %v3107 = vpop.f32.mrb[0].mxu0
        %v3108 = vadd.f32 0.0, %v3107
        %v3109 = vpop.f32.mrb[0].mxu0
        %v3110 = vadd.f32 0.0, %v3109
        %3111 = vdwg.mxu0
        %3112 = vmatprep.subr.bf16.mxu0 %v2964
        %3113 = vmatpush1.bf16.msra.mxu0 %v2963
        %3114 = vmatprep.subr.bf16.mxu0 %v2966
        %3115 = vmatpush1.bf16.msra.mxu0 %v2965
        %3116 = vmatprep.subr.bf16.mxu0 %v2968
        %3117 = vmatpush1.bf16.msra.mxu0 %v2967
        %3118 = vmatprep.subr.bf16.mxu0 %v2970
        %3119 = vmatpush1.bf16.msra.mxu0 %v2969
        %3120 = vmatprep.subr.bf16.mxu0 %v2972
        %3121 = vmatpush1.bf16.msra.mxu0 %v2971
        %3122 = vmatprep.subr.bf16.mxu0 %v2974
        %3123 = vmatpush1.bf16.msra.mxu0 %v2973
        %3124 = vmatprep.subr.bf16.mxu0 %v2976
        %3125 = vmatpush1.bf16.msra.mxu0 %v2975
        %3126 = vmatprep.subr.bf16.mxu0 %v2978
        %3127 = vmatpush1.bf16.msra.mxu0 %v2977
        %3128 = vmatprep.subr.bf16.mxu0 %v2980
        %3129 = vmatpush1.bf16.msra.mxu0 %v2979
        %3130 = vmatprep.subr.bf16.mxu0 %v2982
        %3131 = vmatpush1.bf16.msra.mxu0 %v2981
        %3132 = vmatprep.subr.bf16.mxu0 %v2984
        %3133 = vmatpush1.bf16.msra.mxu0 %v2983
        %3134 = vmatprep.subr.bf16.mxu0 %v2986
        %3135 = vmatpush1.bf16.msra.mxu0 %v2985
        %3136 = vmatprep.subr.bf16.mxu0 %v2988
        %3137 = vmatpush1.bf16.msra.mxu0 %v2987
        %3138 = vmatprep.subr.bf16.mxu0 %v2990
        %3139 = vmatpush1.bf16.msra.mxu0 %v2989
        %3140 = vmatprep.subr.bf16.mxu0 %v2992
        %3141 = vmatpush1.bf16.msra.mxu0 %v2991
        %3142 = vmatprep.subr.bf16.mxu0 %v2994
        %3143 = vmatpush1.bf16.msra.mxu0 %v2993
        %3144 = vmatprep.mubr.bf16.mxu0 %v2670
        %3145 = vmatmul.mubr.bf16.gmra.mrb[0].mxu0 %v2669
        %v3146 = vpop.f32.mrb[0].mxu0
        %v3147 = vadd.f32 %v3094, %v3146
        %v3148 = vpop.f32.mrb[0].mxu0
        %v3149 = vadd.f32 %v3096, %v3148
        %v3150 = vpop.f32.mrb[0].mxu0
        %v3151 = vadd.f32 %v3098, %v3150
        %v3152 = vpop.f32.mrb[0].mxu0
        %v3153 = vadd.f32 %v3100, %v3152
        %3154 = vmatprep.mubr.bf16.mxu0 %v2674
        %3155 = vmatmul.mubr.bf16.gmra.mrb[0].mxu0 %v2673
        %v3156 = vpop.f32.mrb[0].mxu0
        %v3157 = vadd.f32 %v3104, %v3156
        %v3158 = vpop.f32.mrb[0].mxu0
        %v3159 = vadd.f32 %v3106, %v3158
        %v3160 = vpop.f32.mrb[0].mxu0
        %v3161 = vadd.f32 %v3108, %v3160
        %v3162 = vpop.f32.mrb[0].mxu0
        %v3163 = vadd.f32 %v3110, %v3162
        %3164 = vdwg.mxu0
        %v3165 = vadd.f32 %v2127, %v3147
        %v3166 = vadd.f32 %v2128, %v3149
        %v3167 = vadd.f32 %v2129, %v3151
        %v3168 = vadd.f32 %v2130, %v3153
        %v3169 = vadd.f32 %v2131, %v3157
        %v3170 = vadd.f32 %v2132, %v3159
        %v3171 = vadd.f32 %v2133, %v3161
        %v3172 = vadd.f32 %v2134, %v3163
        %v3173 = vld [vmem:[%s8] sm:$0x3]
        %v3175 = vlaneseq
        %v3176 = vshrl.u32 %v3175, 7
        %v3177 = vsub.s32 0, %v3176
        %v3178 = vrot.slane %v3173, %v3177
        %v3179 = vlaneseq
        %v3180 = vshrl.u32 %v3179, 7
        %v3181 = vsub.s32 1, %v3180
        %v3182 = vrot.slane %v3173, %v3181
        %v3185 = vadd.f32 %v3165, %v3178
        %v3186 = vadd.f32 %v3166, %v3182
        %v3187 = vadd.f32 %v3167, %v3178
        %v3188 = vadd.f32 %v3168, %v3182
        %v3189 = vadd.f32 %v3169, %v3178
        %v3190 = vadd.f32 %v3170, %v3182
        %v3191 = vadd.f32 %v3171, %v3178
        %v3192 = vadd.f32 %v3172, %v3182
        %v3193 = vld [vmem:[%s11] sm:$0x3]
        %v3194 = vld [vmem:[%s12] sm:$0x3]
        %v3195 = vadd.f32 %v3185, %v3186
        %3196 = vadd.xlane.f32.xlu0 %v3195
        %v3197 = vpop.xlane.xlu0 %3196
        %v3198 = vadd.f32 %v3187, %v3188
        %3199 = vadd.xlane.f32.xlu0 %v3198
        %v3200 = vpop.xlane.xlu0 %3199
        %v3201 = vadd.f32 %v3189, %v3190
        %3202 = vadd.xlane.f32.xlu0 %v3201
        %v3203 = vpop.xlane.xlu0 %3202
        %v3204 = vadd.f32 %v3191, %v3192
        %3205 = vadd.xlane.f32.xlu0 %v3204
        %v3206 = vpop.xlane.xlu0 %3205
        %v3207 = vmul.f32 %v3197, %v2044
        %v3208 = vmul.f32 %v3200, %v2044
        %v3209 = vmul.f32 %v3203, %v2044
        %v3210 = vmul.f32 %v3206, %v2044
        %v3211 = vsub.f32 %v3185, %v3207
        %v3212 = vsub.f32 %v3186, %v3207
        %v3213 = vsub.f32 %v3187, %v3208
        %v3214 = vsub.f32 %v3188, %v3208
        %v3215 = vsub.f32 %v3189, %v3209
        %v3216 = vsub.f32 %v3190, %v3209
        %v3217 = vsub.f32 %v3191, %v3210
        %v3218 = vsub.f32 %v3192, %v3210
        %v3219 = vmul.f32 %v3211, %v3211
        %v3220 = vmul.f32 %v3212, %v3212
        %v3221 = vmul.f32 %v3213, %v3213
        %v3222 = vmul.f32 %v3214, %v3214
        %v3223 = vmul.f32 %v3215, %v3215
        %v3224 = vmul.f32 %v3216, %v3216
        %v3225 = vmul.f32 %v3217, %v3217
        %v3226 = vmul.f32 %v3218, %v3218
        %v3227 = vadd.f32 %v3219, %v3220
        %3228 = vadd.xlane.f32.xlu0 %v3227
        %v3229 = vpop.xlane.xlu0 %3228
        %v3230 = vadd.f32 %v3221, %v3222
        %3231 = vadd.xlane.f32.xlu0 %v3230
        %v3232 = vpop.xlane.xlu0 %3231
        %v3233 = vadd.f32 %v3223, %v3224
        %3234 = vadd.xlane.f32.xlu0 %v3233
        %v3235 = vpop.xlane.xlu0 %3234
        %v3236 = vadd.f32 %v3225, %v3226
        %3237 = vadd.xlane.f32.xlu0 %v3236
        %v3238 = vpop.xlane.xlu0 %3237
        %v3239 = vmul.f32 %v3229, %v2044
        %v3240 = vmul.f32 %v3232, %v2044
        %v3241 = vmul.f32 %v3235, %v2044
        %v3242 = vmul.f32 %v3238, %v2044
        %v3243 = vadd.f32 %v3239, 1e-05
        %v3244 = vadd.f32 %v3240, 1e-05
        %v3245 = vadd.f32 %v3241, 1e-05
        %v3246 = vadd.f32 %v3242, 1e-05
        %v3247 = vrsqrt.pop %v3243
        %v3248 = vrsqrt.pop %v3244
        %v3249 = vrsqrt.pop %v3245
        %v3250 = vrsqrt.pop %v3246
        %v3251 = vmul.f32 %v3211, %v3247
        %v3252 = vmul.f32 %v3212, %v3247
        %v3253 = vmul.f32 %v3213, %v3248
        %v3254 = vmul.f32 %v3214, %v3248
        %v3255 = vmul.f32 %v3215, %v3249
        %v3256 = vmul.f32 %v3216, %v3249
        %v3257 = vmul.f32 %v3217, %v3250
        %v3258 = vmul.f32 %v3218, %v3250
        %v3260 = vlaneseq
        %v3261 = vshrl.u32 %v3260, 7
        %v3262 = vsub.s32 0, %v3261
        %v3263 = vrot.slane %v3193, %v3262
        %v3264 = vlaneseq
        %v3265 = vshrl.u32 %v3264, 7
        %v3266 = vsub.s32 1, %v3265
        %v3267 = vrot.slane %v3193, %v3266
        %v3270 = vmul.f32 %v3251, %v3263
        %v3271 = vmul.f32 %v3252, %v3267
        %v3272 = vmul.f32 %v3253, %v3263
        %v3273 = vmul.f32 %v3254, %v3267
        %v3274 = vmul.f32 %v3255, %v3263
        %v3275 = vmul.f32 %v3256, %v3267
        %v3276 = vmul.f32 %v3257, %v3263
        %v3277 = vmul.f32 %v3258, %v3267
        %v3279 = vlaneseq
        %v3280 = vshrl.u32 %v3279, 7
        %v3281 = vsub.s32 0, %v3280
        %v3282 = vrot.slane %v3194, %v3281
        %v3283 = vlaneseq
        %v3284 = vshrl.u32 %v3283, 7
        %v3285 = vsub.s32 1, %v3284
        %v3286 = vrot.slane %v3194, %v3285
        %v3289 = vadd.f32 %v3270, %v3282
        %v3290 = vadd.f32 %v3271, %v3286
        %v3291 = vadd.f32 %v3272, %v3282
        %v3292 = vadd.f32 %v3273, %v3286
        %v3293 = vadd.f32 %v3274, %v3282
        %v3294 = vadd.f32 %v3275, %v3286
        %v3295 = vadd.f32 %v3276, %v3282
        %v3296 = vadd.f32 %v3277, %v3286
        %3297 = vst [vmem:[%s517] sm:$0xff] %v3289
        %3298 = vst [vmem:[%s517 + $0x8] sm:$0xff] %v3290
        %3299 = vst [vmem:[%s517 + $0x10] sm:$0xff] %v3291
        %3300 = vst [vmem:[%s517 + $0x18] sm:$0xff] %v3292
        %3301 = vst [vmem:[%s517 + $0x20] sm:$0xff] %v3293
        %3302 = vst [vmem:[%s517 + $0x28] sm:$0xff] %v3294
        %3303 = vst [vmem:[%s517 + $0x30] sm:$0xff] %v3295
        %3304 = vst [vmem:[%s517 + $0x38] sm:$0xff] %v3296
        %s3305 = sand.u32 %s318, 1
        %s3306 = scalar_lea.sflag [#allocation5], %s3305
        %s3307 = sand.u32 %s318, 1
        %s3308 = smul.addr %s3307, 64
        %s3309 = scalar_lea.vmem [#allocation12], %s3308
        // Predicated region
        $region93: #{tpu_custom_call.1} parent=71 // pred_check
          %p3310 = pneg %p328
        $region94: #{tpu_custom_call.1} parent=71 // pred_check_branch
          %3312 = sbr.rel (%p3310) target = $region96
        $region95: #{tpu_custom_call.1} parent=71 // pred_region
          %s3313 = smul.u32 2, %s32
          %s3315 = ssub.s32 1024, 1024
          %3316 = vsyncadd %s3306, %s3315
          %s3317 = smul.addr %s3313, 4
          %s3318 = smul.addr %s3317, 128
          %s3319 = scalar_lea.hbm %s13, %s3318
          %s3320 = sshll.u32 %s3309, 4
          %s3321 = int_to_ptr.vmem [resolvable:$true] %s3320
          %3326 = dma.vmem_to_hbm [thread:$0]  %s3321, 1024, %s3319, %s3306, 256, 256, 16
        $region96: #{tpu_custom_call.1} parent=71 // pred_fallthru
          _
      $region72: #{tpu_custom_call.1} parent=5 // pred_fallthru
        _
      %p3327 = scmp.le.s32.totalorder 2, %s27
      // Predicated region
      $region97: #{tpu_custom_call.1} parent=5 // pred_check
        %p3328 = pneg %p3327
      $region98: #{tpu_custom_call.1} parent=5 // pred_check_branch
        %3330 = sbr.rel (%p3328) target = $region100
      $region99: #{tpu_custom_call.1} parent=5 // pred_region
        %s3331 = ssub.s32 %s27, 2
        // Predicated region
        $region101: #{tpu_custom_call.1} parent=99 // pred_check
          %p3332 = pneg %p334
        $region102: #{tpu_custom_call.1} parent=99 // pred_check_branch
          %3334 = sbr.rel (%p3332) target = $region104
        $region103: #{tpu_custom_call.1} parent=99 // pred_region
          %s3335 = sand.u32 %s319, 1
          %s3336 = scalar_lea.sflag [#allocation5], %s3335
          %s3337 = sand.u32 %s319, 1
          %s3338 = smul.addr %s3337, 64
          %s3339 = scalar_lea.vmem [#allocation12], %s3338
          %3340 = dma.done %s3336, 1024
        $region104: #{tpu_custom_call.1} parent=99 // pred_fallthru
          _
      $region100: #{tpu_custom_call.1} parent=5 // pred_fallthru
        _
    $region6: #{tpu_custom_call.1} parent=1 // loop_footer
      %s31 = sadd.s32 1, %s27
    $region7: #{tpu_custom_call.1} parent=1 // loop_footer_branch
      %26 = sbr.rel target = $region3
    $region8: #{tpu_custom_call.1} parent=1 // loop_exit
      _
    %3341 = vsyncpa [#allocation4], 1
    %s3342 = scalar_lea.sflag [#allocation4], 1
    %3343 = vsyncpa %s3342, 1
    %3344 = vsyncpa [#allocation7], 1
    %3345 = vsyncpa [#allocation10], 1
    %3346 = vsyncpa [#allocation5], 1
    %s3347 = scalar_lea.sflag [#allocation5], 1
    %3348 = vsyncpa %s3347, 1

</llo_original>
